<compile_context>
chip_gen: v6e
topology: v6e:2x2x1
jax: 0.10.0
libtpu: 0.0.40
codegen_flags: <defaults>
</compile_context>

<pallas_src>
import functools

import jax
import jax.numpy as jnp
from jax import lax
from jax.experimental import pallas as pl
from jax.experimental.pallas import tpu as pltpu


# ----------------------------------------------------------------------------
# Pallas kernel: one batch element per grid step.
# ----------------------------------------------------------------------------
def _convblock_kernel(*refs, hw, w, cm, margin, cmed_p, has_xt, res_conv):
    it = iter(refs)
    x_ref = next(it)
    xt_ref = next(it) if has_xt else None
    w1_ref, b1_ref = next(it), next(it)
    w2_ref, b2_ref = next(it), next(it)
    w3_ref, b3_ref = next(it), next(it)
    if res_conv:
        wr_ref, br_ref = next(it), next(it)
    else:
        wr_ref = br_ref = None
    o_ref = next(it)
    scr_ref = next(it)

    kp = 3 * cmed_p

    # Zero only the two halo margins (top / bottom `margin` rows).  The interior
    # band [margin, margin+hw) is fully rewritten below, so no full-scratch
    # clear is needed; doing it every step keeps megacore sharding correct.
    zband = jnp.zeros((margin, kp), jnp.bfloat16)
    scr_ref[pl.ds(0, margin), :] = zband
    scr_ref[pl.ds(margin + hw, margin), :] = zband

    # conv1 (1x1, BN scale pre-folded into w1) + bias + relu on the unpadded
    # H*W rows, then the x_t add (spec: conv2(act1(...) + x_t)).
    y1 = jnp.dot(x_ref[0], w1_ref[...], preferred_element_type=jnp.float32)
    y1 = jnp.maximum(y1 + b1_ref[...], 0.0)
    if has_xt:
        y1 = y1 + xt_ref[0].astype(jnp.float32)

    # Build the kw-stacked conv2 operand (lanes: [left | centre | right] copies
    # of y1).  Column masks (in-kernel iota, no HBM mask array) kill row-wrap
    # neighbours; the +/-1 kw shift is realised on the *value* so the single
    # scratch store and all tap loads stay sublane-aligned.
    col = lax.broadcasted_iota(jnp.int32, (hw, 1), 0) % w
    zrow = jnp.zeros((1, cmed_p), jnp.float32)
    zl = jnp.where(col != (w - 1), y1, 0.0)            # value of left neighbour
    zr = jnp.where(col != 0, y1, 0.0)                  # value of right neighbour
    zl = jnp.concatenate([zrow, zl[:hw - 1, :]], axis=0)   # shift down one row
    zr = jnp.concatenate([zr[1:, :], zrow], axis=0)        # shift up one row
    scr_ref[pl.ds(margin, hw), :] = jnp.concatenate(
        [zl, y1, zr], axis=1).astype(jnp.bfloat16)

    # conv2 (3x3, pad=1) + bias + relu + conv3 (1x1) + bias + residual + act3,
    # processed in row chunks so the f32 accumulator stays register-resident.
    # BN scales for conv2/conv3/residual are pre-folded into the weights.
    for c in range(hw // cm):
        r0 = c * cm
        acc = jnp.zeros((cm, cmed_p), jnp.float32)
        for kh in range(3):                 # straight run of accumulating dots
            tap = scr_ref[pl.ds(margin + (kh - 1) * w + r0, cm), :]
            acc = acc + jnp.dot(tap, w2_ref[kh],
                                preferred_element_type=jnp.float32)
        y2 = jnp.maximum(acc + b2_ref[...], 0.0)

        y3 = jnp.dot(y2.astype(jnp.bfloat16), w3_ref[...],
                     preferred_element_type=jnp.float32)
        y3 = y3 + b3_ref[...]

        xc = x_ref[0, pl.ds(r0, cm), :]
        if res_conv:
            r = jnp.dot(xc, wr_ref[...],
                        preferred_element_type=jnp.float32) + br_ref[...]
        else:
            r = xc.astype(jnp.float32)      # identity residual (inplanes==outplanes)

        o_ref[0, pl.ds(r0, cm), :] = jnp.maximum(y3 + r, 0.0)


# ----------------------------------------------------------------------------
# Wrapper (layout plumbing + pallas_call)
# ----------------------------------------------------------------------------
def conv_block_pallas(x, x_t, params, res_conv=True, eps=1e-6):
    n, cin, h, w = x.shape
    cmed = params['w1'].shape[1]
    cout = params['w3'].shape[1]
    hw = h * w

    def rup(v, m):
        return (v + m - 1) // m * m

    cin_p = rup(cin, 128)                      # lane-dense channel padding
    cmed_p = rup(cmed, 128)
    cout_p = rup(cout, 128)
    margin = rup(w, 16)                        # bf16-tile aligned halo rows
    cm = 128 if (hw % 128 == 0 and hw >= 128) else hw     # row chunk
    has_xt = x_t is not None
    bf = jnp.bfloat16

    def pad2(a, rp, cp):
        return jnp.pad(a, ((0, rp - a.shape[0]), (0, cp - a.shape[1])))

    def foldbn(q):                             # eval-mode BN -> scale/shift
        s = (q['g'] / jnp.sqrt(q['v'] + eps)).astype(jnp.float32)
        b = (q['b'] - q['m'] * s).astype(jnp.float32)
        return s, b

    def padb(b, cp):
        return jnp.pad(b, (0, cp - b.shape[0])).reshape(1, cp).astype(jnp.float32)

    s1, b1 = foldbn(params['bn1'])
    s2, b2 = foldbn(params['bn2'])
    s3, b3 = foldbn(params['bn3'])

    # activations: NCHW -> flattened NHWC (no spatial padding in HBM)
    xh = jnp.transpose(x, (0, 2, 3, 1)).reshape(n, hw, cin)
    xp = jnp.pad(xh, ((0, 0), (0, 0), (0, cin_p - cin))).astype(bf)

    # fold BN scale into the conv weight columns (per-output-channel scale)
    w1 = pad2(params['w1'] * s1[None, :], cin_p, cmed_p).astype(bf)
    w3 = pad2(params['w3'] * s3[None, :], cmed_p, cout_p).astype(bf)
    # conv2 weights: (3,3,cmed,cmed) HWIO -> per-kh K-stacked (3*cmed_p, cmed_p)
    w2f = params['w2'] * s2[None, None, None, :]
    w2s = jnp.stack([
        jnp.concatenate([pad2(w2f[kh, kw], cmed_p, cmed_p)
                         for kw in range(3)], axis=0)
        for kh in range(3)], axis=0).astype(bf)

    def full2(shp):
        return pl.BlockSpec(shp, lambda i: (0, 0))

    operands = [xp]
    in_specs = [pl.BlockSpec((1, hw, cin_p), lambda i: (i, 0, 0))]
    if has_xt:
        xth = jnp.transpose(x_t, (0, 2, 3, 1)).reshape(n, hw, cmed)
        xtp = jnp.pad(xth, ((0, 0), (0, 0),
                            (0, cmed_p - cmed))).astype(bf)   # bf16: half the DMA
        operands.append(xtp)
        in_specs.append(pl.BlockSpec((1, hw, cmed_p), lambda i: (i, 0, 0)))

    operands += [w1, padb(b1, cmed_p), w2s, padb(b2, cmed_p), w3, padb(b3, cout_p)]
    in_specs += [full2((cin_p, cmed_p)), full2((1, cmed_p)),
                 pl.BlockSpec((3, 3 * cmed_p, cmed_p), lambda i: (0, 0, 0)),
                 full2((1, cmed_p)),
                 full2((cmed_p, cout_p)), full2((1, cout_p))]

    if res_conv:
        sr, br = foldbn(params['bnr'])
        wr = pad2(params['wr'] * sr[None, :], cin_p, cout_p).astype(bf)
        operands += [wr, padb(br, cout_p)]
        in_specs += [full2((cin_p, cout_p)), full2((1, cout_p))]
    else:
        assert cin == cout, "identity residual needs inplanes == outplanes"

    kernel = functools.partial(_convblock_kernel, hw=hw, w=w, cm=cm,
                               margin=margin, cmed_p=cmed_p,
                               has_xt=has_xt, res_conv=res_conv)

    out = pl.pallas_call(
        kernel,
        out_shape=jax.ShapeDtypeStruct((n, hw, cout_p), jnp.float32),
        grid=(n,),
        in_specs=in_specs,
        out_specs=pl.BlockSpec((1, hw, cout_p), lambda i: (i, 0, 0)),
        scratch_shapes=[pltpu.VMEM((hw + 2 * margin, 3 * cmed_p), jnp.bfloat16)],
        compiler_params=pltpu.CompilerParams(
            dimension_semantics=("parallel",),
            vmem_limit_bytes=64 << 20),
    )(*operands)

    out = out[..., :cout].reshape(n, h, w, cout)
    return jnp.transpose(out, (0, 3, 1, 2))                 # back to NCHW


# ----------------------------------------------------------------------------
# Pure-JAX reference (for correctness check)
# ----------------------------------------------------------------------------
def conv_block_ref(x, x_t, p, res_conv=True, eps=1e-6):
    dn = ('NHWC', 'HWIO', 'NHWC')

    def bn(y, q):
        return (y - q['m']) / jnp.sqrt(q['v'] + eps) * q['g'] + q['b']

    cin, cmed = p['w1'].shape
    cout = p['w3'].shape[1]
    xh = jnp.transpose(x, (0, 2, 3, 1)).astype(jnp.float32)
    y = lax.conv_general_dilated(xh, p['w1'].reshape(1, 1, cin, cmed), (1, 1),
                                 ((0, 0), (0, 0)), dimension_numbers=dn)
    y = jax.nn.relu(bn(y, p['bn1']))
    if x_t is not None:
        y = y + jnp.transpose(x_t, (0, 2, 3, 1)).astype(jnp.float32)
    y = lax.conv_general_dilated(y, p['w2'], (1, 1), ((1, 1), (1, 1)),
                                 dimension_numbers=dn)
    y = jax.nn.relu(bn(y, p['bn2']))
    y = lax.conv_general_dilated(y, p['w3'].reshape(1, 1, cmed, cout), (1, 1),
                                 ((0, 0), (0, 0)), dimension_numbers=dn)
    y = bn(y, p['bn3'])
    if res_conv:
        r = lax.conv_general_dilated(xh, p['wr'].reshape(1, 1, cin, cout), (1, 1),
                                     ((0, 0), (0, 0)), dimension_numbers=dn)
        r = bn(r, p['bnr'])
    else:
        r = xh
    return jnp.transpose(jax.nn.relu(y + r), (0, 3, 1, 2))


# ----------------------------------------------------------------------------
# Deterministic parameter construction + demo
# ----------------------------------------------------------------------------
def make_bn(key, c):
    k1, k2, k3, k4 = jax.random.split(key, 4)
    return dict(g=1.0 + 0.2 * jax.random.normal(k1, (c,)),
                b=0.2 * jax.random.normal(k2, (c,)),
                m=0.2 * jax.random.normal(k3, (c,)),
                v=jax.random.uniform(k4, (c,), minval=0.5, maxval=1.5))


if __name__ == "__main__":
    key = jax.random.PRNGKey(0)
    N, CIN, COUT, H, W = 2, 4, 8, 16, 16
    CMED = COUT // 4                       # expansion = 4

    ks = jax.random.split(key, 12)
    x = jax.random.normal(ks[0], (N, CIN, H, W), jnp.float32)     # NCHW
    x_t = jax.random.normal(ks[1], (N, CMED, H, W), jnp.float32)  # NCHW

    params = {
        'w1': 0.3 * jax.random.normal(ks[2], (CIN, CMED), jnp.float32),
        'w2': 0.3 * jax.random.normal(ks[3], (3, 3, CMED, CMED), jnp.float32),
        'w3': 0.3 * jax.random.normal(ks[4], (CMED, COUT), jnp.float32),
        'wr': 0.3 * jax.random.normal(ks[5], (CIN, COUT), jnp.float32),
        'bn1': make_bn(ks[6], CMED),
        'bn2': make_bn(ks[7], CMED),
        'bn3': make_bn(ks[8], COUT),
        'bnr': make_bn(ks[9], COUT),
    }

    out = conv_block_pallas(x, x_t, params, res_conv=True)
    jax.block_until_ready(out)

    ref = conv_block_ref(x, x_t, params, res_conv=True)
    assert out.shape == (N, COUT, H, W), out.shape
    # bf16 MXU operands -> looser tolerance than the pure-f32 reference
    assert jnp.allclose(out, ref, atol=1e-1, rtol=5e-2), \
        float(jnp.max(jnp.abs(out - ref)))
    print("KERNEL_OK")
</pallas_src>

<mosaic_0001>
module attributes {stable_mosaic.version = 11 : i64} {
  func.func @_convblock_kernel(%arg0: i32, %arg1: memref<1x256x128xbf16, #tpu.memory_space<vmem>>, %arg2: memref<1x256x128xbf16, #tpu.memory_space<vmem>>, %arg3: memref<128x128xbf16, #tpu.memory_space<vmem>>, %arg4: memref<1x128xf32, #tpu.memory_space<vmem>>, %arg5: memref<3x384x128xbf16, #tpu.memory_space<vmem>>, %arg6: memref<1x128xf32, #tpu.memory_space<vmem>>, %arg7: memref<128x128xbf16, #tpu.memory_space<vmem>>, %arg8: memref<1x128xf32, #tpu.memory_space<vmem>>, %arg9: memref<128x128xbf16, #tpu.memory_space<vmem>>, %arg10: memref<1x128xf32, #tpu.memory_space<vmem>>, %arg11: memref<1x256x128xf32, #tpu.memory_space<vmem>>, %arg12: memref<288x384xbf16, #tpu.memory_space<vmem>>) attributes {dimension_semantics = [#tpu.dimension_semantics<parallel>], iteration_bounds = array<i64: 2>, scalar_prefetch = 0 : i64, scratch_operands = 1 : i64, tpu.core_type = #tpu.core_type<tc>, window_params = [{transform_indices = @transform_0, window_bounds = array<i64: 1, 256, 128>}, {transform_indices = @transform_1, window_bounds = array<i64: 1, 256, 128>}, {pipeline_mode = #tpu.pipeline_mode<synchronous>, transform_indices = @transform_2, window_bounds = array<i64: 128, 128>}, {pipeline_mode = #tpu.pipeline_mode<synchronous>, transform_indices = @transform_3, window_bounds = array<i64: 1, 128>}, {pipeline_mode = #tpu.pipeline_mode<synchronous>, transform_indices = @transform_4, window_bounds = array<i64: 3, 384, 128>}, {pipeline_mode = #tpu.pipeline_mode<synchronous>, transform_indices = @transform_5, window_bounds = array<i64: 1, 128>}, {pipeline_mode = #tpu.pipeline_mode<synchronous>, transform_indices = @transform_6, window_bounds = array<i64: 128, 128>}, {pipeline_mode = #tpu.pipeline_mode<synchronous>, transform_indices = @transform_7, window_bounds = array<i64: 1, 128>}, {pipeline_mode = #tpu.pipeline_mode<synchronous>, transform_indices = @transform_8, window_bounds = array<i64: 128, 128>}, {pipeline_mode = #tpu.pipeline_mode<synchronous>, transform_indices = @transform_9, window_bounds = array<i64: 1, 128>}, {transform_indices = @transform_10, window_bounds = array<i64: 1, 256, 128>}]} {
    %cst = arith.constant 0.000000e+00 : bf16
    %0 = vector.broadcast %cst : bf16 to vector<16x384xbf16>
    %c0 = arith.constant 0 : index
    %c0_0 = arith.constant 0 : index
    %1 = vector.load %arg12[%c0, %c0_0] : memref<288x384xbf16, #tpu.memory_space<vmem>>, vector<16x384xbf16>
    tpu.vector_store %arg12[%c0, %c0_0], %0 {strides = array<i32>} : memref<288x384xbf16, #tpu.memory_space<vmem>>, vector<16x384xbf16>,
    %c272 = arith.constant 272 : index
    %c0_1 = arith.constant 0 : index
    %2 = vector.load %arg12[%c272, %c0_1] : memref<288x384xbf16, #tpu.memory_space<vmem>>, vector<16x384xbf16>
    tpu.vector_store %arg12[%c272, %c0_1], %0 {strides = array<i32>} : memref<288x384xbf16, #tpu.memory_space<vmem>>, vector<16x384xbf16>,
    %c0_2 = arith.constant 0 : index
    %c0_3 = arith.constant 0 : index
    %c0_4 = arith.constant 0 : index
    %3 = vector.load %arg1[%c0_2, %c0_3, %c0_4] : memref<1x256x128xbf16, #tpu.memory_space<vmem>>, vector<1x256x128xbf16>
    %4 = vector.shape_cast %3 : vector<1x256x128xbf16> to vector<256x128xbf16>
    %c0_5 = arith.constant 0 : index
    %c0_6 = arith.constant 0 : index
    %5 = vector.load %arg3[%c0_5, %c0_6] : memref<128x128xbf16, #tpu.memory_space<vmem>>, vector<128x128xbf16>
    %cst_7 = arith.constant dense<0.000000e+00> : vector<256x128xf32>
    %6 = tpu.matmul %4, %5, %cst_7 {dimension_numbers = #tpu.dot_dimension_numbers<[1], [0], [0], [1], [0, 0, 1, 1], [], []>} : vector<256x128xbf16>, vector<128x128xbf16>, vector<256x128xf32> -> vector<256x128xf32>
    %c0_8 = arith.constant 0 : index
    %c0_9 = arith.constant 0 : index
    %7 = vector.load %arg4[%c0_8, %c0_9] : memref<1x128xf32, #tpu.memory_space<vmem>>, vector<1x128xf32>
    %8 = vector.broadcast %7 : vector<1x128xf32> to vector<256x128xf32>
    %9 = arith.addf %6, %8 : vector<256x128xf32>
    %cst_10 = arith.constant 0.000000e+00 : f32
    %10 = vector.broadcast %cst_10 : f32 to vector<256x128xf32>
    %11 = arith.maximumf %9, %10 : vector<256x128xf32>
    %c0_11 = arith.constant 0 : index
    %c0_12 = arith.constant 0 : index
    %c0_13 = arith.constant 0 : index
    %12 = vector.load %arg2[%c0_11, %c0_12, %c0_13] : memref<1x256x128xbf16, #tpu.memory_space<vmem>>, vector<1x256x128xbf16>
    %13 = vector.shape_cast %12 : vector<1x256x128xbf16> to vector<256x128xbf16>
    %14 = arith.extf %13 : vector<256x128xbf16> to vector<256x128xf32>
    %15 = arith.addf %11, %14 : vector<256x128xf32>
    %16 = tpu.iota {dimensions = array<i32: 0>} : vector<256x1xi32>
    %c16_i32 = arith.constant 16 : i32
    %c0_i32 = arith.constant 0 : i32
    %17 = arith.cmpi eq, %c16_i32, %c0_i32 : i32
    %c1_i32 = arith.constant 1 : i32
    %18 = arith.select %17, %c1_i32, %c16_i32 : i32
    %19 = vector.broadcast %18 : i32 to vector<256x1xi32>
    %20 = arith.remsi %16, %19 : vector<256x1xi32>
    %c0_i32_14 = arith.constant 0 : i32
    %21 = vector.broadcast %c0_i32_14 : i32 to vector<256x1xi32>
    %22 = arith.cmpi ne, %20, %21 : vector<256x1xi32>
    %c0_i32_15 = arith.constant 0 : i32
    %23 = vector.broadcast %c0_i32_15 : i32 to vector<256x1xi32>
    %24 = arith.cmpi slt, %20, %23 : vector<256x1xi32>
    %c0_i32_16 = arith.constant 0 : i32
    %25 = arith.cmpi slt, %18, %c0_i32_16 : i32
    %26 = vector.broadcast %25 : i1 to vector<256x1xi1>
    %27 = vector.broadcast %26 : vector<256x1xi1> to vector<256x1xi1>
    %28 = arith.xori %24, %27 : vector<256x1xi1>
    %29 = arith.andi %28, %22 : vector<256x1xi1>
    %30 = vector.broadcast %18 : i32 to vector<256x1xi32>
    %31 = arith.addi %20, %30 : vector<256x1xi32>
    %32 = arith.select %29, %31, %20 : vector<256x1xi1>, vector<256x1xi32>
    %cst_17 = arith.constant 0.000000e+00 : f32
    %33 = vector.broadcast %cst_17 : f32 to vector<1x128xf32>
    %c15_i32 = arith.constant 15 : i32
    %34 = vector.broadcast %c15_i32 : i32 to vector<256x1xi32>
    %35 = arith.cmpi ne, %32, %34 : vector<256x1xi32>
    %cst_18 = arith.constant 0.000000e+00 : f32
    %36 = vector.shape_cast %35 : vector<256x1xi1> to vector<256x1xi1>
    %37 = vector.broadcast %36 : vector<256x1xi1> to vector<256x128xi1>
    %38 = vector.broadcast %cst_18 : f32 to vector<256x128xf32>
    %39 = arith.select %37, %15, %38 : vector<256x128xi1>, vector<256x128xf32>
    %c0_i32_19 = arith.constant 0 : i32
    %40 = vector.broadcast %c0_i32_19 : i32 to vector<256x1xi32>
    %41 = arith.cmpi ne, %32, %40 : vector<256x1xi32>
    %cst_20 = arith.constant 0.000000e+00 : f32
    %42 = vector.shape_cast %41 : vector<256x1xi1> to vector<256x1xi1>
    %43 = vector.broadcast %42 : vector<256x1xi1> to vector<256x128xi1>
    %44 = vector.broadcast %cst_20 : f32 to vector<256x128xf32>
    %45 = arith.select %43, %15, %44 : vector<256x128xi1>, vector<256x128xf32>
    %46 = vector.extract_strided_slice %39 {offsets = [0, 0], sizes = [255, 128], strides = [1, 1]} : vector<256x128xf32> to vector<255x128xf32>
    %47 = tpu.concatenate %33, %46 in 0 : vector<1x128xf32>, vector<255x128xf32> -> vector<256x128xf32>
    %48 = vector.extract_strided_slice %45 {offsets = [1, 0], sizes = [255, 128], strides = [1, 1]} : vector<256x128xf32> to vector<255x128xf32>
    %49 = tpu.concatenate %48, %33 in 0 : vector<255x128xf32>, vector<1x128xf32> -> vector<256x128xf32>
    %50 = tpu.concatenate %47, %15, %49 in 1 : vector<256x128xf32>, vector<256x128xf32>, vector<256x128xf32> -> vector<256x384xf32>
    %51 = arith.truncf %50 : vector<256x384xf32> to vector<256x384xbf16>
    %c16 = arith.constant 16 : index
    %c0_21 = arith.constant 0 : index
    %52 = vector.load %arg12[%c16, %c0_21] : memref<288x384xbf16, #tpu.memory_space<vmem>>, vector<256x384xbf16>
    tpu.vector_store %arg12[%c16, %c0_21], %51 {strides = array<i32>} : memref<288x384xbf16, #tpu.memory_space<vmem>>, vector<256x384xbf16>,
    %cst_22 = arith.constant 0.000000e+00 : f32
    %53 = vector.broadcast %cst_22 : f32 to vector<128x128xf32>
    %c0_23 = arith.constant 0 : index
    %c0_24 = arith.constant 0 : index
    %54 = vector.load %arg12[%c0_23, %c0_24] : memref<288x384xbf16, #tpu.memory_space<vmem>>, vector<128x384xbf16>
    %c0_25 = arith.constant 0 : index
    %c0_26 = arith.constant 0 : index
    %c0_27 = arith.constant 0 : index
    %55 = vector.load %arg5[%c0_25, %c0_26, %c0_27] : memref<3x384x128xbf16, #tpu.memory_space<vmem>>, vector<1x384x128xbf16>
    %56 = vector.shape_cast %55 : vector<1x384x128xbf16> to vector<384x128xbf16>
    %cst_28 = arith.constant dense<0.000000e+00> : vector<128x128xf32>
    %57 = tpu.matmul %54, %56, %cst_28 {dimension_numbers = #tpu.dot_dimension_numbers<[1], [0], [0], [1], [0, 0, 1, 1], [], []>} : vector<128x384xbf16>, vector<384x128xbf16>, vector<128x128xf32> -> vector<128x128xf32>
    %58 = arith.addf %53, %57 : vector<128x128xf32>
    %c16_29 = arith.constant 16 : index
    %c0_30 = arith.constant 0 : index
    %59 = vector.load %arg12[%c16_29, %c0_30] : memref<288x384xbf16, #tpu.memory_space<vmem>>, vector<128x384xbf16>
    %c1 = arith.constant 1 : index
    %c0_31 = arith.constant 0 : index
    %c0_32 = arith.constant 0 : index
    %60 = vector.load %arg5[%c1, %c0_31, %c0_32] : memref<3x384x128xbf16, #tpu.memory_space<vmem>>, vector<1x384x128xbf16>
    %61 = vector.shape_cast %60 : vector<1x384x128xbf16> to vector<384x128xbf16>
    %cst_33 = arith.constant dense<0.000000e+00> : vector<128x128xf32>
    %62 = tpu.matmul %59, %61, %cst_33 {dimension_numbers = #tpu.dot_dimension_numbers<[1], [0], [0], [1], [0, 0, 1, 1], [], []>} : vector<128x384xbf16>, vector<384x128xbf16>, vector<128x128xf32> -> vector<128x128xf32>
    %63 = arith.addf %58, %62 : vector<128x128xf32>
    %c32 = arith.constant 32 : index
    %c0_34 = arith.constant 0 : index
    %64 = vector.load %arg12[%c32, %c0_34] : memref<288x384xbf16, #tpu.memory_space<vmem>>, vector<128x384xbf16>
    %c2 = arith.constant 2 : index
    %c0_35 = arith.constant 0 : index
    %c0_36 = arith.constant 0 : index
    %65 = vector.load %arg5[%c2, %c0_35, %c0_36] : memref<3x384x128xbf16, #tpu.memory_space<vmem>>, vector<1x384x128xbf16>
    %66 = vector.shape_cast %65 : vector<1x384x128xbf16> to vector<384x128xbf16>
    %cst_37 = arith.constant dense<0.000000e+00> : vector<128x128xf32>
    %67 = tpu.matmul %64, %66, %cst_37 {dimension_numbers = #tpu.dot_dimension_numbers<[1], [0], [0], [1], [0, 0, 1, 1], [], []>} : vector<128x384xbf16>, vector<384x128xbf16>, vector<128x128xf32> -> vector<128x128xf32>
    %68 = arith.addf %63, %67 : vector<128x128xf32>
    %c0_38 = arith.constant 0 : index
    %c0_39 = arith.constant 0 : index
    %69 = vector.load %arg6[%c0_38, %c0_39] : memref<1x128xf32, #tpu.memory_space<vmem>>, vector<1x128xf32>
    %70 = vector.broadcast %69 : vector<1x128xf32> to vector<128x128xf32>
    %71 = arith.addf %68, %70 : vector<128x128xf32>
    %cst_40 = arith.constant 0.000000e+00 : f32
    %72 = vector.broadcast %cst_40 : f32 to vector<128x128xf32>
    %73 = arith.maximumf %71, %72 : vector<128x128xf32>
    %74 = arith.truncf %73 : vector<128x128xf32> to vector<128x128xbf16>
    %c0_41 = arith.constant 0 : index
    %c0_42 = arith.constant 0 : index
    %75 = vector.load %arg7[%c0_41, %c0_42] : memref<128x128xbf16, #tpu.memory_space<vmem>>, vector<128x128xbf16>
    %cst_43 = arith.constant dense<0.000000e+00> : vector<128x128xf32>
    %76 = tpu.matmul %74, %75, %cst_43 {dimension_numbers = #tpu.dot_dimension_numbers<[1], [0], [0], [1], [0, 0, 1, 1], [], []>} : vector<128x128xbf16>, vector<128x128xbf16>, vector<128x128xf32> -> vector<128x128xf32>
    %c0_44 = arith.constant 0 : index
    %c0_45 = arith.constant 0 : index
    %77 = vector.load %arg8[%c0_44, %c0_45] : memref<1x128xf32, #tpu.memory_space<vmem>>, vector<1x128xf32>
    %78 = vector.broadcast %77 : vector<1x128xf32> to vector<128x128xf32>
    %79 = arith.addf %76, %78 : vector<128x128xf32>
    %c0_46 = arith.constant 0 : index
    %c0_47 = arith.constant 0 : index
    %c0_48 = arith.constant 0 : index
    %80 = vector.load %arg1[%c0_46, %c0_47, %c0_48] : memref<1x256x128xbf16, #tpu.memory_space<vmem>>, vector<1x128x128xbf16>
    %81 = vector.shape_cast %80 : vector<1x128x128xbf16> to vector<128x128xbf16>
    %c0_49 = arith.constant 0 : index
    %c0_50 = arith.constant 0 : index
    %82 = vector.load %arg9[%c0_49, %c0_50] : memref<128x128xbf16, #tpu.memory_space<vmem>>, vector<128x128xbf16>
    %cst_51 = arith.constant dense<0.000000e+00> : vector<128x128xf32>
    %83 = tpu.matmul %81, %82, %cst_51 {dimension_numbers = #tpu.dot_dimension_numbers<[1], [0], [0], [1], [0, 0, 1, 1], [], []>} : vector<128x128xbf16>, vector<128x128xbf16>, vector<128x128xf32> -> vector<128x128xf32>
    %c0_52 = arith.constant 0 : index
    %c0_53 = arith.constant 0 : index
    %84 = vector.load %arg10[%c0_52, %c0_53] : memref<1x128xf32, #tpu.memory_space<vmem>>, vector<1x128xf32>
    %85 = vector.broadcast %84 : vector<1x128xf32> to vector<128x128xf32>
    %86 = arith.addf %83, %85 : vector<128x128xf32>
    %87 = arith.addf %79, %86 : vector<128x128xf32>
    %cst_54 = arith.constant 0.000000e+00 : f32
    %88 = vector.broadcast %cst_54 : f32 to vector<128x128xf32>
    %89 = arith.maximumf %87, %88 : vector<128x128xf32>
    %c0_55 = arith.constant 0 : index
    %c0_56 = arith.constant 0 : index
    %c0_57 = arith.constant 0 : index
    %90 = vector.load %arg11[%c0_55, %c0_56, %c0_57] : memref<1x256x128xf32, #tpu.memory_space<vmem>>, vector<1x128x128xf32>
    %91 = vector.shape_cast %90 : vector<1x128x128xf32> to vector<128x128xf32>
    %92 = vector.shape_cast %89 : vector<128x128xf32> to vector<1x128x128xf32>
    tpu.vector_store %arg11[%c0_55, %c0_56, %c0_57], %92 {strides = array<i32>} : memref<1x256x128xf32, #tpu.memory_space<vmem>>, vector<1x128x128xf32>,
    %cst_58 = arith.constant 0.000000e+00 : f32
    %93 = vector.broadcast %cst_58 : f32 to vector<128x128xf32>
    %c128 = arith.constant 128 : index
    %c0_59 = arith.constant 0 : index
    %94 = vector.load %arg12[%c128, %c0_59] : memref<288x384xbf16, #tpu.memory_space<vmem>>, vector<128x384xbf16>
    %c0_60 = arith.constant 0 : index
    %c0_61 = arith.constant 0 : index
    %c0_62 = arith.constant 0 : index
    %95 = vector.load %arg5[%c0_60, %c0_61, %c0_62] : memref<3x384x128xbf16, #tpu.memory_space<vmem>>, vector<1x384x128xbf16>
    %96 = vector.shape_cast %95 : vector<1x384x128xbf16> to vector<384x128xbf16>
    %cst_63 = arith.constant dense<0.000000e+00> : vector<128x128xf32>
    %97 = tpu.matmul %94, %96, %cst_63 {dimension_numbers = #tpu.dot_dimension_numbers<[1], [0], [0], [1], [0, 0, 1, 1], [], []>} : vector<128x384xbf16>, vector<384x128xbf16>, vector<128x128xf32> -> vector<128x128xf32>
    %98 = arith.addf %93, %97 : vector<128x128xf32>
    %c144 = arith.constant 144 : index
    %c0_64 = arith.constant 0 : index
    %99 = vector.load %arg12[%c144, %c0_64] : memref<288x384xbf16, #tpu.memory_space<vmem>>, vector<128x384xbf16>
    %c1_65 = arith.constant 1 : index
    %c0_66 = arith.constant 0 : index
    %c0_67 = arith.constant 0 : index
    %100 = vector.load %arg5[%c1_65, %c0_66, %c0_67] : memref<3x384x128xbf16, #tpu.memory_space<vmem>>, vector<1x384x128xbf16>
    %101 = vector.shape_cast %100 : vector<1x384x128xbf16> to vector<384x128xbf16>
    %cst_68 = arith.constant dense<0.000000e+00> : vector<128x128xf32>
    %102 = tpu.matmul %99, %101, %cst_68 {dimension_numbers = #tpu.dot_dimension_numbers<[1], [0], [0], [1], [0, 0, 1, 1], [], []>} : vector<128x384xbf16>, vector<384x128xbf16>, vector<128x128xf32> -> vector<128x128xf32>
    %103 = arith.addf %98, %102 : vector<128x128xf32>
    %c160 = arith.constant 160 : index
    %c0_69 = arith.constant 0 : index
    %104 = vector.load %arg12[%c160, %c0_69] : memref<288x384xbf16, #tpu.memory_space<vmem>>, vector<128x384xbf16>
    %c2_70 = arith.constant 2 : index
    %c0_71 = arith.constant 0 : index
    %c0_72 = arith.constant 0 : index
    %105 = vector.load %arg5[%c2_70, %c0_71, %c0_72] : memref<3x384x128xbf16, #tpu.memory_space<vmem>>, vector<1x384x128xbf16>
    %106 = vector.shape_cast %105 : vector<1x384x128xbf16> to vector<384x128xbf16>
    %cst_73 = arith.constant dense<0.000000e+00> : vector<128x128xf32>
    %107 = tpu.matmul %104, %106, %cst_73 {dimension_numbers = #tpu.dot_dimension_numbers<[1], [0], [0], [1], [0, 0, 1, 1], [], []>} : vector<128x384xbf16>, vector<384x128xbf16>, vector<128x128xf32> -> vector<128x128xf32>
    %108 = arith.addf %103, %107 : vector<128x128xf32>
    %c0_74 = arith.constant 0 : index
    %c0_75 = arith.constant 0 : index
    %109 = vector.load %arg6[%c0_74, %c0_75] : memref<1x128xf32, #tpu.memory_space<vmem>>, vector<1x128xf32>
    %110 = vector.broadcast %109 : vector<1x128xf32> to vector<128x128xf32>
    %111 = arith.addf %108, %110 : vector<128x128xf32>
    %cst_76 = arith.constant 0.000000e+00 : f32
    %112 = vector.broadcast %cst_76 : f32 to vector<128x128xf32>
    %113 = arith.maximumf %111, %112 : vector<128x128xf32>
    %114 = arith.truncf %113 : vector<128x128xf32> to vector<128x128xbf16>
    %c0_77 = arith.constant 0 : index
    %c0_78 = arith.constant 0 : index
    %115 = vector.load %arg7[%c0_77, %c0_78] : memref<128x128xbf16, #tpu.memory_space<vmem>>, vector<128x128xbf16>
    %cst_79 = arith.constant dense<0.000000e+00> : vector<128x128xf32>
    %116 = tpu.matmul %114, %115, %cst_79 {dimension_numbers = #tpu.dot_dimension_numbers<[1], [0], [0], [1], [0, 0, 1, 1], [], []>} : vector<128x128xbf16>, vector<128x128xbf16>, vector<128x128xf32> -> vector<128x128xf32>
    %c0_80 = arith.constant 0 : index
    %c0_81 = arith.constant 0 : index
    %117 = vector.load %arg8[%c0_80, %c0_81] : memref<1x128xf32, #tpu.memory_space<vmem>>, vector<1x128xf32>
    %118 = vector.broadcast %117 : vector<1x128xf32> to vector<128x128xf32>
    %119 = arith.addf %116, %118 : vector<128x128xf32>
    %c0_82 = arith.constant 0 : index
    %c128_83 = arith.constant 128 : index
    %c0_84 = arith.constant 0 : index
    %120 = vector.load %arg1[%c0_82, %c128_83, %c0_84] : memref<1x256x128xbf16, #tpu.memory_space<vmem>>, vector<1x128x128xbf16>
    %121 = vector.shape_cast %120 : vector<1x128x128xbf16> to vector<128x128xbf16>
    %c0_85 = arith.constant 0 : index
    %c0_86 = arith.constant 0 : index
    %122 = vector.load %arg9[%c0_85, %c0_86] : memref<128x128xbf16, #tpu.memory_space<vmem>>, vector<128x128xbf16>
    %cst_87 = arith.constant dense<0.000000e+00> : vector<128x128xf32>
    %123 = tpu.matmul %121, %122, %cst_87 {dimension_numbers = #tpu.dot_dimension_numbers<[1], [0], [0], [1], [0, 0, 1, 1], [], []>} : vector<128x128xbf16>, vector<128x128xbf16>, vector<128x128xf32> -> vector<128x128xf32>
    %c0_88 = arith.constant 0 : index
    %c0_89 = arith.constant 0 : index
    %124 = vector.load %arg10[%c0_88, %c0_89] : memref<1x128xf32, #tpu.memory_space<vmem>>, vector<1x128xf32>
    %125 = vector.broadcast %124 : vector<1x128xf32> to vector<128x128xf32>
    %126 = arith.addf %123, %125 : vector<128x128xf32>
    %127 = arith.addf %119, %126 : vector<128x128xf32>
    %cst_90 = arith.constant 0.000000e+00 : f32
    %128 = vector.broadcast %cst_90 : f32 to vector<128x128xf32>
    %129 = arith.maximumf %127, %128 : vector<128x128xf32>
    %c0_91 = arith.constant 0 : index
    %c128_92 = arith.constant 128 : index
    %c0_93 = arith.constant 0 : index
    %130 = vector.load %arg11[%c0_91, %c128_92, %c0_93] : memref<1x256x128xf32, #tpu.memory_space<vmem>>, vector<1x128x128xf32>
    %131 = vector.shape_cast %130 : vector<1x128x128xf32> to vector<128x128xf32>
    %132 = vector.shape_cast %129 : vector<128x128xf32> to vector<1x128x128xf32>
    tpu.vector_store %arg11[%c0_91, %c128_92, %c0_93], %132 {strides = array<i32>} : memref<1x256x128xf32, #tpu.memory_space<vmem>>, vector<1x128x128xf32>,
    return
  }
  func.func @transform_0(%arg0: i32) -> (i32, i32, i32) {
    %c0_i32 = arith.constant 0 : i32
    %c0_i32_0 = arith.constant 0 : i32
    %c0_i32_1 = arith.constant 0 : i32
    return %arg0, %c0_i32, %c0_i32_0 : i32, i32, i32
  }
  func.func @transform_1(%arg0: i32) -> (i32, i32, i32) {
    %c0_i32 = arith.constant 0 : i32
    %c0_i32_0 = arith.constant 0 : i32
    %c0_i32_1 = arith.constant 0 : i32
    return %arg0, %c0_i32, %c0_i32_0 : i32, i32, i32
  }
  func.func @transform_2(%arg0: i32) -> (i32, i32) {
    %c0_i32 = arith.constant 0 : i32
    %c0_i32_0 = arith.constant 0 : i32
    %c0_i32_1 = arith.constant 0 : i32
    return %c0_i32, %c0_i32_0 : i32, i32
  }
  func.func @transform_3(%arg0: i32) -> (i32, i32) {
    %c0_i32 = arith.constant 0 : i32
    %c0_i32_0 = arith.constant 0 : i32
    %c0_i32_1 = arith.constant 0 : i32
    return %c0_i32, %c0_i32_0 : i32, i32
  }
  func.func @transform_4(%arg0: i32) -> (i32, i32, i32) {
    %c0_i32 = arith.constant 0 : i32
    %c0_i32_0 = arith.constant 0 : i32
    %c0_i32_1 = arith.constant 0 : i32
    %c0_i32_2 = arith.constant 0 : i32
    return %c0_i32, %c0_i32_0, %c0_i32_1 : i32, i32, i32
  }
  func.func @transform_5(%arg0: i32) -> (i32, i32) {
    %c0_i32 = arith.constant 0 : i32
    %c0_i32_0 = arith.constant 0 : i32
    %c0_i32_1 = arith.constant 0 : i32
    return %c0_i32, %c0_i32_0 : i32, i32
  }
  func.func @transform_6(%arg0: i32) -> (i32, i32) {
    %c0_i32 = arith.constant 0 : i32
    %c0_i32_0 = arith.constant 0 : i32
    %c0_i32_1 = arith.constant 0 : i32
    return %c0_i32, %c0_i32_0 : i32, i32
  }
  func.func @transform_7(%arg0: i32) -> (i32, i32) {
    %c0_i32 = arith.constant 0 : i32
    %c0_i32_0 = arith.constant 0 : i32
    %c0_i32_1 = arith.constant 0 : i32
    return %c0_i32, %c0_i32_0 : i32, i32
  }
  func.func @transform_8(%arg0: i32) -> (i32, i32) {
    %c0_i32 = arith.constant 0 : i32
    %c0_i32_0 = arith.constant 0 : i32
    %c0_i32_1 = arith.constant 0 : i32
    return %c0_i32, %c0_i32_0 : i32, i32
  }
  func.func @transform_9(%arg0: i32) -> (i32, i32) {
    %c0_i32 = arith.constant 0 : i32
    %c0_i32_0 = arith.constant 0 : i32
    %c0_i32_1 = arith.constant 0 : i32
    return %c0_i32, %c0_i32_0 : i32, i32
  }
  func.func @transform_10(%arg0: i32) -> (i32, i32, i32) {
    %c0_i32 = arith.constant 0 : i32
    %c0_i32_0 = arith.constant 0 : i32
    %c0_i32_1 = arith.constant 0 : i32
    return %arg0, %c0_i32, %c0_i32_0 : i32, i32, i32
  }
}

</mosaic_0001>

<llo_original>
// kernel: tpu_custom_call.1
$region0: #{tpu_custom_call.1}
  #allocation0 [shape = 'u32[]', space=smem, size = 0x4, offset = 0x4, fixed_abs, tag = 'smem constant byte address 0x4 - core index']
  #allocation1 [shape = 'u32[144,128]{1,0:T(1,128)}', space=vmem, size = 0x12000, scoped, tag = 'internal scratch']
  #allocation2 [shape = 'bf16[288,384]{1,0:T(8,128)(2,1)}', space=vmem, size = 0x36000, scoped, tag = 'scratch operand']
  %s0 = inlined_call_operand.hbm [shape: bf16[2,256,128], index: 0, kind: input, shape index: {}]
  %s1 = inlined_call_operand.hbm [shape: bf16[2,256,128], index: 1, kind: input, shape index: {}]
  %s2 = inlined_call_operand.hbm [shape: bf16[128,128], index: 2, kind: input, shape index: {}]
  %s3 = inlined_call_operand.vmem [shape: f32[1,128], index: 3, kind: input, shape index: {}]
  %s4 = inlined_call_operand.hbm [shape: bf16[3,384,128], index: 4, kind: input, shape index: {}]
  %s5 = inlined_call_operand.vmem [shape: f32[1,128], index: 5, kind: input, shape index: {}]
  %s6 = inlined_call_operand.hbm [shape: bf16[128,128], index: 6, kind: input, shape index: {}]
  %s7 = inlined_call_operand.vmem [shape: f32[1,128], index: 7, kind: input, shape index: {}]
  %s8 = inlined_call_operand.hbm [shape: bf16[128,128], index: 8, kind: input, shape index: {}]
  %s9 = inlined_call_operand.vmem [shape: f32[1,128], index: 9, kind: input, shape index: {}]
  %s10 = inlined_call_operand.hbm [shape: f32[2,256,128], index: 10, kind: output, shape index: {}]
  %s11 = sld [smem:[#allocation0]]
  $region97: #{tpu_custom_call.1} parent=0
    _
  %s13 = ssub.s32 1, %s11
  %s14 = scalar_select 0, %s13, %s11
  $region1: #{tpu_custom_call.1} parent=0
    #allocation3 [shape = 'u8[131072]{0}', space=vmem, size = 0x20000, scoped, tag = 'input window, operand 0']
    #allocation4 [shape = 's32[2]{0}', space=sflag, size = 0x8, scoped, tag = 'scoped memory for tpu_custom_call.1']
    #allocation5 [shape = 's32[2]{0}', space=sflag, size = 0x8, scoped, tag = 'scoped memory for tpu_custom_call.1']
    #allocation6 [shape = 'u8[131072]{0}', space=vmem, size = 0x20000, scoped, tag = 'input window, operand 1']
    #allocation7 [shape = 's32[2]{0}', space=sflag, size = 0x8, scoped, tag = 'scoped memory for tpu_custom_call.1']
    #allocation8 [shape = 'u8[32768]{0}', space=vmem, size = 0x8000, scoped, tag = 'input window, operand 2, single buffered']
    #allocation9 [shape = 'u8[294912]{0}', space=vmem, size = 0x48000, scoped, tag = 'input window, operand 4, single buffered']
    #allocation10 [shape = 's32[1]{0}', space=sflag, size = 0x4, scoped, tag = 'scoped memory for tpu_custom_call.1']
    #allocation11 [shape = 'u8[32768]{0}', space=vmem, size = 0x8000, scoped, tag = 'input window, operand 6, single buffered']
    #allocation12 [shape = 'u8[32768]{0}', space=vmem, size = 0x8000, scoped, tag = 'input window, operand 8, single buffered']
    #allocation13 [shape = 's32[1]{0}', space=sflag, size = 0x4, scoped, tag = 'scoped memory for tpu_custom_call.1']
    #allocation14 [shape = 'u8[262144]{0}', space=vmem, size = 0x40000, scoped, tag = 'output window, operand 0']
    %15 = vsyncpa [#allocation4], 0
    %s16 = scalar_lea.sflag [#allocation4], 1
    %17 = vsyncpa %s16, 0
    %18 = vsyncpa [#allocation7], 0
    %s19 = scalar_lea.sflag [#allocation7], 1
    %20 = vsyncpa %s19, 0
    %21 = vsyncpa [#allocation10], 0
    %22 = vsyncpa [#allocation13], 0
    %23 = vsyncpa [#allocation5], 0
    %s24 = scalar_lea.sflag [#allocation5], 1
    %25 = vsyncpa %s24, 0
    loop: start=0, step=1, limit=4
    $region2: #{tpu_custom_call.1} parent=1 // loop_pre_header
      _
    $region3: #{tpu_custom_call.1} parent=1 // loop_header
      %s27 = sphi 0, %s31
      %p28 = scmp.ge.s32.totalorder %s27, 4
      %s37 = sphi 0, %s39
      %s40 = sphi 0, %s37
      %s41 = sphi 0, %s40
      %s57 = sphi 0, %s41
      %s63 = sphi 0, %s65
      %s66 = sphi 0, %s63
      %s67 = sphi 0, %s66
      %s83 = sphi 0, %s67
      %s87 = sphi 0, %s87
      %s89 = sphi 0, %s87
      %s90 = sphi 0, %s89
      %s104 = sphi 0, %s90
      %s108 = sphi 0, %s108
      %s110 = sphi 0, %s108
      %s111 = sphi 0, %s110
      %s125 = sphi 0, %s111
      %s129 = sphi 0, %s129
      %s131 = sphi 0, %s129
      %s132 = sphi 0, %s131
      %s146 = sphi 0, %s132
      %s150 = sphi 0, %s150
      %s152 = sphi 0, %s150
      %s153 = sphi 0, %s152
      %s167 = sphi 0, %s153
      %s171 = sphi 0, %s171
      %s173 = sphi 0, %s171
      %s174 = sphi 0, %s173
      %s188 = sphi 0, %s174
      %s192 = sphi 0, %s192
      %s194 = sphi 0, %s192
      %s195 = sphi 0, %s194
      %s209 = sphi 0, %s195
      %s213 = sphi 0, %s213
      %s215 = sphi 0, %s213
      %s216 = sphi 0, %s215
      %s230 = sphi 0, %s216
      %s234 = sphi 0, %s234
      %s236 = sphi 0, %s234
      %s237 = sphi 0, %s236
      %s251 = sphi 0, %s237
      %s257 = sphi 0, %s259
      %s260 = sphi 0, %s257
      %s261 = sphi 0, %s260
      %s277 = sphi 0, %s261
    $region4: #{tpu_custom_call.1} parent=1 // loop_header_branch
      %30 = sbr.rel (%p28) target = $region8
    $region5: #{tpu_custom_call.1} parent=1 // loop_body
      %s32 = ssub.s32 %s27, 1
      %s33 = ssub.s32 %s27, 2
      %s34 = sadd.s32 %s27, 1
      %s35 = ssub.s32 %s27, %s34
      %p36 = scmp.eq.s32.totalorder %s35, 0
      %s38 = sadd.s32 %s37, 1
      %s39 = scalar_select %p36, %s37, %s38
      %p42 = pneg %p36
      %p43 = scmp.eq.s32.totalorder %s27, 1
      %p44 = por %p42, %p43
      %p45 = scmp.ne.s32.totalorder %s37, %s40
      %p46 = scmp.eq.s32.totalorder %s27, 0
      %p47 = por %p45, %p46
      %p48 = scmp.ne.s32.totalorder %s37, %s40
      %p49 = scmp.eq.s32.totalorder %s32, 1
      %p50 = por %p48, %p49
      %p51 = scmp.ne.s32.totalorder %s40, %s41
      %p52 = scmp.eq.s32.totalorder %s32, 0
      %p53 = por %p51, %p52
      %p54 = scmp.ne.s32.totalorder %s40, %s41
      %p55 = scmp.eq.s32.totalorder %s33, 1
      %p56 = por %p54, %p55
      %p58 = scmp.ne.s32.totalorder %s41, %s57
      %p59 = scmp.eq.s32.totalorder %s33, 0
      %p60 = por %p58, %p59
      %s61 = ssub.s32 %s27, %s34
      %p62 = scmp.eq.s32.totalorder %s61, 0
      %s64 = sadd.s32 %s63, 1
      %s65 = scalar_select %p62, %s63, %s64
      %p68 = pneg %p62
      %p69 = scmp.eq.s32.totalorder %s27, 1
      %p70 = por %p68, %p69
      %p71 = scmp.ne.s32.totalorder %s63, %s66
      %p72 = scmp.eq.s32.totalorder %s27, 0
      %p73 = por %p71, %p72
      %p74 = scmp.ne.s32.totalorder %s63, %s66
      %p75 = scmp.eq.s32.totalorder %s32, 1
      %p76 = por %p74, %p75
      %p77 = scmp.ne.s32.totalorder %s66, %s67
      %p78 = scmp.eq.s32.totalorder %s32, 0
      %p79 = por %p77, %p78
      %p80 = scmp.ne.s32.totalorder %s66, %s67
      %p81 = scmp.eq.s32.totalorder %s33, 1
      %p82 = por %p80, %p81
      %p84 = scmp.ne.s32.totalorder %s67, %s83
      %p85 = scmp.eq.s32.totalorder %s33, 0
      %p86 = por %p84, %p85
      %s88 = sadd.s32 %s87, 1
      %p91 = scmp.eq.s32.totalorder %s27, 1
      %p92 = scmp.ne.s32.totalorder %s87, %s89
      %p93 = scmp.eq.s32.totalorder %s27, 0
      %p94 = por %p92, %p93
      %p95 = scmp.ne.s32.totalorder %s87, %s89
      %p96 = scmp.eq.s32.totalorder %s32, 1
      %p97 = por %p95, %p96
      %p98 = scmp.ne.s32.totalorder %s89, %s90
      %p99 = scmp.eq.s32.totalorder %s32, 0
      %p100 = por %p98, %p99
      %p101 = scmp.ne.s32.totalorder %s89, %s90
      %p102 = scmp.eq.s32.totalorder %s33, 1
      %p103 = por %p101, %p102
      %p105 = scmp.ne.s32.totalorder %s90, %s104
      %p106 = scmp.eq.s32.totalorder %s33, 0
      %p107 = por %p105, %p106
      %s109 = sadd.s32 %s108, 1
      %p112 = scmp.eq.s32.totalorder %s27, 1
      %p113 = scmp.ne.s32.totalorder %s108, %s110
      %p114 = scmp.eq.s32.totalorder %s27, 0
      %p115 = por %p113, %p114
      %p116 = scmp.ne.s32.totalorder %s108, %s110
      %p117 = scmp.eq.s32.totalorder %s32, 1
      %p118 = por %p116, %p117
      %p119 = scmp.ne.s32.totalorder %s110, %s111
      %p120 = scmp.eq.s32.totalorder %s32, 0
      %p121 = por %p119, %p120
      %p122 = scmp.ne.s32.totalorder %s110, %s111
      %p123 = scmp.eq.s32.totalorder %s33, 1
      %p124 = por %p122, %p123
      %p126 = scmp.ne.s32.totalorder %s111, %s125
      %p127 = scmp.eq.s32.totalorder %s33, 0
      %p128 = por %p126, %p127
      %s130 = sadd.s32 %s129, 1
      %p133 = scmp.eq.s32.totalorder %s27, 1
      %p134 = scmp.ne.s32.totalorder %s129, %s131
      %p135 = scmp.eq.s32.totalorder %s27, 0
      %p136 = por %p134, %p135
      %p137 = scmp.ne.s32.totalorder %s129, %s131
      %p138 = scmp.eq.s32.totalorder %s32, 1
      %p139 = por %p137, %p138
      %p140 = scmp.ne.s32.totalorder %s131, %s132
      %p141 = scmp.eq.s32.totalorder %s32, 0
      %p142 = por %p140, %p141
      %p143 = scmp.ne.s32.totalorder %s131, %s132
      %p144 = scmp.eq.s32.totalorder %s33, 1
      %p145 = por %p143, %p144
      %p147 = scmp.ne.s32.totalorder %s132, %s146
      %p148 = scmp.eq.s32.totalorder %s33, 0
      %p149 = por %p147, %p148
      %s151 = sadd.s32 %s150, 1
      %p154 = scmp.eq.s32.totalorder %s27, 1
      %p155 = scmp.ne.s32.totalorder %s150, %s152
      %p156 = scmp.eq.s32.totalorder %s27, 0
      %p157 = por %p155, %p156
      %p158 = scmp.ne.s32.totalorder %s150, %s152
      %p159 = scmp.eq.s32.totalorder %s32, 1
      %p160 = por %p158, %p159
      %p161 = scmp.ne.s32.totalorder %s152, %s153
      %p162 = scmp.eq.s32.totalorder %s32, 0
      %p163 = por %p161, %p162
      %p164 = scmp.ne.s32.totalorder %s152, %s153
      %p165 = scmp.eq.s32.totalorder %s33, 1
      %p166 = por %p164, %p165
      %p168 = scmp.ne.s32.totalorder %s153, %s167
      %p169 = scmp.eq.s32.totalorder %s33, 0
      %p170 = por %p168, %p169
      %s172 = sadd.s32 %s171, 1
      %p175 = scmp.eq.s32.totalorder %s27, 1
      %p176 = scmp.ne.s32.totalorder %s171, %s173
      %p177 = scmp.eq.s32.totalorder %s27, 0
      %p178 = por %p176, %p177
      %p179 = scmp.ne.s32.totalorder %s171, %s173
      %p180 = scmp.eq.s32.totalorder %s32, 1
      %p181 = por %p179, %p180
      %p182 = scmp.ne.s32.totalorder %s173, %s174
      %p183 = scmp.eq.s32.totalorder %s32, 0
      %p184 = por %p182, %p183
      %p185 = scmp.ne.s32.totalorder %s173, %s174
      %p186 = scmp.eq.s32.totalorder %s33, 1
      %p187 = por %p185, %p186
      %p189 = scmp.ne.s32.totalorder %s174, %s188
      %p190 = scmp.eq.s32.totalorder %s33, 0
      %p191 = por %p189, %p190
      %s193 = sadd.s32 %s192, 1
      %p196 = scmp.eq.s32.totalorder %s27, 1
      %p197 = scmp.ne.s32.totalorder %s192, %s194
      %p198 = scmp.eq.s32.totalorder %s27, 0
      %p199 = por %p197, %p198
      %p200 = scmp.ne.s32.totalorder %s192, %s194
      %p201 = scmp.eq.s32.totalorder %s32, 1
      %p202 = por %p200, %p201
      %p203 = scmp.ne.s32.totalorder %s194, %s195
      %p204 = scmp.eq.s32.totalorder %s32, 0
      %p205 = por %p203, %p204
      %p206 = scmp.ne.s32.totalorder %s194, %s195
      %p207 = scmp.eq.s32.totalorder %s33, 1
      %p208 = por %p206, %p207
      %p210 = scmp.ne.s32.totalorder %s195, %s209
      %p211 = scmp.eq.s32.totalorder %s33, 0
      %p212 = por %p210, %p211
      %s214 = sadd.s32 %s213, 1
      %p217 = scmp.eq.s32.totalorder %s27, 1
      %p218 = scmp.ne.s32.totalorder %s213, %s215
      %p219 = scmp.eq.s32.totalorder %s27, 0
      %p220 = por %p218, %p219
      %p221 = scmp.ne.s32.totalorder %s213, %s215
      %p222 = scmp.eq.s32.totalorder %s32, 1
      %p223 = por %p221, %p222
      %p224 = scmp.ne.s32.totalorder %s215, %s216
      %p225 = scmp.eq.s32.totalorder %s32, 0
      %p226 = por %p224, %p225
      %p227 = scmp.ne.s32.totalorder %s215, %s216
      %p228 = scmp.eq.s32.totalorder %s33, 1
      %p229 = por %p227, %p228
      %p231 = scmp.ne.s32.totalorder %s216, %s230
      %p232 = scmp.eq.s32.totalorder %s33, 0
      %p233 = por %p231, %p232
      %s235 = sadd.s32 %s234, 1
      %p238 = scmp.eq.s32.totalorder %s27, 1
      %p239 = scmp.ne.s32.totalorder %s234, %s236
      %p240 = scmp.eq.s32.totalorder %s27, 0
      %p241 = por %p239, %p240
      %p242 = scmp.ne.s32.totalorder %s234, %s236
      %p243 = scmp.eq.s32.totalorder %s32, 1
      %p244 = por %p242, %p243
      %p245 = scmp.ne.s32.totalorder %s236, %s237
      %p246 = scmp.eq.s32.totalorder %s32, 0
      %p247 = por %p245, %p246
      %p248 = scmp.ne.s32.totalorder %s236, %s237
      %p249 = scmp.eq.s32.totalorder %s33, 1
      %p250 = por %p248, %p249
      %p252 = scmp.ne.s32.totalorder %s237, %s251
      %p253 = scmp.eq.s32.totalorder %s33, 0
      %p254 = por %p252, %p253
      %s255 = ssub.s32 %s27, %s34
      %p256 = scmp.eq.s32.totalorder %s255, 0
      %s258 = sadd.s32 %s257, 1
      %s259 = scalar_select %p256, %s257, %s258
      %p262 = pneg %p256
      %p263 = scmp.eq.s32.totalorder %s27, 1
      %p264 = por %p262, %p263
      %p265 = scmp.ne.s32.totalorder %s257, %s260
      %p266 = scmp.eq.s32.totalorder %s27, 0
      %p267 = por %p265, %p266
      %p268 = scmp.ne.s32.totalorder %s257, %s260
      %p269 = scmp.eq.s32.totalorder %s32, 1
      %p270 = por %p268, %p269
      %p271 = scmp.ne.s32.totalorder %s260, %s261
      %p272 = scmp.eq.s32.totalorder %s32, 0
      %p273 = por %p271, %p272
      %p274 = scmp.ne.s32.totalorder %s260, %s261
      %p275 = scmp.eq.s32.totalorder %s33, 1
      %p276 = por %p274, %p275
      %p278 = scmp.ne.s32.totalorder %s261, %s277
      %p279 = scmp.eq.s32.totalorder %s33, 0
      %p280 = por %p278, %p279
      %p281 = scmp.le.s32.totalorder 1, %s27
      %p282 = scmp.lt.s32.totalorder %s27, 3
      %p283 = pnand %p281, %p282
      %p284 = pneg %p283
      // Predicated region
      $region9: #{tpu_custom_call.1} parent=5 // pred_check
        _
      $region10: #{tpu_custom_call.1} parent=5 // pred_check_branch
        %286 = sbr.rel (%p283) target = $region12
      $region11: #{tpu_custom_call.1} parent=5 // pred_region
        %s287 = ssub.s32 %s27, 1
        // Predicated region
        $region13: #{tpu_custom_call.1} parent=11 // pred_check
          %p288 = pneg %p100
        $region14: #{tpu_custom_call.1} parent=11 // pred_check_branch
          %290 = sbr.rel (%p288) target = $region16
        $region15: #{tpu_custom_call.1} parent=11 // pred_region
          %s292 = ssub.s32 1024, 1024
          %293 = vsyncadd [#allocation7], %s292
          %s294 = sshll.u32 [#allocation8], 4
          %s295 = int_to_ptr.vmem [resolvable:$true] %s294
          %300 = dma.hbm_to_vmem [thread:$0]  %s2, 1024, %s295, [#allocation7], 64, 64, 4
        $region16: #{tpu_custom_call.1} parent=11 // pred_fallthru
          _
        // Predicated region
        $region17: #{tpu_custom_call.1} parent=11 // pred_check
          %p301 = pneg %p121
        $region18: #{tpu_custom_call.1} parent=11 // pred_check_branch
          %303 = sbr.rel (%p301) target = $region20
        $region19: #{tpu_custom_call.1} parent=11 // pred_region
          _
        $region20: #{tpu_custom_call.1} parent=11 // pred_fallthru
          _
        // Predicated region
        $region21: #{tpu_custom_call.1} parent=11 // pred_check
          %p304 = pneg %p142
        $region22: #{tpu_custom_call.1} parent=11 // pred_check_branch
          %306 = sbr.rel (%p304) target = $region24
        $region23: #{tpu_custom_call.1} parent=11 // pred_region
          %s308 = ssub.s32 9216, 9216
          %309 = vsyncadd [#allocation10], %s308
          %s310 = sshll.u32 [#allocation9], 4
          %s311 = int_to_ptr.vmem [resolvable:$true] %s310
          %316 = dma.hbm_to_vmem [thread:$0]  %s4, 9216, %s311, [#allocation10], 64, 64, 4
        $region24: #{tpu_custom_call.1} parent=11 // pred_fallthru
          _
        // Predicated region
        $region25: #{tpu_custom_call.1} parent=11 // pred_check
          %p317 = pneg %p163
        $region26: #{tpu_custom_call.1} parent=11 // pred_check_branch
          %319 = sbr.rel (%p317) target = $region28
        $region27: #{tpu_custom_call.1} parent=11 // pred_region
          _
        $region28: #{tpu_custom_call.1} parent=11 // pred_fallthru
          _
        // Predicated region
        $region29: #{tpu_custom_call.1} parent=11 // pred_check
          %p320 = pneg %p184
        $region30: #{tpu_custom_call.1} parent=11 // pred_check_branch
          %322 = sbr.rel (%p320) target = $region32
        $region31: #{tpu_custom_call.1} parent=11 // pred_region
          %s324 = ssub.s32 1024, 1024
          %325 = vsyncadd [#allocation10], %s324
          %s326 = sshll.u32 [#allocation11], 4
          %s327 = int_to_ptr.vmem [resolvable:$true] %s326
          %332 = dma.hbm_to_vmem [thread:$0]  %s6, 1024, %s327, [#allocation10], 64, 64, 4
        $region32: #{tpu_custom_call.1} parent=11 // pred_fallthru
          _
        // Predicated region
        $region33: #{tpu_custom_call.1} parent=11 // pred_check
          %p333 = pneg %p205
        $region34: #{tpu_custom_call.1} parent=11 // pred_check_branch
          %335 = sbr.rel (%p333) target = $region36
        $region35: #{tpu_custom_call.1} parent=11 // pred_region
          _
        $region36: #{tpu_custom_call.1} parent=11 // pred_fallthru
          _
        // Predicated region
        $region37: #{tpu_custom_call.1} parent=11 // pred_check
          %p336 = pneg %p226
        $region38: #{tpu_custom_call.1} parent=11 // pred_check_branch
          %338 = sbr.rel (%p336) target = $region40
        $region39: #{tpu_custom_call.1} parent=11 // pred_region
          %s340 = ssub.s32 1024, 1024
          %341 = vsyncadd [#allocation13], %s340
          %s342 = sshll.u32 [#allocation12], 4
          %s343 = int_to_ptr.vmem [resolvable:$true] %s342
          %348 = dma.hbm_to_vmem [thread:$0]  %s8, 1024, %s343, [#allocation13], 64, 64, 4
        $region40: #{tpu_custom_call.1} parent=11 // pred_fallthru
          _
        // Predicated region
        $region41: #{tpu_custom_call.1} parent=11 // pred_check
          %p349 = pneg %p247
        $region42: #{tpu_custom_call.1} parent=11 // pred_check_branch
          %351 = sbr.rel (%p349) target = $region44
        $region43: #{tpu_custom_call.1} parent=11 // pred_region
          _
        $region44: #{tpu_custom_call.1} parent=11 // pred_fallthru
          _
      $region12: #{tpu_custom_call.1} parent=5 // pred_fallthru
        _
      %p352 = scmp.lt.s32.totalorder %s27, 2
      // Predicated region
      $region45: #{tpu_custom_call.1} parent=5 // pred_check
        %p353 = pneg %p352
      $region46: #{tpu_custom_call.1} parent=5 // pred_check_branch
        %355 = sbr.rel (%p353) target = $region48
      $region47: #{tpu_custom_call.1} parent=5 // pred_region
        // Predicated region
        $region49: #{tpu_custom_call.1} parent=47 // pred_check
          %p356 = pneg %p47
        $region50: #{tpu_custom_call.1} parent=47 // pred_check_branch
          %358 = sbr.rel (%p356) target = $region52
        $region51: #{tpu_custom_call.1} parent=47 // pred_region
          %s359 = sand.u32 %s37, 1
          %s360 = scalar_lea.sflag [#allocation4], %s359
          %s361 = sand.u32 %s37, 1
          %s362 = smul.addr %s361, 128
          %s363 = scalar_lea.vmem [#allocation3], %s362
          %s365 = ssub.s32 2048, 2048
          %366 = vsyncadd %s360, %s365
          %s367 = smul.addr %s27, 32
          %s368 = smul.addr %s367, 64
          %s369 = scalar_lea.hbm %s0, %s368
          %s370 = sshll.u32 %s363, 4
          %s371 = int_to_ptr.vmem [resolvable:$true] %s370
          %376 = dma.hbm_to_vmem [thread:$0]  %s369, 2048, %s371, %s360, 64, 64, 4
        $region52: #{tpu_custom_call.1} parent=47 // pred_fallthru
          _
        // Predicated region
        $region53: #{tpu_custom_call.1} parent=47 // pred_check
          %p377 = pneg %p73
        $region54: #{tpu_custom_call.1} parent=47 // pred_check_branch
          %379 = sbr.rel (%p377) target = $region56
        $region55: #{tpu_custom_call.1} parent=47 // pred_region
          %s380 = sand.u32 %s27, 1
          %s381 = scalar_lea.sflag [#allocation7], %s380
          %s382 = sand.u32 %s63, 1
          %s383 = smul.addr %s382, 128
          %s384 = scalar_lea.vmem [#allocation6], %s383
          %s386 = ssub.s32 2048, 2048
          %387 = vsyncadd %s381, %s386
          %s388 = smul.addr %s27, 32
          %s389 = smul.addr %s388, 64
          %s390 = scalar_lea.hbm %s1, %s389
          %s391 = sshll.u32 %s384, 4
          %s392 = int_to_ptr.vmem [resolvable:$true] %s391
          %397 = dma.hbm_to_vmem [thread:$0]  %s390, 2048, %s392, %s381, 64, 64, 4
        $region56: #{tpu_custom_call.1} parent=47 // pred_fallthru
          _
      $region48: #{tpu_custom_call.1} parent=5 // pred_fallthru
        _
      %p398 = scmp.le.s32.totalorder 1, %s27
      %p399 = scmp.lt.s32.totalorder %s27, 3
      %p400 = pnand %p398, %p399
      %p401 = pneg %p400
      // Predicated region
      $region57: #{tpu_custom_call.1} parent=5 // pred_check
        _
      $region58: #{tpu_custom_call.1} parent=5 // pred_check_branch
        %403 = sbr.rel (%p400) target = $region60
      $region59: #{tpu_custom_call.1} parent=5 // pred_region
        %s404 = ssub.s32 %s27, 1
        %s405 = sand.u32 %s40, 1
        %s406 = scalar_lea.sflag [#allocation4], %s405
        %s407 = sand.u32 %s40, 1
        %s408 = smul.addr %s407, 128
        %s409 = scalar_lea.vmem [#allocation3], %s408
        // Predicated region
        $region61: #{tpu_custom_call.1} parent=59 // pred_check
          %p410 = pneg %p53
        $region62: #{tpu_custom_call.1} parent=59 // pred_check_branch
          %412 = sbr.rel (%p410) target = $region64
        $region63: #{tpu_custom_call.1} parent=59 // pred_region
          %413 = dma.done %s406, 2048
        $region64: #{tpu_custom_call.1} parent=59 // pred_fallthru
          _
        %s414 = sand.u32 %s32, 1
        %s415 = scalar_lea.sflag [#allocation7], %s414
        %s416 = sand.u32 %s66, 1
        %s417 = smul.addr %s416, 128
        %s418 = scalar_lea.vmem [#allocation6], %s417
        // Predicated region
        $region65: #{tpu_custom_call.1} parent=59 // pred_check
          %p419 = pneg %p79
        $region66: #{tpu_custom_call.1} parent=59 // pred_check_branch
          %421 = sbr.rel (%p419) target = $region68
        $region67: #{tpu_custom_call.1} parent=59 // pred_region
          %422 = dma.done %s415, 2048
        $region68: #{tpu_custom_call.1} parent=59 // pred_fallthru
          _
        // Predicated region
        $region69: #{tpu_custom_call.1} parent=59 // pred_check
          %p423 = pneg %p100
        $region70: #{tpu_custom_call.1} parent=59 // pred_check_branch
          %425 = sbr.rel (%p423) target = $region72
        $region71: #{tpu_custom_call.1} parent=59 // pred_region
          %426 = dma.done [#allocation7], 1024
        $region72: #{tpu_custom_call.1} parent=59 // pred_fallthru
          _
        // Predicated region
        $region73: #{tpu_custom_call.1} parent=59 // pred_check
          %p427 = pneg %p142
        $region74: #{tpu_custom_call.1} parent=59 // pred_check_branch
          %429 = sbr.rel (%p427) target = $region76
        $region75: #{tpu_custom_call.1} parent=59 // pred_region
          %430 = dma.done [#allocation10], 9216
        $region76: #{tpu_custom_call.1} parent=59 // pred_fallthru
          _
        // Predicated region
        $region77: #{tpu_custom_call.1} parent=59 // pred_check
          %p431 = pneg %p184
        $region78: #{tpu_custom_call.1} parent=59 // pred_check_branch
          %433 = sbr.rel (%p431) target = $region80
        $region79: #{tpu_custom_call.1} parent=59 // pred_region
          %434 = dma.done [#allocation10], 1024
        $region80: #{tpu_custom_call.1} parent=59 // pred_fallthru
          _
        // Predicated region
        $region81: #{tpu_custom_call.1} parent=59 // pred_check
          %p435 = pneg %p226
        $region82: #{tpu_custom_call.1} parent=59 // pred_check_branch
          %437 = sbr.rel (%p435) target = $region84
        $region83: #{tpu_custom_call.1} parent=59 // pred_region
          %438 = dma.done [#allocation13], 1024
        $region84: #{tpu_custom_call.1} parent=59 // pred_fallthru
          _
        %s439 = sand.u32 %s40, 1
        %s440 = scalar_lea.sflag [#allocation4], %s439
        %s441 = sand.u32 %s40, 1
        %s442 = smul.addr %s441, 128
        %s443 = scalar_lea.vmem [#allocation3], %s442
        %p444 = pneg %p53
        %p445 = pneg %p50
        %s446 = sand.u32 %s32, 1
        %s447 = scalar_lea.sflag [#allocation7], %s446
        %s448 = sand.u32 %s66, 1
        %s449 = smul.addr %s448, 128
        %s450 = scalar_lea.vmem [#allocation6], %s449
        %p451 = pneg %p79
        %p452 = pneg %p76
        %p453 = pneg %p100
        %p454 = pneg %p97
        %p455 = pneg %p121
        %p456 = pneg %p118
        %p457 = pneg %p142
        %p458 = pneg %p139
        %p459 = pneg %p163
        %p460 = pneg %p160
        %p461 = pneg %p184
        %p462 = pneg %p181
        %p463 = pneg %p205
        %p464 = pneg %p202
        %p465 = pneg %p226
        %p466 = pneg %p223
        %p467 = pneg %p247
        %p468 = pneg %p244
        %p469 = pneg %p273
        %p470 = pneg %p270
        %s471 = sand.u32 %s260, 1
        %s472 = scalar_lea.sflag [#allocation5], %s471
        %s473 = sand.u32 %s260, 1
        %s474 = smul.addr %s473, 256
        %s475 = scalar_lea.vmem [#allocation14], %s474
        %477 = vst [vmem:[#allocation2] sm:$0xff] 0
        %478 = vst [vmem:[#allocation2 + $0x8] sm:$0xf] 0
        %479 = vst [vmem:[#allocation2 + $0xc] sm:$0xff] 0
        %480 = vst [vmem:[#allocation2 + $0x14] sm:$0xf] 0
        %481 = vst [vmem:[#allocation2 + $0x198] sm:$0xff] 0
        %482 = vst [vmem:[#allocation2 + $0x1a0] sm:$0xf] 0
        %483 = vst [vmem:[#allocation2 + $0x1a4] sm:$0xff] 0
        %484 = vst [vmem:[#allocation2 + $0x1ac] sm:$0xf] 0
        %v485 = vld [vmem:[%s409] sm:$0xf]
        %v486 = vld [vmem:[%s409 + $0x4] sm:$0xf]
        %v487 = vld [vmem:[%s409 + $0x8] sm:$0xf]
        %v488 = vld [vmem:[%s409 + $0xc] sm:$0xf]
        %v489 = vld [vmem:[%s409 + $0x10] sm:$0xf]
        %v490 = vld [vmem:[%s409 + $0x14] sm:$0xf]
        %v491 = vld [vmem:[%s409 + $0x18] sm:$0xf]
        %v492 = vld [vmem:[%s409 + $0x1c] sm:$0xf]
        %v493 = vld [vmem:[%s409 + $0x20] sm:$0xf]
        %v494 = vld [vmem:[%s409 + $0x24] sm:$0xf]
        %v495 = vld [vmem:[%s409 + $0x28] sm:$0xf]
        %v496 = vld [vmem:[%s409 + $0x2c] sm:$0xf]
        %v497 = vld [vmem:[%s409 + $0x30] sm:$0xf]
        %v498 = vld [vmem:[%s409 + $0x34] sm:$0xf]
        %v499 = vld [vmem:[%s409 + $0x38] sm:$0xf]
        %v500 = vld [vmem:[%s409 + $0x3c] sm:$0xf]
        %v501 = vld [vmem:[%s409 + $0x40] sm:$0xf]
        %v502 = vld [vmem:[%s409 + $0x44] sm:$0xf]
        %v503 = vld [vmem:[%s409 + $0x48] sm:$0xf]
        %v504 = vld [vmem:[%s409 + $0x4c] sm:$0xf]
        %v505 = vld [vmem:[%s409 + $0x50] sm:$0xf]
        %v506 = vld [vmem:[%s409 + $0x54] sm:$0xf]
        %v507 = vld [vmem:[%s409 + $0x58] sm:$0xf]
        %v508 = vld [vmem:[%s409 + $0x5c] sm:$0xf]
        %v509 = vld [vmem:[%s409 + $0x60] sm:$0xf]
        %v510 = vld [vmem:[%s409 + $0x64] sm:$0xf]
        %v511 = vld [vmem:[%s409 + $0x68] sm:$0xf]
        %v512 = vld [vmem:[%s409 + $0x6c] sm:$0xf]
        %v513 = vld [vmem:[%s409 + $0x70] sm:$0xf]
        %v514 = vld [vmem:[%s409 + $0x74] sm:$0xf]
        %v515 = vld [vmem:[%s409 + $0x78] sm:$0xf]
        %v516 = vld [vmem:[%s409 + $0x7c] sm:$0xf]
        %v517 = vld [vmem:[#allocation8] sm:$0xf]
        %v518 = vld [vmem:[#allocation8 + $0x4] sm:$0xf]
        %v519 = vld [vmem:[#allocation8 + $0x8] sm:$0xf]
        %v520 = vld [vmem:[#allocation8 + $0xc] sm:$0xf]
        %v521 = vld [vmem:[#allocation8 + $0x10] sm:$0xf]
        %v522 = vld [vmem:[#allocation8 + $0x14] sm:$0xf]
        %v523 = vld [vmem:[#allocation8 + $0x18] sm:$0xf]
        %v524 = vld [vmem:[#allocation8 + $0x1c] sm:$0xf]
        %v525 = vld [vmem:[#allocation8 + $0x20] sm:$0xf]
        %v526 = vld [vmem:[#allocation8 + $0x24] sm:$0xf]
        %v527 = vld [vmem:[#allocation8 + $0x28] sm:$0xf]
        %v528 = vld [vmem:[#allocation8 + $0x2c] sm:$0xf]
        %v529 = vld [vmem:[#allocation8 + $0x30] sm:$0xf]
        %v530 = vld [vmem:[#allocation8 + $0x34] sm:$0xf]
        %v531 = vld [vmem:[#allocation8 + $0x38] sm:$0xf]
        %v532 = vld [vmem:[#allocation8 + $0x3c] sm:$0xf]
        %v533 = vld [vmem:[%s3] sm:$0x1]
        %v535 = vlaneseq
        %v536 = vshrl.u32 %v535, 7
        %v537 = vsub.s32 0, %v536
        %v538 = vrot.slane %v533, %v537
        %v572 = vunpack.c.l.b16 %v485
        %v573 = vunpack.c.l.b16 %v486
        %v574 = vunpack.c.l.b16 %v487
        %v575 = vunpack.c.l.b16 %v488
        %v576 = vunpack.c.l.b16 %v489
        %v577 = vunpack.c.l.b16 %v490
        %v578 = vunpack.c.l.b16 %v491
        %v579 = vunpack.c.l.b16 %v492
        %v580 = vunpack.c.l.b16 %v493
        %v581 = vunpack.c.l.b16 %v494
        %v582 = vunpack.c.l.b16 %v495
        %v583 = vunpack.c.l.b16 %v496
        %v584 = vunpack.c.l.b16 %v497
        %v585 = vunpack.c.l.b16 %v498
        %v586 = vunpack.c.l.b16 %v499
        %v587 = vunpack.c.l.b16 %v500
        %v588 = vunpack.c.l.b16 %v501
        %v589 = vunpack.c.l.b16 %v502
        %v590 = vunpack.c.l.b16 %v503
        %v591 = vunpack.c.l.b16 %v504
        %v592 = vunpack.c.l.b16 %v505
        %v593 = vunpack.c.l.b16 %v506
        %v594 = vunpack.c.l.b16 %v507
        %v595 = vunpack.c.l.b16 %v508
        %v596 = vunpack.c.l.b16 %v509
        %v597 = vunpack.c.l.b16 %v510
        %v598 = vunpack.c.l.b16 %v511
        %v599 = vunpack.c.l.b16 %v512
        %v600 = vunpack.c.l.b16 %v513
        %v601 = vunpack.c.l.b16 %v514
        %v602 = vunpack.c.l.b16 %v515
        %v603 = vunpack.c.l.b16 %v516
        %v604 = vpack.c.b16 %v573, %v572
        %v605 = vpack.c.b16 %v575, %v574
        %v606 = vpack.c.b16 %v577, %v576
        %v607 = vpack.c.b16 %v579, %v578
        %v608 = vpack.c.b16 %v581, %v580
        %v609 = vpack.c.b16 %v583, %v582
        %v610 = vpack.c.b16 %v585, %v584
        %v611 = vpack.c.b16 %v587, %v586
        %v612 = vpack.c.b16 %v589, %v588
        %v613 = vpack.c.b16 %v591, %v590
        %v614 = vpack.c.b16 %v593, %v592
        %v615 = vpack.c.b16 %v595, %v594
        %v616 = vpack.c.b16 %v597, %v596
        %v617 = vpack.c.b16 %v599, %v598
        %v618 = vpack.c.b16 %v601, %v600
        %v619 = vpack.c.b16 %v603, %v602
        %v652 = vunpack.c.l.b16 %v517
        %v653 = vunpack.c.l.b16 %v518
        %v654 = vunpack.c.l.b16 %v519
        %v655 = vunpack.c.l.b16 %v520
        %v656 = vunpack.c.l.b16 %v521
        %v657 = vunpack.c.l.b16 %v522
        %v658 = vunpack.c.l.b16 %v523
        %v659 = vunpack.c.l.b16 %v524
        %v660 = vunpack.c.l.b16 %v525
        %v661 = vunpack.c.l.b16 %v526
        %v662 = vunpack.c.l.b16 %v527
        %v663 = vunpack.c.l.b16 %v528
        %v664 = vunpack.c.l.b16 %v529
        %v665 = vunpack.c.l.b16 %v530
        %v666 = vunpack.c.l.b16 %v531
        %v667 = vunpack.c.l.b16 %v532
        %v668 = vpack.c.b16 %v653, %v652
        %v669 = vpack.c.b16 %v655, %v654
        %v670 = vpack.c.b16 %v657, %v656
        %v671 = vpack.c.b16 %v659, %v658
        %v672 = vpack.c.b16 %v661, %v660
        %v673 = vpack.c.b16 %v663, %v662
        %v674 = vpack.c.b16 %v665, %v664
        %v675 = vpack.c.b16 %v667, %v666
        %684 = vmatprep.subr.bf16.mxu0 0
        %685 = vmatpush1.bf16.msra.mxu0 %v675
        %686 = vmatprep.subr.bf16.mxu0 0
        %687 = vmatpush1.bf16.msra.mxu0 %v674
        %688 = vmatprep.subr.bf16.mxu0 0
        %689 = vmatpush1.bf16.msra.mxu0 %v673
        %690 = vmatprep.subr.bf16.mxu0 0
        %691 = vmatpush1.bf16.msra.mxu0 %v672
        %692 = vmatprep.subr.bf16.mxu0 0
        %693 = vmatpush1.bf16.msra.mxu0 %v671
        %694 = vmatprep.subr.bf16.mxu0 0
        %695 = vmatpush1.bf16.msra.mxu0 %v670
        %696 = vmatprep.subr.bf16.mxu0 0
        %697 = vmatpush1.bf16.msra.mxu0 %v669
        %698 = vmatprep.subr.bf16.mxu0 0
        %699 = vmatpush1.bf16.msra.mxu0 %v668
        %700 = vmatprep.subr.bf16.mxu0 0
        %701 = vmatpush2.bf16.msra.mxu0 0
        %702 = vmatprep.subr.bf16.mxu0 0
        %703 = vmatpush2.bf16.msra.mxu0 0
        %704 = vmatprep.subr.bf16.mxu0 0
        %705 = vmatpush2.bf16.msra.mxu0 0
        %706 = vmatprep.subr.bf16.mxu0 0
        %707 = vmatpush2.bf16.msra.mxu0 0
        %708 = vmatprep.subr.bf16.mxu0 0
        %709 = vmatpush2.bf16.msra.mxu0 0
        %710 = vmatprep.subr.bf16.mxu0 0
        %711 = vmatpush2.bf16.msra.mxu0 0
        %712 = vmatprep.subr.bf16.mxu0 0
        %713 = vmatpush2.bf16.msra.mxu0 0
        %714 = vmatprep.subr.bf16.mxu0 0
        %715 = vmatpush2.bf16.msra.mxu0 0
        %716 = vmatprep.mubr.bf16.mxu0 0
        %717 = vmatmul.mubr.bf16.gmra.mxu0 %v604
        %v718 = vpop.f32.mrf.mxu0
        %v719 = vadd.f32 %v538, %v718
        %v720 = vpop.f32.mrf.mxu0
        %v721 = vpop.f32.mrf.mxu0
        %v722 = vadd.f32 %v538, %v721
        %v723 = vpop.f32.mrf.mxu0
        %724 = vmatprep.mubr.bf16.mxu0 0
        %725 = vmatmul.mubr.bf16.gmra.mxu0 %v605
        %v726 = vpop.f32.mrf.mxu0
        %v727 = vadd.f32 %v538, %v726
        %v728 = vpop.f32.mrf.mxu0
        %v729 = vpop.f32.mrf.mxu0
        %v730 = vadd.f32 %v538, %v729
        %v731 = vpop.f32.mrf.mxu0
        %732 = vmatprep.mubr.bf16.mxu0 0
        %733 = vmatmul.mubr.bf16.gmra.mxu0 %v606
        %v734 = vpop.f32.mrf.mxu0
        %v735 = vadd.f32 %v538, %v734
        %v736 = vpop.f32.mrf.mxu0
        %v737 = vpop.f32.mrf.mxu0
        %v738 = vadd.f32 %v538, %v737
        %v739 = vpop.f32.mrf.mxu0
        %740 = vmatprep.mubr.bf16.mxu0 0
        %741 = vmatmul.mubr.bf16.gmra.mxu0 %v607
        %v742 = vpop.f32.mrf.mxu0
        %v743 = vadd.f32 %v538, %v742
        %v744 = vpop.f32.mrf.mxu0
        %v745 = vpop.f32.mrf.mxu0
        %v746 = vadd.f32 %v538, %v745
        %v747 = vpop.f32.mrf.mxu0
        %748 = vmatprep.mubr.bf16.mxu0 0
        %749 = vmatmul.mubr.bf16.gmra.mxu0 %v608
        %v750 = vpop.f32.mrf.mxu0
        %v751 = vadd.f32 %v538, %v750
        %v752 = vpop.f32.mrf.mxu0
        %v753 = vpop.f32.mrf.mxu0
        %v754 = vadd.f32 %v538, %v753
        %v755 = vpop.f32.mrf.mxu0
        %756 = vmatprep.mubr.bf16.mxu0 0
        %757 = vmatmul.mubr.bf16.gmra.mxu0 %v609
        %v758 = vpop.f32.mrf.mxu0
        %v759 = vadd.f32 %v538, %v758
        %v760 = vpop.f32.mrf.mxu0
        %v761 = vpop.f32.mrf.mxu0
        %v762 = vadd.f32 %v538, %v761
        %v763 = vpop.f32.mrf.mxu0
        %764 = vmatprep.mubr.bf16.mxu0 0
        %765 = vmatmul.mubr.bf16.gmra.mxu0 %v610
        %v766 = vpop.f32.mrf.mxu0
        %v767 = vadd.f32 %v538, %v766
        %v768 = vpop.f32.mrf.mxu0
        %v769 = vpop.f32.mrf.mxu0
        %v770 = vadd.f32 %v538, %v769
        %v771 = vpop.f32.mrf.mxu0
        %772 = vmatprep.mubr.bf16.mxu0 0
        %773 = vmatmul.mubr.bf16.gmra.mxu0 %v611
        %v774 = vpop.f32.mrf.mxu0
        %v775 = vadd.f32 %v538, %v774
        %v776 = vpop.f32.mrf.mxu0
        %v777 = vpop.f32.mrf.mxu0
        %v778 = vadd.f32 %v538, %v777
        %v779 = vpop.f32.mrf.mxu0
        %780 = vmatprep.mubr.bf16.mxu0 0
        %781 = vmatmul.mubr.bf16.gmra.mxu0 %v612
        %v782 = vpop.f32.mrf.mxu0
        %v783 = vadd.f32 %v538, %v782
        %v784 = vpop.f32.mrf.mxu0
        %v785 = vpop.f32.mrf.mxu0
        %v786 = vadd.f32 %v538, %v785
        %v787 = vpop.f32.mrf.mxu0
        %788 = vmatprep.mubr.bf16.mxu0 0
        %789 = vmatmul.mubr.bf16.gmra.mxu0 %v613
        %v790 = vpop.f32.mrf.mxu0
        %v791 = vadd.f32 %v538, %v790
        %v792 = vpop.f32.mrf.mxu0
        %v793 = vpop.f32.mrf.mxu0
        %v794 = vadd.f32 %v538, %v793
        %v795 = vpop.f32.mrf.mxu0
        %796 = vmatprep.mubr.bf16.mxu0 0
        %797 = vmatmul.mubr.bf16.gmra.mxu0 %v614
        %v798 = vpop.f32.mrf.mxu0
        %v799 = vadd.f32 %v538, %v798
        %v800 = vpop.f32.mrf.mxu0
        %v801 = vpop.f32.mrf.mxu0
        %v802 = vadd.f32 %v538, %v801
        %v803 = vpop.f32.mrf.mxu0
        %804 = vmatprep.mubr.bf16.mxu0 0
        %805 = vmatmul.mubr.bf16.gmra.mxu0 %v615
        %v806 = vpop.f32.mrf.mxu0
        %v807 = vadd.f32 %v538, %v806
        %v808 = vpop.f32.mrf.mxu0
        %v809 = vpop.f32.mrf.mxu0
        %v810 = vadd.f32 %v538, %v809
        %v811 = vpop.f32.mrf.mxu0
        %812 = vmatprep.mubr.bf16.mxu0 0
        %813 = vmatmul.mubr.bf16.gmra.mxu0 %v616
        %v814 = vpop.f32.mrf.mxu0
        %v815 = vadd.f32 %v538, %v814
        %v816 = vpop.f32.mrf.mxu0
        %v817 = vpop.f32.mrf.mxu0
        %v818 = vadd.f32 %v538, %v817
        %v819 = vpop.f32.mrf.mxu0
        %820 = vmatprep.mubr.bf16.mxu0 0
        %821 = vmatmul.mubr.bf16.gmra.mxu0 %v617
        %v822 = vpop.f32.mrf.mxu0
        %v823 = vadd.f32 %v538, %v822
        %v824 = vpop.f32.mrf.mxu0
        %v825 = vpop.f32.mrf.mxu0
        %v826 = vadd.f32 %v538, %v825
        %v827 = vpop.f32.mrf.mxu0
        %828 = vmatprep.mubr.bf16.mxu0 0
        %829 = vmatmul.mubr.bf16.gmra.mxu0 %v618
        %v830 = vpop.f32.mrf.mxu0
        %v831 = vadd.f32 %v538, %v830
        %v832 = vpop.f32.mrf.mxu0
        %v833 = vpop.f32.mrf.mxu0
        %v834 = vadd.f32 %v538, %v833
        %v835 = vpop.f32.mrf.mxu0
        %836 = vmatprep.mubr.bf16.mxu0 0
        %837 = vmatmul.mubr.bf16.gmra.mxu0 %v619
        %v838 = vpop.f32.mrf.mxu0
        %v839 = vadd.f32 %v538, %v838
        %v840 = vpop.f32.mrf.mxu0
        %v841 = vpop.f32.mrf.mxu0
        %v842 = vadd.f32 %v538, %v841
        %v843 = vpop.f32.mrf.mxu0
        %844 = vdwg.mxu0
        %v845 = vmax.f32 %v719, 0.0
        %v846 = vmax.f32 %v722, 0.0
        %v847 = vmax.f32 %v727, 0.0
        %v848 = vmax.f32 %v730, 0.0
        %v849 = vmax.f32 %v735, 0.0
        %v850 = vmax.f32 %v738, 0.0
        %v851 = vmax.f32 %v743, 0.0
        %v852 = vmax.f32 %v746, 0.0
        %v853 = vmax.f32 %v751, 0.0
        %v854 = vmax.f32 %v754, 0.0
        %v855 = vmax.f32 %v759, 0.0
        %v856 = vmax.f32 %v762, 0.0
        %v857 = vmax.f32 %v767, 0.0
        %v858 = vmax.f32 %v770, 0.0
        %v859 = vmax.f32 %v775, 0.0
        %v860 = vmax.f32 %v778, 0.0
        %v861 = vmax.f32 %v783, 0.0
        %v862 = vmax.f32 %v786, 0.0
        %v863 = vmax.f32 %v791, 0.0
        %v864 = vmax.f32 %v794, 0.0
        %v865 = vmax.f32 %v799, 0.0
        %v866 = vmax.f32 %v802, 0.0
        %v867 = vmax.f32 %v807, 0.0
        %v868 = vmax.f32 %v810, 0.0
        %v869 = vmax.f32 %v815, 0.0
        %v870 = vmax.f32 %v818, 0.0
        %v871 = vmax.f32 %v823, 0.0
        %v872 = vmax.f32 %v826, 0.0
        %v873 = vmax.f32 %v831, 0.0
        %v874 = vmax.f32 %v834, 0.0
        %v875 = vmax.f32 %v839, 0.0
        %v876 = vmax.f32 %v842, 0.0
        %v877 = vld [vmem:[%s418] sm:$0xf]
        %v878 = vld [vmem:[%s418 + $0x4] sm:$0xf]
        %v879 = vld [vmem:[%s418 + $0x8] sm:$0xf]
        %v880 = vld [vmem:[%s418 + $0xc] sm:$0xf]
        %v881 = vld [vmem:[%s418 + $0x10] sm:$0xf]
        %v882 = vld [vmem:[%s418 + $0x14] sm:$0xf]
        %v883 = vld [vmem:[%s418 + $0x18] sm:$0xf]
        %v884 = vld [vmem:[%s418 + $0x1c] sm:$0xf]
        %v885 = vld [vmem:[%s418 + $0x20] sm:$0xf]
        %v886 = vld [vmem:[%s418 + $0x24] sm:$0xf]
        %v887 = vld [vmem:[%s418 + $0x28] sm:$0xf]
        %v888 = vld [vmem:[%s418 + $0x2c] sm:$0xf]
        %v889 = vld [vmem:[%s418 + $0x30] sm:$0xf]
        %v890 = vld [vmem:[%s418 + $0x34] sm:$0xf]
        %v891 = vld [vmem:[%s418 + $0x38] sm:$0xf]
        %v892 = vld [vmem:[%s418 + $0x3c] sm:$0xf]
        %v893 = vld [vmem:[%s418 + $0x40] sm:$0xf]
        %v894 = vld [vmem:[%s418 + $0x44] sm:$0xf]
        %v895 = vld [vmem:[%s418 + $0x48] sm:$0xf]
        %v896 = vld [vmem:[%s418 + $0x4c] sm:$0xf]
        %v897 = vld [vmem:[%s418 + $0x50] sm:$0xf]
        %v898 = vld [vmem:[%s418 + $0x54] sm:$0xf]
        %v899 = vld [vmem:[%s418 + $0x58] sm:$0xf]
        %v900 = vld [vmem:[%s418 + $0x5c] sm:$0xf]
        %v901 = vld [vmem:[%s418 + $0x60] sm:$0xf]
        %v902 = vld [vmem:[%s418 + $0x64] sm:$0xf]
        %v903 = vld [vmem:[%s418 + $0x68] sm:$0xf]
        %v904 = vld [vmem:[%s418 + $0x6c] sm:$0xf]
        %v905 = vld [vmem:[%s418 + $0x70] sm:$0xf]
        %v906 = vld [vmem:[%s418 + $0x74] sm:$0xf]
        %v907 = vld [vmem:[%s418 + $0x78] sm:$0xf]
        %v908 = vld [vmem:[%s418 + $0x7c] sm:$0xf]
        %v909 = vunpack.c.l.bf16 %v877
        %v910 = vunpack.c.l.bf16 %v878
        %v911 = vunpack.c.l.bf16 %v879
        %v912 = vunpack.c.l.bf16 %v880
        %v913 = vunpack.c.l.bf16 %v881
        %v914 = vunpack.c.l.bf16 %v882
        %v915 = vunpack.c.l.bf16 %v883
        %v916 = vunpack.c.l.bf16 %v884
        %v917 = vunpack.c.l.bf16 %v885
        %v918 = vunpack.c.l.bf16 %v886
        %v919 = vunpack.c.l.bf16 %v887
        %v920 = vunpack.c.l.bf16 %v888
        %v921 = vunpack.c.l.bf16 %v889
        %v922 = vunpack.c.l.bf16 %v890
        %v923 = vunpack.c.l.bf16 %v891
        %v924 = vunpack.c.l.bf16 %v892
        %v925 = vunpack.c.l.bf16 %v893
        %v926 = vunpack.c.l.bf16 %v894
        %v927 = vunpack.c.l.bf16 %v895
        %v928 = vunpack.c.l.bf16 %v896
        %v929 = vunpack.c.l.bf16 %v897
        %v930 = vunpack.c.l.bf16 %v898
        %v931 = vunpack.c.l.bf16 %v899
        %v932 = vunpack.c.l.bf16 %v900
        %v933 = vunpack.c.l.bf16 %v901
        %v934 = vunpack.c.l.bf16 %v902
        %v935 = vunpack.c.l.bf16 %v903
        %v936 = vunpack.c.l.bf16 %v904
        %v937 = vunpack.c.l.bf16 %v905
        %v938 = vunpack.c.l.bf16 %v906
        %v939 = vunpack.c.l.bf16 %v907
        %v940 = vunpack.c.l.bf16 %v908
        %v941 = vadd.f32 %v845, %v909
        %v942 = vadd.f32 %v846, %v910
        %v943 = vadd.f32 %v847, %v911
        %v944 = vadd.f32 %v848, %v912
        %v945 = vadd.f32 %v849, %v913
        %v946 = vadd.f32 %v850, %v914
        %v947 = vadd.f32 %v851, %v915
        %v948 = vadd.f32 %v852, %v916
        %v949 = vadd.f32 %v853, %v917
        %v950 = vadd.f32 %v854, %v918
        %v951 = vadd.f32 %v855, %v919
        %v952 = vadd.f32 %v856, %v920
        %v953 = vadd.f32 %v857, %v921
        %v954 = vadd.f32 %v858, %v922
        %v955 = vadd.f32 %v859, %v923
        %v956 = vadd.f32 %v860, %v924
        %v957 = vadd.f32 %v861, %v925
        %v958 = vadd.f32 %v862, %v926
        %v959 = vadd.f32 %v863, %v927
        %v960 = vadd.f32 %v864, %v928
        %v961 = vadd.f32 %v865, %v929
        %v962 = vadd.f32 %v866, %v930
        %v963 = vadd.f32 %v867, %v931
        %v964 = vadd.f32 %v868, %v932
        %v965 = vadd.f32 %v869, %v933
        %v966 = vadd.f32 %v870, %v934
        %v967 = vadd.f32 %v871, %v935
        %v968 = vadd.f32 %v872, %v936
        %v969 = vadd.f32 %v873, %v937
        %v970 = vadd.f32 %v874, %v938
        %v971 = vadd.f32 %v875, %v939
        %v972 = vadd.f32 %v876, %v940
        %v973 = vlaneseq
        %v974 = vshrl.u32 %v973, 7
        %v975 = vadd.s32 %v974, 8
        %v976 = vadd.s32 %v974, 16
        %v977 = vadd.s32 %v974, 24
        %v978 = vadd.s32 %v974, 32
        %v979 = vadd.s32 %v974, 40
        %v980 = vadd.s32 %v974, 48
        %v981 = vadd.s32 %v974, 56
        %v982 = vadd.s32 %v974, 64
        %v983 = vadd.s32 %v974, 72
        %v984 = vadd.s32 %v974, 80
        %v985 = vadd.s32 %v974, 88
        %v986 = vadd.s32 %v974, 96
        %v987 = vadd.s32 %v974, 104
        %v988 = vadd.s32 %v974, 112
        %v989 = vadd.s32 %v974, 120
        %v990 = vadd.s32 %v974, 128
        %v991 = vadd.s32 %v974, 136
        %v992 = vadd.s32 %v974, 144
        %v993 = vadd.s32 %v974, 152
        %v994 = vadd.s32 %v974, 160
        %v995 = vadd.s32 %v974, 168
        %v996 = vadd.s32 %v974, 176
        %v997 = vadd.s32 %v974, 184
        %v998 = vadd.s32 %v974, 192
        %v999 = vadd.s32 %v974, 200
        %v1000 = vadd.s32 %v974, 208
        %v1001 = vadd.s32 %v974, 216
        %v1002 = vadd.s32 %v974, 224
        %v1003 = vadd.s32 %v974, 232
        %v1004 = vadd.s32 %v974, 240
        %v1005 = vadd.s32 %v974, 248
        %vm1006 = vcmp.lt.s32.totalorder %v974, 0
        %v1007 = vsub.s32 0, %v974
        %v1008 = vsel %vm1006, %v1007, %v974
        %v1009 = vshrl.u32 %v1008, 4
        %v1010 = vand.u32 %v1008, 15
        %v1011 = vsub.s32 0, %v1010
        %v1012 = vsel %vm1006, %v1011, %v1010
        %vm1013 = vcmp.lt.s32.totalorder %v975, 0
        %v1014 = vsub.s32 0, %v975
        %v1015 = vsel %vm1013, %v1014, %v975
        %v1016 = vshrl.u32 %v1015, 4
        %v1017 = vand.u32 %v1015, 15
        %v1018 = vsub.s32 0, %v1017
        %v1019 = vsel %vm1013, %v1018, %v1017
        %vm1020 = vcmp.lt.s32.totalorder %v976, 0
        %v1021 = vsub.s32 0, %v976
        %v1022 = vsel %vm1020, %v1021, %v976
        %v1023 = vshrl.u32 %v1022, 4
        %v1024 = vand.u32 %v1022, 15
        %v1025 = vsub.s32 0, %v1024
        %v1026 = vsel %vm1020, %v1025, %v1024
        %vm1027 = vcmp.lt.s32.totalorder %v977, 0
        %v1028 = vsub.s32 0, %v977
        %v1029 = vsel %vm1027, %v1028, %v977
        %v1030 = vshrl.u32 %v1029, 4
        %v1031 = vand.u32 %v1029, 15
        %v1032 = vsub.s32 0, %v1031
        %v1033 = vsel %vm1027, %v1032, %v1031
        %vm1034 = vcmp.lt.s32.totalorder %v978, 0
        %v1035 = vsub.s32 0, %v978
        %v1036 = vsel %vm1034, %v1035, %v978
        %v1037 = vshrl.u32 %v1036, 4
        %v1038 = vand.u32 %v1036, 15
        %v1039 = vsub.s32 0, %v1038
        %v1040 = vsel %vm1034, %v1039, %v1038
        %vm1041 = vcmp.lt.s32.totalorder %v979, 0
        %v1042 = vsub.s32 0, %v979
        %v1043 = vsel %vm1041, %v1042, %v979
        %v1044 = vshrl.u32 %v1043, 4
        %v1045 = vand.u32 %v1043, 15
        %v1046 = vsub.s32 0, %v1045
        %v1047 = vsel %vm1041, %v1046, %v1045
        %vm1048 = vcmp.lt.s32.totalorder %v980, 0
        %v1049 = vsub.s32 0, %v980
        %v1050 = vsel %vm1048, %v1049, %v980
        %v1051 = vshrl.u32 %v1050, 4
        %v1052 = vand.u32 %v1050, 15
        %v1053 = vsub.s32 0, %v1052
        %v1054 = vsel %vm1048, %v1053, %v1052
        %vm1055 = vcmp.lt.s32.totalorder %v981, 0
        %v1056 = vsub.s32 0, %v981
        %v1057 = vsel %vm1055, %v1056, %v981
        %v1058 = vshrl.u32 %v1057, 4
        %v1059 = vand.u32 %v1057, 15
        %v1060 = vsub.s32 0, %v1059
        %v1061 = vsel %vm1055, %v1060, %v1059
        %vm1062 = vcmp.lt.s32.totalorder %v982, 0
        %v1063 = vsub.s32 0, %v982
        %v1064 = vsel %vm1062, %v1063, %v982
        %v1065 = vshrl.u32 %v1064, 4
        %v1066 = vand.u32 %v1064, 15
        %v1067 = vsub.s32 0, %v1066
        %v1068 = vsel %vm1062, %v1067, %v1066
        %vm1069 = vcmp.lt.s32.totalorder %v983, 0
        %v1070 = vsub.s32 0, %v983
        %v1071 = vsel %vm1069, %v1070, %v983
        %v1072 = vshrl.u32 %v1071, 4
        %v1073 = vand.u32 %v1071, 15
        %v1074 = vsub.s32 0, %v1073
        %v1075 = vsel %vm1069, %v1074, %v1073
        %vm1076 = vcmp.lt.s32.totalorder %v984, 0
        %v1077 = vsub.s32 0, %v984
        %v1078 = vsel %vm1076, %v1077, %v984
        %v1079 = vshrl.u32 %v1078, 4
        %v1080 = vand.u32 %v1078, 15
        %v1081 = vsub.s32 0, %v1080
        %v1082 = vsel %vm1076, %v1081, %v1080
        %vm1083 = vcmp.lt.s32.totalorder %v985, 0
        %v1084 = vsub.s32 0, %v985
        %v1085 = vsel %vm1083, %v1084, %v985
        %v1086 = vshrl.u32 %v1085, 4
        %v1087 = vand.u32 %v1085, 15
        %v1088 = vsub.s32 0, %v1087
        %v1089 = vsel %vm1083, %v1088, %v1087
        %vm1090 = vcmp.lt.s32.totalorder %v986, 0
        %v1091 = vsub.s32 0, %v986
        %v1092 = vsel %vm1090, %v1091, %v986
        %v1093 = vshrl.u32 %v1092, 4
        %v1094 = vand.u32 %v1092, 15
        %v1095 = vsub.s32 0, %v1094
        %v1096 = vsel %vm1090, %v1095, %v1094
        %vm1097 = vcmp.lt.s32.totalorder %v987, 0
        %v1098 = vsub.s32 0, %v987
        %v1099 = vsel %vm1097, %v1098, %v987
        %v1100 = vshrl.u32 %v1099, 4
        %v1101 = vand.u32 %v1099, 15
        %v1102 = vsub.s32 0, %v1101
        %v1103 = vsel %vm1097, %v1102, %v1101
        %vm1104 = vcmp.lt.s32.totalorder %v988, 0
        %v1105 = vsub.s32 0, %v988
        %v1106 = vsel %vm1104, %v1105, %v988
        %v1107 = vshrl.u32 %v1106, 4
        %v1108 = vand.u32 %v1106, 15
        %v1109 = vsub.s32 0, %v1108
        %v1110 = vsel %vm1104, %v1109, %v1108
        %vm1111 = vcmp.lt.s32.totalorder %v989, 0
        %v1112 = vsub.s32 0, %v989
        %v1113 = vsel %vm1111, %v1112, %v989
        %v1114 = vshrl.u32 %v1113, 4
        %v1115 = vand.u32 %v1113, 15
        %v1116 = vsub.s32 0, %v1115
        %v1117 = vsel %vm1111, %v1116, %v1115
        %vm1118 = vcmp.lt.s32.totalorder %v990, 0
        %v1119 = vsub.s32 0, %v990
        %v1120 = vsel %vm1118, %v1119, %v990
        %v1121 = vshrl.u32 %v1120, 4
        %v1122 = vand.u32 %v1120, 15
        %v1123 = vsub.s32 0, %v1122
        %v1124 = vsel %vm1118, %v1123, %v1122
        %vm1125 = vcmp.lt.s32.totalorder %v991, 0
        %v1126 = vsub.s32 0, %v991
        %v1127 = vsel %vm1125, %v1126, %v991
        %v1128 = vshrl.u32 %v1127, 4
        %v1129 = vand.u32 %v1127, 15
        %v1130 = vsub.s32 0, %v1129
        %v1131 = vsel %vm1125, %v1130, %v1129
        %vm1132 = vcmp.lt.s32.totalorder %v992, 0
        %v1133 = vsub.s32 0, %v992
        %v1134 = vsel %vm1132, %v1133, %v992
        %v1135 = vshrl.u32 %v1134, 4
        %v1136 = vand.u32 %v1134, 15
        %v1137 = vsub.s32 0, %v1136
        %v1138 = vsel %vm1132, %v1137, %v1136
        %vm1139 = vcmp.lt.s32.totalorder %v993, 0
        %v1140 = vsub.s32 0, %v993
        %v1141 = vsel %vm1139, %v1140, %v993
        %v1142 = vshrl.u32 %v1141, 4
        %v1143 = vand.u32 %v1141, 15
        %v1144 = vsub.s32 0, %v1143
        %v1145 = vsel %vm1139, %v1144, %v1143
        %vm1146 = vcmp.lt.s32.totalorder %v994, 0
        %v1147 = vsub.s32 0, %v994
        %v1148 = vsel %vm1146, %v1147, %v994
        %v1149 = vshrl.u32 %v1148, 4
        %v1150 = vand.u32 %v1148, 15
        %v1151 = vsub.s32 0, %v1150
        %v1152 = vsel %vm1146, %v1151, %v1150
        %vm1153 = vcmp.lt.s32.totalorder %v995, 0
        %v1154 = vsub.s32 0, %v995
        %v1155 = vsel %vm1153, %v1154, %v995
        %v1156 = vshrl.u32 %v1155, 4
        %v1157 = vand.u32 %v1155, 15
        %v1158 = vsub.s32 0, %v1157
        %v1159 = vsel %vm1153, %v1158, %v1157
        %vm1160 = vcmp.lt.s32.totalorder %v996, 0
        %v1161 = vsub.s32 0, %v996
        %v1162 = vsel %vm1160, %v1161, %v996
        %v1163 = vshrl.u32 %v1162, 4
        %v1164 = vand.u32 %v1162, 15
        %v1165 = vsub.s32 0, %v1164
        %v1166 = vsel %vm1160, %v1165, %v1164
        %vm1167 = vcmp.lt.s32.totalorder %v997, 0
        %v1168 = vsub.s32 0, %v997
        %v1169 = vsel %vm1167, %v1168, %v997
        %v1170 = vshrl.u32 %v1169, 4
        %v1171 = vand.u32 %v1169, 15
        %v1172 = vsub.s32 0, %v1171
        %v1173 = vsel %vm1167, %v1172, %v1171
        %vm1174 = vcmp.lt.s32.totalorder %v998, 0
        %v1175 = vsub.s32 0, %v998
        %v1176 = vsel %vm1174, %v1175, %v998
        %v1177 = vshrl.u32 %v1176, 4
        %v1178 = vand.u32 %v1176, 15
        %v1179 = vsub.s32 0, %v1178
        %v1180 = vsel %vm1174, %v1179, %v1178
        %vm1181 = vcmp.lt.s32.totalorder %v999, 0
        %v1182 = vsub.s32 0, %v999
        %v1183 = vsel %vm1181, %v1182, %v999
        %v1184 = vshrl.u32 %v1183, 4
        %v1185 = vand.u32 %v1183, 15
        %v1186 = vsub.s32 0, %v1185
        %v1187 = vsel %vm1181, %v1186, %v1185
        %vm1188 = vcmp.lt.s32.totalorder %v1000, 0
        %v1189 = vsub.s32 0, %v1000
        %v1190 = vsel %vm1188, %v1189, %v1000
        %v1191 = vshrl.u32 %v1190, 4
        %v1192 = vand.u32 %v1190, 15
        %v1193 = vsub.s32 0, %v1192
        %v1194 = vsel %vm1188, %v1193, %v1192
        %vm1195 = vcmp.lt.s32.totalorder %v1001, 0
        %v1196 = vsub.s32 0, %v1001
        %v1197 = vsel %vm1195, %v1196, %v1001
        %v1198 = vshrl.u32 %v1197, 4
        %v1199 = vand.u32 %v1197, 15
        %v1200 = vsub.s32 0, %v1199
        %v1201 = vsel %vm1195, %v1200, %v1199
        %vm1202 = vcmp.lt.s32.totalorder %v1002, 0
        %v1203 = vsub.s32 0, %v1002
        %v1204 = vsel %vm1202, %v1203, %v1002
        %v1205 = vshrl.u32 %v1204, 4
        %v1206 = vand.u32 %v1204, 15
        %v1207 = vsub.s32 0, %v1206
        %v1208 = vsel %vm1202, %v1207, %v1206
        %vm1209 = vcmp.lt.s32.totalorder %v1003, 0
        %v1210 = vsub.s32 0, %v1003
        %v1211 = vsel %vm1209, %v1210, %v1003
        %v1212 = vshrl.u32 %v1211, 4
        %v1213 = vand.u32 %v1211, 15
        %v1214 = vsub.s32 0, %v1213
        %v1215 = vsel %vm1209, %v1214, %v1213
        %vm1216 = vcmp.lt.s32.totalorder %v1004, 0
        %v1217 = vsub.s32 0, %v1004
        %v1218 = vsel %vm1216, %v1217, %v1004
        %v1219 = vshrl.u32 %v1218, 4
        %v1220 = vand.u32 %v1218, 15
        %v1221 = vsub.s32 0, %v1220
        %v1222 = vsel %vm1216, %v1221, %v1220
        %vm1223 = vcmp.lt.s32.totalorder %v1005, 0
        %v1224 = vsub.s32 0, %v1005
        %v1225 = vsel %vm1223, %v1224, %v1005
        %v1226 = vshrl.u32 %v1225, 4
        %v1227 = vand.u32 %v1225, 15
        %v1228 = vsub.s32 0, %v1227
        %v1229 = vsel %vm1223, %v1228, %v1227
        %vm1230 = vcmp.ne.s32.totalorder %v1012, 0
        %vm1231 = vcmp.ne.s32.totalorder %v1019, 0
        %vm1232 = vcmp.ne.s32.totalorder %v1026, 0
        %vm1233 = vcmp.ne.s32.totalorder %v1033, 0
        %vm1234 = vcmp.ne.s32.totalorder %v1040, 0
        %vm1235 = vcmp.ne.s32.totalorder %v1047, 0
        %vm1236 = vcmp.ne.s32.totalorder %v1054, 0
        %vm1237 = vcmp.ne.s32.totalorder %v1061, 0
        %vm1238 = vcmp.ne.s32.totalorder %v1068, 0
        %vm1239 = vcmp.ne.s32.totalorder %v1075, 0
        %vm1240 = vcmp.ne.s32.totalorder %v1082, 0
        %vm1241 = vcmp.ne.s32.totalorder %v1089, 0
        %vm1242 = vcmp.ne.s32.totalorder %v1096, 0
        %vm1243 = vcmp.ne.s32.totalorder %v1103, 0
        %vm1244 = vcmp.ne.s32.totalorder %v1110, 0
        %vm1245 = vcmp.ne.s32.totalorder %v1117, 0
        %vm1246 = vcmp.ne.s32.totalorder %v1124, 0
        %vm1247 = vcmp.ne.s32.totalorder %v1131, 0
        %vm1248 = vcmp.ne.s32.totalorder %v1138, 0
        %vm1249 = vcmp.ne.s32.totalorder %v1145, 0
        %vm1250 = vcmp.ne.s32.totalorder %v1152, 0
        %vm1251 = vcmp.ne.s32.totalorder %v1159, 0
        %vm1252 = vcmp.ne.s32.totalorder %v1166, 0
        %vm1253 = vcmp.ne.s32.totalorder %v1173, 0
        %vm1254 = vcmp.ne.s32.totalorder %v1180, 0
        %vm1255 = vcmp.ne.s32.totalorder %v1187, 0
        %vm1256 = vcmp.ne.s32.totalorder %v1194, 0
        %vm1257 = vcmp.ne.s32.totalorder %v1201, 0
        %vm1258 = vcmp.ne.s32.totalorder %v1208, 0
        %vm1259 = vcmp.ne.s32.totalorder %v1215, 0
        %vm1260 = vcmp.ne.s32.totalorder %v1222, 0
        %vm1261 = vcmp.ne.s32.totalorder %v1229, 0
        %vm1262 = vcmp.lt.s32.totalorder %v1012, 0
        %vm1263 = vcmp.lt.s32.totalorder %v1019, 0
        %vm1264 = vcmp.lt.s32.totalorder %v1026, 0
        %vm1265 = vcmp.lt.s32.totalorder %v1033, 0
        %vm1266 = vcmp.lt.s32.totalorder %v1040, 0
        %vm1267 = vcmp.lt.s32.totalorder %v1047, 0
        %vm1268 = vcmp.lt.s32.totalorder %v1054, 0
        %vm1269 = vcmp.lt.s32.totalorder %v1061, 0
        %vm1270 = vcmp.lt.s32.totalorder %v1068, 0
        %vm1271 = vcmp.lt.s32.totalorder %v1075, 0
        %vm1272 = vcmp.lt.s32.totalorder %v1082, 0
        %vm1273 = vcmp.lt.s32.totalorder %v1089, 0
        %vm1274 = vcmp.lt.s32.totalorder %v1096, 0
        %vm1275 = vcmp.lt.s32.totalorder %v1103, 0
        %vm1276 = vcmp.lt.s32.totalorder %v1110, 0
        %vm1277 = vcmp.lt.s32.totalorder %v1117, 0
        %vm1278 = vcmp.lt.s32.totalorder %v1124, 0
        %vm1279 = vcmp.lt.s32.totalorder %v1131, 0
        %vm1280 = vcmp.lt.s32.totalorder %v1138, 0
        %vm1281 = vcmp.lt.s32.totalorder %v1145, 0
        %vm1282 = vcmp.lt.s32.totalorder %v1152, 0
        %vm1283 = vcmp.lt.s32.totalorder %v1159, 0
        %vm1284 = vcmp.lt.s32.totalorder %v1166, 0
        %vm1285 = vcmp.lt.s32.totalorder %v1173, 0
        %vm1286 = vcmp.lt.s32.totalorder %v1180, 0
        %vm1287 = vcmp.lt.s32.totalorder %v1187, 0
        %vm1288 = vcmp.lt.s32.totalorder %v1194, 0
        %vm1289 = vcmp.lt.s32.totalorder %v1201, 0
        %vm1290 = vcmp.lt.s32.totalorder %v1208, 0
        %vm1291 = vcmp.lt.s32.totalorder %v1215, 0
        %vm1292 = vcmp.lt.s32.totalorder %v1222, 0
        %vm1293 = vcmp.lt.s32.totalorder %v1229, 0
        %vm1294 = vmand %vm1262, %vm1230
        %vm1295 = vmand %vm1263, %vm1231
        %vm1296 = vmand %vm1264, %vm1232
        %vm1297 = vmand %vm1265, %vm1233
        %vm1298 = vmand %vm1266, %vm1234
        %vm1299 = vmand %vm1267, %vm1235
        %vm1300 = vmand %vm1268, %vm1236
        %vm1301 = vmand %vm1269, %vm1237
        %vm1302 = vmand %vm1270, %vm1238
        %vm1303 = vmand %vm1271, %vm1239
        %vm1304 = vmand %vm1272, %vm1240
        %vm1305 = vmand %vm1273, %vm1241
        %vm1306 = vmand %vm1274, %vm1242
        %vm1307 = vmand %vm1275, %vm1243
        %vm1308 = vmand %vm1276, %vm1244
        %vm1309 = vmand %vm1277, %vm1245
        %vm1310 = vmand %vm1278, %vm1246
        %vm1311 = vmand %vm1279, %vm1247
        %vm1312 = vmand %vm1280, %vm1248
        %vm1313 = vmand %vm1281, %vm1249
        %vm1314 = vmand %vm1282, %vm1250
        %vm1315 = vmand %vm1283, %vm1251
        %vm1316 = vmand %vm1284, %vm1252
        %vm1317 = vmand %vm1285, %vm1253
        %vm1318 = vmand %vm1286, %vm1254
        %vm1319 = vmand %vm1287, %vm1255
        %vm1320 = vmand %vm1288, %vm1256
        %vm1321 = vmand %vm1289, %vm1257
        %vm1322 = vmand %vm1290, %vm1258
        %vm1323 = vmand %vm1291, %vm1259
        %vm1324 = vmand %vm1292, %vm1260
        %vm1325 = vmand %vm1293, %vm1261
        %v1326 = vadd.s32 %v1012, 16
        %v1327 = vadd.s32 %v1019, 16
        %v1328 = vadd.s32 %v1026, 16
        %v1329 = vadd.s32 %v1033, 16
        %v1330 = vadd.s32 %v1040, 16
        %v1331 = vadd.s32 %v1047, 16
        %v1332 = vadd.s32 %v1054, 16
        %v1333 = vadd.s32 %v1061, 16
        %v1334 = vadd.s32 %v1068, 16
        %v1335 = vadd.s32 %v1075, 16
        %v1336 = vadd.s32 %v1082, 16
        %v1337 = vadd.s32 %v1089, 16
        %v1338 = vadd.s32 %v1096, 16
        %v1339 = vadd.s32 %v1103, 16
        %v1340 = vadd.s32 %v1110, 16
        %v1341 = vadd.s32 %v1117, 16
        %v1342 = vadd.s32 %v1124, 16
        %v1343 = vadd.s32 %v1131, 16
        %v1344 = vadd.s32 %v1138, 16
        %v1345 = vadd.s32 %v1145, 16
        %v1346 = vadd.s32 %v1152, 16
        %v1347 = vadd.s32 %v1159, 16
        %v1348 = vadd.s32 %v1166, 16
        %v1349 = vadd.s32 %v1173, 16
        %v1350 = vadd.s32 %v1180, 16
        %v1351 = vadd.s32 %v1187, 16
        %v1352 = vadd.s32 %v1194, 16
        %v1353 = vadd.s32 %v1201, 16
        %v1354 = vadd.s32 %v1208, 16
        %v1355 = vadd.s32 %v1215, 16
        %v1356 = vadd.s32 %v1222, 16
        %v1357 = vadd.s32 %v1229, 16
        %v1358 = vsel %vm1294, %v1326, %v1012
        %v1359 = vsel %vm1295, %v1327, %v1019
        %v1360 = vsel %vm1296, %v1328, %v1026
        %v1361 = vsel %vm1297, %v1329, %v1033
        %v1362 = vsel %vm1298, %v1330, %v1040
        %v1363 = vsel %vm1299, %v1331, %v1047
        %v1364 = vsel %vm1300, %v1332, %v1054
        %v1365 = vsel %vm1301, %v1333, %v1061
        %v1366 = vsel %vm1302, %v1334, %v1068
        %v1367 = vsel %vm1303, %v1335, %v1075
        %v1368 = vsel %vm1304, %v1336, %v1082
        %v1369 = vsel %vm1305, %v1337, %v1089
        %v1370 = vsel %vm1306, %v1338, %v1096
        %v1371 = vsel %vm1307, %v1339, %v1103
        %v1372 = vsel %vm1308, %v1340, %v1110
        %v1373 = vsel %vm1309, %v1341, %v1117
        %v1374 = vsel %vm1310, %v1342, %v1124
        %v1375 = vsel %vm1311, %v1343, %v1131
        %v1376 = vsel %vm1312, %v1344, %v1138
        %v1377 = vsel %vm1313, %v1345, %v1145
        %v1378 = vsel %vm1314, %v1346, %v1152
        %v1379 = vsel %vm1315, %v1347, %v1159
        %v1380 = vsel %vm1316, %v1348, %v1166
        %v1381 = vsel %vm1317, %v1349, %v1173
        %v1382 = vsel %vm1318, %v1350, %v1180
        %v1383 = vsel %vm1319, %v1351, %v1187
        %v1384 = vsel %vm1320, %v1352, %v1194
        %v1385 = vsel %vm1321, %v1353, %v1201
        %v1386 = vsel %vm1322, %v1354, %v1208
        %v1387 = vsel %vm1323, %v1355, %v1215
        %v1388 = vsel %vm1324, %v1356, %v1222
        %v1389 = vsel %vm1325, %v1357, %v1229
        %vm1390 = vcmp.ne.s32.totalorder %v1358, 15
        %vm1391 = vcmp.ne.s32.totalorder %v1359, 15
        %vm1392 = vcmp.ne.s32.totalorder %v1360, 15
        %vm1393 = vcmp.ne.s32.totalorder %v1361, 15
        %vm1394 = vcmp.ne.s32.totalorder %v1362, 15
        %vm1395 = vcmp.ne.s32.totalorder %v1363, 15
        %vm1396 = vcmp.ne.s32.totalorder %v1364, 15
        %vm1397 = vcmp.ne.s32.totalorder %v1365, 15
        %vm1398 = vcmp.ne.s32.totalorder %v1366, 15
        %vm1399 = vcmp.ne.s32.totalorder %v1367, 15
        %vm1400 = vcmp.ne.s32.totalorder %v1368, 15
        %vm1401 = vcmp.ne.s32.totalorder %v1369, 15
        %vm1402 = vcmp.ne.s32.totalorder %v1370, 15
        %vm1403 = vcmp.ne.s32.totalorder %v1371, 15
        %vm1404 = vcmp.ne.s32.totalorder %v1372, 15
        %vm1405 = vcmp.ne.s32.totalorder %v1373, 15
        %vm1406 = vcmp.ne.s32.totalorder %v1374, 15
        %vm1407 = vcmp.ne.s32.totalorder %v1375, 15
        %vm1408 = vcmp.ne.s32.totalorder %v1376, 15
        %vm1409 = vcmp.ne.s32.totalorder %v1377, 15
        %vm1410 = vcmp.ne.s32.totalorder %v1378, 15
        %vm1411 = vcmp.ne.s32.totalorder %v1379, 15
        %vm1412 = vcmp.ne.s32.totalorder %v1380, 15
        %vm1413 = vcmp.ne.s32.totalorder %v1381, 15
        %vm1414 = vcmp.ne.s32.totalorder %v1382, 15
        %vm1415 = vcmp.ne.s32.totalorder %v1383, 15
        %vm1416 = vcmp.ne.s32.totalorder %v1384, 15
        %vm1417 = vcmp.ne.s32.totalorder %v1385, 15
        %vm1418 = vcmp.ne.s32.totalorder %v1386, 15
        %vm1419 = vcmp.ne.s32.totalorder %v1387, 15
        %vm1420 = vcmp.ne.s32.totalorder %v1388, 15
        %vm1421 = vcmp.ne.s32.totalorder %v1389, 15
        %v1422 = vsel %vm1390, 1, 0
        %v1423 = vsel %vm1391, 1, 0
        %v1424 = vsel %vm1392, 1, 0
        %v1425 = vsel %vm1393, 1, 0
        %v1426 = vsel %vm1394, 1, 0
        %v1427 = vsel %vm1395, 1, 0
        %v1428 = vsel %vm1396, 1, 0
        %v1429 = vsel %vm1397, 1, 0
        %v1430 = vsel %vm1398, 1, 0
        %v1431 = vsel %vm1399, 1, 0
        %v1432 = vsel %vm1400, 1, 0
        %v1433 = vsel %vm1401, 1, 0
        %v1434 = vsel %vm1402, 1, 0
        %v1435 = vsel %vm1403, 1, 0
        %v1436 = vsel %vm1404, 1, 0
        %v1437 = vsel %vm1405, 1, 0
        %v1438 = vsel %vm1406, 1, 0
        %v1439 = vsel %vm1407, 1, 0
        %v1440 = vsel %vm1408, 1, 0
        %v1441 = vsel %vm1409, 1, 0
        %v1442 = vsel %vm1410, 1, 0
        %v1443 = vsel %vm1411, 1, 0
        %v1444 = vsel %vm1412, 1, 0
        %v1445 = vsel %vm1413, 1, 0
        %v1446 = vsel %vm1414, 1, 0
        %v1447 = vsel %vm1415, 1, 0
        %v1448 = vsel %vm1416, 1, 0
        %v1449 = vsel %vm1417, 1, 0
        %v1450 = vsel %vm1418, 1, 0
        %v1451 = vsel %vm1419, 1, 0
        %v1452 = vsel %vm1420, 1, 0
        %v1453 = vsel %vm1421, 1, 0
        %vm1454 = vcmp.eq.s32.totalorder %v1422, 1
        %vm1455 = vcmp.eq.s32.totalorder %v1423, 1
        %vm1456 = vcmp.eq.s32.totalorder %v1424, 1
        %vm1457 = vcmp.eq.s32.totalorder %v1425, 1
        %vm1458 = vcmp.eq.s32.totalorder %v1426, 1
        %vm1459 = vcmp.eq.s32.totalorder %v1427, 1
        %vm1460 = vcmp.eq.s32.totalorder %v1428, 1
        %vm1461 = vcmp.eq.s32.totalorder %v1429, 1
        %vm1462 = vcmp.eq.s32.totalorder %v1430, 1
        %vm1463 = vcmp.eq.s32.totalorder %v1431, 1
        %vm1464 = vcmp.eq.s32.totalorder %v1432, 1
        %vm1465 = vcmp.eq.s32.totalorder %v1433, 1
        %vm1466 = vcmp.eq.s32.totalorder %v1434, 1
        %vm1467 = vcmp.eq.s32.totalorder %v1435, 1
        %vm1468 = vcmp.eq.s32.totalorder %v1436, 1
        %vm1469 = vcmp.eq.s32.totalorder %v1437, 1
        %vm1470 = vcmp.eq.s32.totalorder %v1438, 1
        %vm1471 = vcmp.eq.s32.totalorder %v1439, 1
        %vm1472 = vcmp.eq.s32.totalorder %v1440, 1
        %vm1473 = vcmp.eq.s32.totalorder %v1441, 1
        %vm1474 = vcmp.eq.s32.totalorder %v1442, 1
        %vm1475 = vcmp.eq.s32.totalorder %v1443, 1
        %vm1476 = vcmp.eq.s32.totalorder %v1444, 1
        %vm1477 = vcmp.eq.s32.totalorder %v1445, 1
        %vm1478 = vcmp.eq.s32.totalorder %v1446, 1
        %vm1479 = vcmp.eq.s32.totalorder %v1447, 1
        %vm1480 = vcmp.eq.s32.totalorder %v1448, 1
        %vm1481 = vcmp.eq.s32.totalorder %v1449, 1
        %vm1482 = vcmp.eq.s32.totalorder %v1450, 1
        %vm1483 = vcmp.eq.s32.totalorder %v1451, 1
        %vm1484 = vcmp.eq.s32.totalorder %v1452, 1
        %vm1485 = vcmp.eq.s32.totalorder %v1453, 1
        %v1486 = vsel %vm1454, %v941, 0.0
        %v1487 = vsel %vm1455, %v942, 0.0
        %v1488 = vsel %vm1456, %v943, 0.0
        %v1489 = vsel %vm1457, %v944, 0.0
        %v1490 = vsel %vm1458, %v945, 0.0
        %v1491 = vsel %vm1459, %v946, 0.0
        %v1492 = vsel %vm1460, %v947, 0.0
        %v1493 = vsel %vm1461, %v948, 0.0
        %v1494 = vsel %vm1462, %v949, 0.0
        %v1495 = vsel %vm1463, %v950, 0.0
        %v1496 = vsel %vm1464, %v951, 0.0
        %v1497 = vsel %vm1465, %v952, 0.0
        %v1498 = vsel %vm1466, %v953, 0.0
        %v1499 = vsel %vm1467, %v954, 0.0
        %v1500 = vsel %vm1468, %v955, 0.0
        %v1501 = vsel %vm1469, %v956, 0.0
        %v1502 = vsel %vm1470, %v957, 0.0
        %v1503 = vsel %vm1471, %v958, 0.0
        %v1504 = vsel %vm1472, %v959, 0.0
        %v1505 = vsel %vm1473, %v960, 0.0
        %v1506 = vsel %vm1474, %v961, 0.0
        %v1507 = vsel %vm1475, %v962, 0.0
        %v1508 = vsel %vm1476, %v963, 0.0
        %v1509 = vsel %vm1477, %v964, 0.0
        %v1510 = vsel %vm1478, %v965, 0.0
        %v1511 = vsel %vm1479, %v966, 0.0
        %v1512 = vsel %vm1480, %v967, 0.0
        %v1513 = vsel %vm1481, %v968, 0.0
        %v1514 = vsel %vm1482, %v969, 0.0
        %v1515 = vsel %vm1483, %v970, 0.0
        %v1516 = vsel %vm1484, %v971, 0.0
        %v1517 = vsel %vm1485, %v972, 0.0
        %vm1518 = vcmp.ne.s32.totalorder %v1358, 0
        %vm1519 = vcmp.ne.s32.totalorder %v1359, 0
        %vm1520 = vcmp.ne.s32.totalorder %v1360, 0
        %vm1521 = vcmp.ne.s32.totalorder %v1361, 0
        %vm1522 = vcmp.ne.s32.totalorder %v1362, 0
        %vm1523 = vcmp.ne.s32.totalorder %v1363, 0
        %vm1524 = vcmp.ne.s32.totalorder %v1364, 0
        %vm1525 = vcmp.ne.s32.totalorder %v1365, 0
        %vm1526 = vcmp.ne.s32.totalorder %v1366, 0
        %vm1527 = vcmp.ne.s32.totalorder %v1367, 0
        %vm1528 = vcmp.ne.s32.totalorder %v1368, 0
        %vm1529 = vcmp.ne.s32.totalorder %v1369, 0
        %vm1530 = vcmp.ne.s32.totalorder %v1370, 0
        %vm1531 = vcmp.ne.s32.totalorder %v1371, 0
        %vm1532 = vcmp.ne.s32.totalorder %v1372, 0
        %vm1533 = vcmp.ne.s32.totalorder %v1373, 0
        %vm1534 = vcmp.ne.s32.totalorder %v1374, 0
        %vm1535 = vcmp.ne.s32.totalorder %v1375, 0
        %vm1536 = vcmp.ne.s32.totalorder %v1376, 0
        %vm1537 = vcmp.ne.s32.totalorder %v1377, 0
        %vm1538 = vcmp.ne.s32.totalorder %v1378, 0
        %vm1539 = vcmp.ne.s32.totalorder %v1379, 0
        %vm1540 = vcmp.ne.s32.totalorder %v1380, 0
        %vm1541 = vcmp.ne.s32.totalorder %v1381, 0
        %vm1542 = vcmp.ne.s32.totalorder %v1382, 0
        %vm1543 = vcmp.ne.s32.totalorder %v1383, 0
        %vm1544 = vcmp.ne.s32.totalorder %v1384, 0
        %vm1545 = vcmp.ne.s32.totalorder %v1385, 0
        %vm1546 = vcmp.ne.s32.totalorder %v1386, 0
        %vm1547 = vcmp.ne.s32.totalorder %v1387, 0
        %vm1548 = vcmp.ne.s32.totalorder %v1388, 0
        %vm1549 = vcmp.ne.s32.totalorder %v1389, 0
        %v1550 = vsel %vm1518, 1, 0
        %v1551 = vsel %vm1519, 1, 0
        %v1552 = vsel %vm1520, 1, 0
        %v1553 = vsel %vm1521, 1, 0
        %v1554 = vsel %vm1522, 1, 0
        %v1555 = vsel %vm1523, 1, 0
        %v1556 = vsel %vm1524, 1, 0
        %v1557 = vsel %vm1525, 1, 0
        %v1558 = vsel %vm1526, 1, 0
        %v1559 = vsel %vm1527, 1, 0
        %v1560 = vsel %vm1528, 1, 0
        %v1561 = vsel %vm1529, 1, 0
        %v1562 = vsel %vm1530, 1, 0
        %v1563 = vsel %vm1531, 1, 0
        %v1564 = vsel %vm1532, 1, 0
        %v1565 = vsel %vm1533, 1, 0
        %v1566 = vsel %vm1534, 1, 0
        %v1567 = vsel %vm1535, 1, 0
        %v1568 = vsel %vm1536, 1, 0
        %v1569 = vsel %vm1537, 1, 0
        %v1570 = vsel %vm1538, 1, 0
        %v1571 = vsel %vm1539, 1, 0
        %v1572 = vsel %vm1540, 1, 0
        %v1573 = vsel %vm1541, 1, 0
        %v1574 = vsel %vm1542, 1, 0
        %v1575 = vsel %vm1543, 1, 0
        %v1576 = vsel %vm1544, 1, 0
        %v1577 = vsel %vm1545, 1, 0
        %v1578 = vsel %vm1546, 1, 0
        %v1579 = vsel %vm1547, 1, 0
        %v1580 = vsel %vm1548, 1, 0
        %v1581 = vsel %vm1549, 1, 0
        %vm1582 = vcmp.eq.s32.totalorder %v1550, 1
        %vm1583 = vcmp.eq.s32.totalorder %v1551, 1
        %vm1584 = vcmp.eq.s32.totalorder %v1552, 1
        %vm1585 = vcmp.eq.s32.totalorder %v1553, 1
        %vm1586 = vcmp.eq.s32.totalorder %v1554, 1
        %vm1587 = vcmp.eq.s32.totalorder %v1555, 1
        %vm1588 = vcmp.eq.s32.totalorder %v1556, 1
        %vm1589 = vcmp.eq.s32.totalorder %v1557, 1
        %vm1590 = vcmp.eq.s32.totalorder %v1558, 1
        %vm1591 = vcmp.eq.s32.totalorder %v1559, 1
        %vm1592 = vcmp.eq.s32.totalorder %v1560, 1
        %vm1593 = vcmp.eq.s32.totalorder %v1561, 1
        %vm1594 = vcmp.eq.s32.totalorder %v1562, 1
        %vm1595 = vcmp.eq.s32.totalorder %v1563, 1
        %vm1596 = vcmp.eq.s32.totalorder %v1564, 1
        %vm1597 = vcmp.eq.s32.totalorder %v1565, 1
        %vm1598 = vcmp.eq.s32.totalorder %v1566, 1
        %vm1599 = vcmp.eq.s32.totalorder %v1567, 1
        %vm1600 = vcmp.eq.s32.totalorder %v1568, 1
        %vm1601 = vcmp.eq.s32.totalorder %v1569, 1
        %vm1602 = vcmp.eq.s32.totalorder %v1570, 1
        %vm1603 = vcmp.eq.s32.totalorder %v1571, 1
        %vm1604 = vcmp.eq.s32.totalorder %v1572, 1
        %vm1605 = vcmp.eq.s32.totalorder %v1573, 1
        %vm1606 = vcmp.eq.s32.totalorder %v1574, 1
        %vm1607 = vcmp.eq.s32.totalorder %v1575, 1
        %vm1608 = vcmp.eq.s32.totalorder %v1576, 1
        %vm1609 = vcmp.eq.s32.totalorder %v1577, 1
        %vm1610 = vcmp.eq.s32.totalorder %v1578, 1
        %vm1611 = vcmp.eq.s32.totalorder %v1579, 1
        %vm1612 = vcmp.eq.s32.totalorder %v1580, 1
        %vm1613 = vcmp.eq.s32.totalorder %v1581, 1
        %v1614 = vsel %vm1582, %v941, 0.0
        %v1615 = vsel %vm1583, %v942, 0.0
        %v1616 = vsel %vm1584, %v943, 0.0
        %v1617 = vsel %vm1585, %v944, 0.0
        %v1618 = vsel %vm1586, %v945, 0.0
        %v1619 = vsel %vm1587, %v946, 0.0
        %v1620 = vsel %vm1588, %v947, 0.0
        %v1621 = vsel %vm1589, %v948, 0.0
        %v1622 = vsel %vm1590, %v949, 0.0
        %v1623 = vsel %vm1591, %v950, 0.0
        %v1624 = vsel %vm1592, %v951, 0.0
        %v1625 = vsel %vm1593, %v952, 0.0
        %v1626 = vsel %vm1594, %v953, 0.0
        %v1627 = vsel %vm1595, %v954, 0.0
        %v1628 = vsel %vm1596, %v955, 0.0
        %v1629 = vsel %vm1597, %v956, 0.0
        %v1630 = vsel %vm1598, %v957, 0.0
        %v1631 = vsel %vm1599, %v958, 0.0
        %v1632 = vsel %vm1600, %v959, 0.0
        %v1633 = vsel %vm1601, %v960, 0.0
        %v1634 = vsel %vm1602, %v961, 0.0
        %v1635 = vsel %vm1603, %v962, 0.0
        %v1636 = vsel %vm1604, %v963, 0.0
        %v1637 = vsel %vm1605, %v964, 0.0
        %v1638 = vsel %vm1606, %v965, 0.0
        %v1639 = vsel %vm1607, %v966, 0.0
        %v1640 = vsel %vm1608, %v967, 0.0
        %v1641 = vsel %vm1609, %v968, 0.0
        %v1642 = vsel %vm1610, %v969, 0.0
        %v1643 = vsel %vm1611, %v970, 0.0
        %v1644 = vsel %vm1612, %v971, 0.0
        %v1645 = vsel %vm1613, %v972, 0.0
        %vm1678 = vcmask 1040384
        %v1679 = vrot.slane %v1486, 7
        %v1680 = vrot.slane %v1487, 7
        %v1681 = vsel %vm1678, %v1679, %v1680
        %v1682 = vrot.slane %v1488, 7
        %v1683 = vsel %vm1678, %v1680, %v1682
        %v1684 = vrot.slane %v1489, 7
        %v1685 = vsel %vm1678, %v1682, %v1684
        %v1686 = vrot.slane %v1490, 7
        %v1687 = vsel %vm1678, %v1684, %v1686
        %v1688 = vrot.slane %v1491, 7
        %v1689 = vsel %vm1678, %v1686, %v1688
        %v1690 = vrot.slane %v1492, 7
        %v1691 = vsel %vm1678, %v1688, %v1690
        %v1692 = vrot.slane %v1493, 7
        %v1693 = vsel %vm1678, %v1690, %v1692
        %v1694 = vrot.slane %v1494, 7
        %v1695 = vsel %vm1678, %v1692, %v1694
        %v1696 = vrot.slane %v1495, 7
        %v1697 = vsel %vm1678, %v1694, %v1696
        %v1698 = vrot.slane %v1496, 7
        %v1699 = vsel %vm1678, %v1696, %v1698
        %v1700 = vrot.slane %v1497, 7
        %v1701 = vsel %vm1678, %v1698, %v1700
        %v1702 = vrot.slane %v1498, 7
        %v1703 = vsel %vm1678, %v1700, %v1702
        %v1704 = vrot.slane %v1499, 7
        %v1705 = vsel %vm1678, %v1702, %v1704
        %v1706 = vrot.slane %v1500, 7
        %v1707 = vsel %vm1678, %v1704, %v1706
        %v1708 = vrot.slane %v1501, 7
        %v1709 = vsel %vm1678, %v1706, %v1708
        %v1710 = vrot.slane %v1502, 7
        %v1711 = vsel %vm1678, %v1708, %v1710
        %v1712 = vrot.slane %v1503, 7
        %v1713 = vsel %vm1678, %v1710, %v1712
        %v1714 = vrot.slane %v1504, 7
        %v1715 = vsel %vm1678, %v1712, %v1714
        %v1716 = vrot.slane %v1505, 7
        %v1717 = vsel %vm1678, %v1714, %v1716
        %v1718 = vrot.slane %v1506, 7
        %v1719 = vsel %vm1678, %v1716, %v1718
        %v1720 = vrot.slane %v1507, 7
        %v1721 = vsel %vm1678, %v1718, %v1720
        %v1722 = vrot.slane %v1508, 7
        %v1723 = vsel %vm1678, %v1720, %v1722
        %v1724 = vrot.slane %v1509, 7
        %v1725 = vsel %vm1678, %v1722, %v1724
        %v1726 = vrot.slane %v1510, 7
        %v1727 = vsel %vm1678, %v1724, %v1726
        %v1728 = vrot.slane %v1511, 7
        %v1729 = vsel %vm1678, %v1726, %v1728
        %v1730 = vrot.slane %v1512, 7
        %v1731 = vsel %vm1678, %v1728, %v1730
        %v1732 = vrot.slane %v1513, 7
        %v1733 = vsel %vm1678, %v1730, %v1732
        %v1734 = vrot.slane %v1514, 7
        %v1735 = vsel %vm1678, %v1732, %v1734
        %v1736 = vrot.slane %v1515, 7
        %v1737 = vsel %vm1678, %v1734, %v1736
        %v1738 = vrot.slane %v1516, 7
        %v1739 = vsel %vm1678, %v1736, %v1738
        %v1740 = vrot.slane %v1517, 7
        %v1741 = vsel %vm1678, %v1738, %v1740
        %v1774 = vsel %vm1678, 0.0, %v1679
        %vm1807 = vcmask 1046528
        %v1808 = vrot.slane %v1614, 1
        %v1809 = vrot.slane %v1615, 1
        %v1810 = vsel %vm1807, %v1808, %v1809
        %v1811 = vrot.slane %v1616, 1
        %v1812 = vsel %vm1807, %v1809, %v1811
        %v1813 = vrot.slane %v1617, 1
        %v1814 = vsel %vm1807, %v1811, %v1813
        %v1815 = vrot.slane %v1618, 1
        %v1816 = vsel %vm1807, %v1813, %v1815
        %v1817 = vrot.slane %v1619, 1
        %v1818 = vsel %vm1807, %v1815, %v1817
        %v1819 = vrot.slane %v1620, 1
        %v1820 = vsel %vm1807, %v1817, %v1819
        %v1821 = vrot.slane %v1621, 1
        %v1822 = vsel %vm1807, %v1819, %v1821
        %v1823 = vrot.slane %v1622, 1
        %v1824 = vsel %vm1807, %v1821, %v1823
        %v1825 = vrot.slane %v1623, 1
        %v1826 = vsel %vm1807, %v1823, %v1825
        %v1827 = vrot.slane %v1624, 1
        %v1828 = vsel %vm1807, %v1825, %v1827
        %v1829 = vrot.slane %v1625, 1
        %v1830 = vsel %vm1807, %v1827, %v1829
        %v1831 = vrot.slane %v1626, 1
        %v1832 = vsel %vm1807, %v1829, %v1831
        %v1833 = vrot.slane %v1627, 1
        %v1834 = vsel %vm1807, %v1831, %v1833
        %v1835 = vrot.slane %v1628, 1
        %v1836 = vsel %vm1807, %v1833, %v1835
        %v1837 = vrot.slane %v1629, 1
        %v1838 = vsel %vm1807, %v1835, %v1837
        %v1839 = vrot.slane %v1630, 1
        %v1840 = vsel %vm1807, %v1837, %v1839
        %v1841 = vrot.slane %v1631, 1
        %v1842 = vsel %vm1807, %v1839, %v1841
        %v1843 = vrot.slane %v1632, 1
        %v1844 = vsel %vm1807, %v1841, %v1843
        %v1845 = vrot.slane %v1633, 1
        %v1846 = vsel %vm1807, %v1843, %v1845
        %v1847 = vrot.slane %v1634, 1
        %v1848 = vsel %vm1807, %v1845, %v1847
        %v1849 = vrot.slane %v1635, 1
        %v1850 = vsel %vm1807, %v1847, %v1849
        %v1851 = vrot.slane %v1636, 1
        %v1852 = vsel %vm1807, %v1849, %v1851
        %v1853 = vrot.slane %v1637, 1
        %v1854 = vsel %vm1807, %v1851, %v1853
        %v1855 = vrot.slane %v1638, 1
        %v1856 = vsel %vm1807, %v1853, %v1855
        %v1857 = vrot.slane %v1639, 1
        %v1858 = vsel %vm1807, %v1855, %v1857
        %v1859 = vrot.slane %v1640, 1
        %v1860 = vsel %vm1807, %v1857, %v1859
        %v1861 = vrot.slane %v1641, 1
        %v1862 = vsel %vm1807, %v1859, %v1861
        %v1863 = vrot.slane %v1642, 1
        %v1864 = vsel %vm1807, %v1861, %v1863
        %v1865 = vrot.slane %v1643, 1
        %v1866 = vsel %vm1807, %v1863, %v1865
        %v1867 = vrot.slane %v1644, 1
        %v1868 = vsel %vm1807, %v1865, %v1867
        %v1869 = vrot.slane %v1645, 1
        %v1870 = vsel %vm1807, %v1867, %v1869
        %v1903 = vsel %vm1807, %v1869, 0.0
        %v1904 = vpack.c.bf16 %v1681, %v1774
        %v1905 = vpack.c.bf16 %v942, %v941
        %v1906 = vpack.c.bf16 %v1812, %v1810
        %v1907 = vpack.c.bf16 %v1685, %v1683
        %v1908 = vpack.c.bf16 %v944, %v943
        %v1909 = vpack.c.bf16 %v1816, %v1814
        %v1910 = vpack.c.bf16 %v1689, %v1687
        %v1911 = vpack.c.bf16 %v946, %v945
        %v1912 = vpack.c.bf16 %v1820, %v1818
        %v1913 = vpack.c.bf16 %v1693, %v1691
        %v1914 = vpack.c.bf16 %v948, %v947
        %v1915 = vpack.c.bf16 %v1824, %v1822
        %v1916 = vpack.c.bf16 %v1697, %v1695
        %v1917 = vpack.c.bf16 %v950, %v949
        %v1918 = vpack.c.bf16 %v1828, %v1826
        %v1919 = vpack.c.bf16 %v1701, %v1699
        %v1920 = vpack.c.bf16 %v952, %v951
        %v1921 = vpack.c.bf16 %v1832, %v1830
        %v1922 = vpack.c.bf16 %v1705, %v1703
        %v1923 = vpack.c.bf16 %v954, %v953
        %v1924 = vpack.c.bf16 %v1836, %v1834
        %v1925 = vpack.c.bf16 %v1709, %v1707
        %v1926 = vpack.c.bf16 %v956, %v955
        %v1927 = vpack.c.bf16 %v1840, %v1838
        %v1928 = vpack.c.bf16 %v1713, %v1711
        %v1929 = vpack.c.bf16 %v958, %v957
        %v1930 = vpack.c.bf16 %v1844, %v1842
        %v1931 = vpack.c.bf16 %v1717, %v1715
        %v1932 = vpack.c.bf16 %v960, %v959
        %v1933 = vpack.c.bf16 %v1848, %v1846
        %v1934 = vpack.c.bf16 %v1721, %v1719
        %v1935 = vpack.c.bf16 %v962, %v961
        %v1936 = vpack.c.bf16 %v1852, %v1850
        %v1937 = vpack.c.bf16 %v1725, %v1723
        %v1938 = vpack.c.bf16 %v964, %v963
        %v1939 = vpack.c.bf16 %v1856, %v1854
        %v1940 = vpack.c.bf16 %v1729, %v1727
        %v1941 = vpack.c.bf16 %v966, %v965
        %v1942 = vpack.c.bf16 %v1860, %v1858
        %v1943 = vpack.c.bf16 %v1733, %v1731
        %v1944 = vpack.c.bf16 %v968, %v967
        %v1945 = vpack.c.bf16 %v1864, %v1862
        %v1946 = vpack.c.bf16 %v1737, %v1735
        %v1947 = vpack.c.bf16 %v970, %v969
        %v1948 = vpack.c.bf16 %v1868, %v1866
        %v1949 = vpack.c.bf16 %v1741, %v1739
        %v1950 = vpack.c.bf16 %v972, %v971
        %v1951 = vpack.c.bf16 %v1903, %v1870
        %v2000 = vunpack.c.l.b16 %v1904
        %v2001 = vunpack.c.l.b16 %v1905
        %v2002 = vunpack.c.l.b16 %v1906
        %v2003 = vunpack.c.h.b16 %v1904
        %v2004 = vunpack.c.h.b16 %v1905
        %v2005 = vunpack.c.h.b16 %v1906
        %v2006 = vunpack.c.l.b16 %v1907
        %v2007 = vunpack.c.l.b16 %v1908
        %v2008 = vunpack.c.l.b16 %v1909
        %v2009 = vunpack.c.h.b16 %v1907
        %v2010 = vunpack.c.h.b16 %v1908
        %v2011 = vunpack.c.h.b16 %v1909
        %v2012 = vunpack.c.l.b16 %v1910
        %v2013 = vunpack.c.l.b16 %v1911
        %v2014 = vunpack.c.l.b16 %v1912
        %v2015 = vunpack.c.h.b16 %v1910
        %v2016 = vunpack.c.h.b16 %v1911
        %v2017 = vunpack.c.h.b16 %v1912
        %v2018 = vunpack.c.l.b16 %v1913
        %v2019 = vunpack.c.l.b16 %v1914
        %v2020 = vunpack.c.l.b16 %v1915
        %v2021 = vunpack.c.h.b16 %v1913
        %v2022 = vunpack.c.h.b16 %v1914
        %v2023 = vunpack.c.h.b16 %v1915
        %v2024 = vunpack.c.l.b16 %v1916
        %v2025 = vunpack.c.l.b16 %v1917
        %v2026 = vunpack.c.l.b16 %v1918
        %v2027 = vunpack.c.h.b16 %v1916
        %v2028 = vunpack.c.h.b16 %v1917
        %v2029 = vunpack.c.h.b16 %v1918
        %v2030 = vunpack.c.l.b16 %v1919
        %v2031 = vunpack.c.l.b16 %v1920
        %v2032 = vunpack.c.l.b16 %v1921
        %v2033 = vunpack.c.h.b16 %v1919
        %v2034 = vunpack.c.h.b16 %v1920
        %v2035 = vunpack.c.h.b16 %v1921
        %v2036 = vunpack.c.l.b16 %v1922
        %v2037 = vunpack.c.l.b16 %v1923
        %v2038 = vunpack.c.l.b16 %v1924
        %v2039 = vunpack.c.h.b16 %v1922
        %v2040 = vunpack.c.h.b16 %v1923
        %v2041 = vunpack.c.h.b16 %v1924
        %v2042 = vunpack.c.l.b16 %v1925
        %v2043 = vunpack.c.l.b16 %v1926
        %v2044 = vunpack.c.l.b16 %v1927
        %v2045 = vunpack.c.h.b16 %v1925
        %v2046 = vunpack.c.h.b16 %v1926
        %v2047 = vunpack.c.h.b16 %v1927
        %v2048 = vunpack.c.l.b16 %v1928
        %v2049 = vunpack.c.l.b16 %v1929
        %v2050 = vunpack.c.l.b16 %v1930
        %v2051 = vunpack.c.h.b16 %v1928
        %v2052 = vunpack.c.h.b16 %v1929
        %v2053 = vunpack.c.h.b16 %v1930
        %v2054 = vunpack.c.l.b16 %v1931
        %v2055 = vunpack.c.l.b16 %v1932
        %v2056 = vunpack.c.l.b16 %v1933
        %v2057 = vunpack.c.h.b16 %v1931
        %v2058 = vunpack.c.h.b16 %v1932
        %v2059 = vunpack.c.h.b16 %v1933
        %v2060 = vunpack.c.l.b16 %v1934
        %v2061 = vunpack.c.l.b16 %v1935
        %v2062 = vunpack.c.l.b16 %v1936
        %v2063 = vunpack.c.h.b16 %v1934
        %v2064 = vunpack.c.h.b16 %v1935
        %v2065 = vunpack.c.h.b16 %v1936
        %v2066 = vunpack.c.l.b16 %v1937
        %v2067 = vunpack.c.l.b16 %v1938
        %v2068 = vunpack.c.l.b16 %v1939
        %v2069 = vunpack.c.h.b16 %v1937
        %v2070 = vunpack.c.h.b16 %v1938
        %v2071 = vunpack.c.h.b16 %v1939
        %v2072 = vunpack.c.l.b16 %v1940
        %v2073 = vunpack.c.l.b16 %v1941
        %v2074 = vunpack.c.l.b16 %v1942
        %v2075 = vunpack.c.h.b16 %v1940
        %v2076 = vunpack.c.h.b16 %v1941
        %v2077 = vunpack.c.h.b16 %v1942
        %v2078 = vunpack.c.l.b16 %v1943
        %v2079 = vunpack.c.l.b16 %v1944
        %v2080 = vunpack.c.l.b16 %v1945
        %v2081 = vunpack.c.h.b16 %v1943
        %v2082 = vunpack.c.h.b16 %v1944
        %v2083 = vunpack.c.h.b16 %v1945
        %v2084 = vunpack.c.l.b16 %v1946
        %v2085 = vunpack.c.l.b16 %v1947
        %v2086 = vunpack.c.l.b16 %v1948
        %v2087 = vunpack.c.h.b16 %v1946
        %v2088 = vunpack.c.h.b16 %v1947
        %v2089 = vunpack.c.h.b16 %v1948
        %v2090 = vunpack.c.l.b16 %v1949
        %v2091 = vunpack.c.l.b16 %v1950
        %v2092 = vunpack.c.l.b16 %v1951
        %v2093 = vunpack.c.h.b16 %v1949
        %v2094 = vunpack.c.h.b16 %v1950
        %v2095 = vunpack.c.h.b16 %v1951
        %v2096 = vpack.c.b16 %v2001, %v2000
        %v2097 = vpack.c.b16 %v2002, %v2002
        %v2098 = vpack.c.b16 %v2004, %v2003
        %v2099 = vpack.c.b16 %v2005, %v2005
        %v2100 = vpack.c.b16 %v2007, %v2006
        %v2101 = vpack.c.b16 %v2008, %v2008
        %v2102 = vpack.c.b16 %v2010, %v2009
        %v2103 = vpack.c.b16 %v2011, %v2011
        %v2104 = vpack.c.b16 %v2013, %v2012
        %v2105 = vpack.c.b16 %v2014, %v2014
        %v2106 = vpack.c.b16 %v2016, %v2015
        %v2107 = vpack.c.b16 %v2017, %v2017
        %v2108 = vpack.c.b16 %v2019, %v2018
        %v2109 = vpack.c.b16 %v2020, %v2020
        %v2110 = vpack.c.b16 %v2022, %v2021
        %v2111 = vpack.c.b16 %v2023, %v2023
        %v2112 = vpack.c.b16 %v2025, %v2024
        %v2113 = vpack.c.b16 %v2026, %v2026
        %v2114 = vpack.c.b16 %v2028, %v2027
        %v2115 = vpack.c.b16 %v2029, %v2029
        %v2116 = vpack.c.b16 %v2031, %v2030
        %v2117 = vpack.c.b16 %v2032, %v2032
        %v2118 = vpack.c.b16 %v2034, %v2033
        %v2119 = vpack.c.b16 %v2035, %v2035
        %v2120 = vpack.c.b16 %v2037, %v2036
        %v2121 = vpack.c.b16 %v2038, %v2038
        %v2122 = vpack.c.b16 %v2040, %v2039
        %v2123 = vpack.c.b16 %v2041, %v2041
        %v2124 = vpack.c.b16 %v2043, %v2042
        %v2125 = vpack.c.b16 %v2044, %v2044
        %v2126 = vpack.c.b16 %v2046, %v2045
        %v2127 = vpack.c.b16 %v2047, %v2047
        %v2128 = vpack.c.b16 %v2049, %v2048
        %v2129 = vpack.c.b16 %v2050, %v2050
        %v2130 = vpack.c.b16 %v2052, %v2051
        %v2131 = vpack.c.b16 %v2053, %v2053
        %v2132 = vpack.c.b16 %v2055, %v2054
        %v2133 = vpack.c.b16 %v2056, %v2056
        %v2134 = vpack.c.b16 %v2058, %v2057
        %v2135 = vpack.c.b16 %v2059, %v2059
        %v2136 = vpack.c.b16 %v2061, %v2060
        %v2137 = vpack.c.b16 %v2062, %v2062
        %v2138 = vpack.c.b16 %v2064, %v2063
        %v2139 = vpack.c.b16 %v2065, %v2065
        %v2140 = vpack.c.b16 %v2067, %v2066
        %v2141 = vpack.c.b16 %v2068, %v2068
        %v2142 = vpack.c.b16 %v2070, %v2069
        %v2143 = vpack.c.b16 %v2071, %v2071
        %v2144 = vpack.c.b16 %v2073, %v2072
        %v2145 = vpack.c.b16 %v2074, %v2074
        %v2146 = vpack.c.b16 %v2076, %v2075
        %v2147 = vpack.c.b16 %v2077, %v2077
        %v2148 = vpack.c.b16 %v2079, %v2078
        %v2149 = vpack.c.b16 %v2080, %v2080
        %v2150 = vpack.c.b16 %v2082, %v2081
        %v2151 = vpack.c.b16 %v2083, %v2083
        %v2152 = vpack.c.b16 %v2085, %v2084
        %v2153 = vpack.c.b16 %v2086, %v2086
        %v2154 = vpack.c.b16 %v2088, %v2087
        %v2155 = vpack.c.b16 %v2089, %v2089
        %v2156 = vpack.c.b16 %v2091, %v2090
        %v2157 = vpack.c.b16 %v2092, %v2092
        %v2158 = vpack.c.b16 %v2094, %v2093
        %v2159 = vpack.c.b16 %v2095, %v2095
        %2224 = vst [vmem:[#allocation2 + $0x18] sm:$0xff] %v2096
        %2225 = vst [vmem:[#allocation2 + $0x20] sm:$0xf] %v2097
        %2226 = vst [vmem:[#allocation2 + $0x24] sm:$0xff] %v2098
        %2227 = vst [vmem:[#allocation2 + $0x2c] sm:$0xf] %v2099
        %2228 = vst [vmem:[#allocation2 + $0x30] sm:$0xff] %v2100
        %2229 = vst [vmem:[#allocation2 + $0x38] sm:$0xf] %v2101
        %2230 = vst [vmem:[#allocation2 + $0x3c] sm:$0xff] %v2102
        %2231 = vst [vmem:[#allocation2 + $0x44] sm:$0xf] %v2103
        %2232 = vst [vmem:[#allocation2 + $0x48] sm:$0xff] %v2104
        %2233 = vst [vmem:[#allocation2 + $0x50] sm:$0xf] %v2105
        %2234 = vst [vmem:[#allocation2 + $0x54] sm:$0xff] %v2106
        %2235 = vst [vmem:[#allocation2 + $0x5c] sm:$0xf] %v2107
        %2236 = vst [vmem:[#allocation2 + $0x60] sm:$0xff] %v2108
        %2237 = vst [vmem:[#allocation2 + $0x68] sm:$0xf] %v2109
        %2238 = vst [vmem:[#allocation2 + $0x6c] sm:$0xff] %v2110
        %2239 = vst [vmem:[#allocation2 + $0x74] sm:$0xf] %v2111
        %2240 = vst [vmem:[#allocation2 + $0x78] sm:$0xff] %v2112
        %2241 = vst [vmem:[#allocation2 + $0x80] sm:$0xf] %v2113
        %2242 = vst [vmem:[#allocation2 + $0x84] sm:$0xff] %v2114
        %2243 = vst [vmem:[#allocation2 + $0x8c] sm:$0xf] %v2115
        %2244 = vst [vmem:[#allocation2 + $0x90] sm:$0xff] %v2116
        %2245 = vst [vmem:[#allocation2 + $0x98] sm:$0xf] %v2117
        %2246 = vst [vmem:[#allocation2 + $0x9c] sm:$0xff] %v2118
        %2247 = vst [vmem:[#allocation2 + $0xa4] sm:$0xf] %v2119
        %2248 = vst [vmem:[#allocation2 + $0xa8] sm:$0xff] %v2120
        %2249 = vst [vmem:[#allocation2 + $0xb0] sm:$0xf] %v2121
        %2250 = vst [vmem:[#allocation2 + $0xb4] sm:$0xff] %v2122
        %2251 = vst [vmem:[#allocation2 + $0xbc] sm:$0xf] %v2123
        %2252 = vst [vmem:[#allocation2 + $0xc0] sm:$0xff] %v2124
        %2253 = vst [vmem:[#allocation2 + $0xc8] sm:$0xf] %v2125
        %2254 = vst [vmem:[#allocation2 + $0xcc] sm:$0xff] %v2126
        %2255 = vst [vmem:[#allocation2 + $0xd4] sm:$0xf] %v2127
        %2256 = vst [vmem:[#allocation2 + $0xd8] sm:$0xff] %v2128
        %2257 = vst [vmem:[#allocation2 + $0xe0] sm:$0xf] %v2129
        %2258 = vst [vmem:[#allocation2 + $0xe4] sm:$0xff] %v2130
        %2259 = vst [vmem:[#allocation2 + $0xec] sm:$0xf] %v2131
        %2260 = vst [vmem:[#allocation2 + $0xf0] sm:$0xff] %v2132
        %2261 = vst [vmem:[#allocation2 + $0xf8] sm:$0xf] %v2133
        %2262 = vst [vmem:[#allocation2 + $0xfc] sm:$0xff] %v2134
        %2263 = vst [vmem:[#allocation2 + $0x104] sm:$0xf] %v2135
        %2264 = vst [vmem:[#allocation2 + $0x108] sm:$0xff] %v2136
        %2265 = vst [vmem:[#allocation2 + $0x110] sm:$0xf] %v2137
        %2266 = vst [vmem:[#allocation2 + $0x114] sm:$0xff] %v2138
        %2267 = vst [vmem:[#allocation2 + $0x11c] sm:$0xf] %v2139
        %2268 = vst [vmem:[#allocation2 + $0x120] sm:$0xff] %v2140
        %2269 = vst [vmem:[#allocation2 + $0x128] sm:$0xf] %v2141
        %2270 = vst [vmem:[#allocation2 + $0x12c] sm:$0xff] %v2142
        %2271 = vst [vmem:[#allocation2 + $0x134] sm:$0xf] %v2143
        %2272 = vst [vmem:[#allocation2 + $0x138] sm:$0xff] %v2144
        %2273 = vst [vmem:[#allocation2 + $0x140] sm:$0xf] %v2145
        %2274 = vst [vmem:[#allocation2 + $0x144] sm:$0xff] %v2146
        %2275 = vst [vmem:[#allocation2 + $0x14c] sm:$0xf] %v2147
        %2276 = vst [vmem:[#allocation2 + $0x150] sm:$0xff] %v2148
        %2277 = vst [vmem:[#allocation2 + $0x158] sm:$0xf] %v2149
        %2278 = vst [vmem:[#allocation2 + $0x15c] sm:$0xff] %v2150
        %2279 = vst [vmem:[#allocation2 + $0x164] sm:$0xf] %v2151
        %2280 = vst [vmem:[#allocation2 + $0x168] sm:$0xff] %v2152
        %2281 = vst [vmem:[#allocation2 + $0x170] sm:$0xf] %v2153
        %2282 = vst [vmem:[#allocation2 + $0x174] sm:$0xff] %v2154
        %2283 = vst [vmem:[#allocation2 + $0x17c] sm:$0xf] %v2155
        %2284 = vst [vmem:[#allocation2 + $0x180] sm:$0xff] %v2156
        %2285 = vst [vmem:[#allocation2 + $0x188] sm:$0xf] %v2157
        %2286 = vst [vmem:[#allocation2 + $0x18c] sm:$0xff] %v2158
        %2287 = vst [vmem:[#allocation2 + $0x194] sm:$0xf] %v2159
        %v2288 = vld [vmem:[#allocation2] sm:$0xff]
        %v2289 = vld [vmem:[#allocation2 + $0x8] sm:$0xf]
        %v2290 = vld [vmem:[#allocation2 + $0xc] sm:$0xff]
        %v2291 = vld [vmem:[#allocation2 + $0x14] sm:$0xf]
        %v2292 = vld [vmem:[#allocation2 + $0x18] sm:$0xff]
        %v2293 = vld [vmem:[#allocation2 + $0x20] sm:$0xf]
        %v2294 = vld [vmem:[#allocation2 + $0x24] sm:$0xff]
        %v2295 = vld [vmem:[#allocation2 + $0x2c] sm:$0xf]
        %v2296 = vld [vmem:[#allocation2 + $0x30] sm:$0xff]
        %v2297 = vld [vmem:[#allocation2 + $0x38] sm:$0xf]
        %v2298 = vld [vmem:[#allocation2 + $0x3c] sm:$0xff]
        %v2299 = vld [vmem:[#allocation2 + $0x44] sm:$0xf]
        %v2300 = vld [vmem:[#allocation2 + $0x48] sm:$0xff]
        %v2301 = vld [vmem:[#allocation2 + $0x50] sm:$0xf]
        %v2302 = vld [vmem:[#allocation2 + $0x54] sm:$0xff]
        %v2303 = vld [vmem:[#allocation2 + $0x5c] sm:$0xf]
        %v2304 = vld [vmem:[#allocation2 + $0x60] sm:$0xff]
        %v2305 = vld [vmem:[#allocation2 + $0x68] sm:$0xf]
        %v2306 = vld [vmem:[#allocation2 + $0x6c] sm:$0xff]
        %v2307 = vld [vmem:[#allocation2 + $0x74] sm:$0xf]
        %v2308 = vld [vmem:[#allocation2 + $0x78] sm:$0xff]
        %v2309 = vld [vmem:[#allocation2 + $0x80] sm:$0xf]
        %v2310 = vld [vmem:[#allocation2 + $0x84] sm:$0xff]
        %v2311 = vld [vmem:[#allocation2 + $0x8c] sm:$0xf]
        %v2312 = vld [vmem:[#allocation2 + $0x90] sm:$0xff]
        %v2313 = vld [vmem:[#allocation2 + $0x98] sm:$0xf]
        %v2314 = vld [vmem:[#allocation2 + $0x9c] sm:$0xff]
        %v2315 = vld [vmem:[#allocation2 + $0xa4] sm:$0xf]
        %v2316 = vld [vmem:[#allocation2 + $0xa8] sm:$0xff]
        %v2317 = vld [vmem:[#allocation2 + $0xb0] sm:$0xf]
        %v2318 = vld [vmem:[#allocation2 + $0xb4] sm:$0xff]
        %v2319 = vld [vmem:[#allocation2 + $0xbc] sm:$0xf]
        %v2320 = vld [vmem:[#allocation9] sm:$0xf]
        %v2321 = vld [vmem:[#allocation9 + $0x4] sm:$0xf]
        %v2322 = vld [vmem:[#allocation9 + $0x8] sm:$0xf]
        %v2323 = vld [vmem:[#allocation9 + $0xc] sm:$0xf]
        %v2324 = vld [vmem:[#allocation9 + $0x10] sm:$0xf]
        %v2325 = vld [vmem:[#allocation9 + $0x14] sm:$0xf]
        %v2326 = vld [vmem:[#allocation9 + $0x18] sm:$0xf]
        %v2327 = vld [vmem:[#allocation9 + $0x1c] sm:$0xf]
        %v2328 = vld [vmem:[#allocation9 + $0x20] sm:$0xf]
        %v2329 = vld [vmem:[#allocation9 + $0x24] sm:$0xf]
        %v2330 = vld [vmem:[#allocation9 + $0x28] sm:$0xf]
        %v2331 = vld [vmem:[#allocation9 + $0x2c] sm:$0xf]
        %v2332 = vld [vmem:[#allocation9 + $0x30] sm:$0xf]
        %v2333 = vld [vmem:[#allocation9 + $0x34] sm:$0xf]
        %v2334 = vld [vmem:[#allocation9 + $0x38] sm:$0xf]
        %v2335 = vld [vmem:[#allocation9 + $0x3c] sm:$0xf]
        %v2336 = vld [vmem:[#allocation9 + $0x40] sm:$0xf]
        %v2337 = vld [vmem:[#allocation9 + $0x44] sm:$0xf]
        %v2338 = vld [vmem:[#allocation9 + $0x48] sm:$0xf]
        %v2339 = vld [vmem:[#allocation9 + $0x4c] sm:$0xf]
        %v2340 = vld [vmem:[#allocation9 + $0x50] sm:$0xf]
        %v2341 = vld [vmem:[#allocation9 + $0x54] sm:$0xf]
        %v2342 = vld [vmem:[#allocation9 + $0x58] sm:$0xf]
        %v2343 = vld [vmem:[#allocation9 + $0x5c] sm:$0xf]
        %v2344 = vld [vmem:[#allocation9 + $0x60] sm:$0xf]
        %v2345 = vld [vmem:[#allocation9 + $0x64] sm:$0xf]
        %v2346 = vld [vmem:[#allocation9 + $0x68] sm:$0xf]
        %v2347 = vld [vmem:[#allocation9 + $0x6c] sm:$0xf]
        %v2348 = vld [vmem:[#allocation9 + $0x70] sm:$0xf]
        %v2349 = vld [vmem:[#allocation9 + $0x74] sm:$0xf]
        %v2350 = vld [vmem:[#allocation9 + $0x78] sm:$0xf]
        %v2351 = vld [vmem:[#allocation9 + $0x7c] sm:$0xf]
        %v2352 = vld [vmem:[#allocation9 + $0x80] sm:$0xf]
        %v2353 = vld [vmem:[#allocation9 + $0x84] sm:$0xf]
        %v2354 = vld [vmem:[#allocation9 + $0x88] sm:$0xf]
        %v2355 = vld [vmem:[#allocation9 + $0x8c] sm:$0xf]
        %v2356 = vld [vmem:[#allocation9 + $0x90] sm:$0xf]
        %v2357 = vld [vmem:[#allocation9 + $0x94] sm:$0xf]
        %v2358 = vld [vmem:[#allocation9 + $0x98] sm:$0xf]
        %v2359 = vld [vmem:[#allocation9 + $0x9c] sm:$0xf]
        %v2360 = vld [vmem:[#allocation9 + $0xa0] sm:$0xf]
        %v2361 = vld [vmem:[#allocation9 + $0xa4] sm:$0xf]
        %v2362 = vld [vmem:[#allocation9 + $0xa8] sm:$0xf]
        %v2363 = vld [vmem:[#allocation9 + $0xac] sm:$0xf]
        %v2364 = vld [vmem:[#allocation9 + $0xb0] sm:$0xf]
        %v2365 = vld [vmem:[#allocation9 + $0xb4] sm:$0xf]
        %v2366 = vld [vmem:[#allocation9 + $0xb8] sm:$0xf]
        %v2367 = vld [vmem:[#allocation9 + $0xbc] sm:$0xf]
        %v2368 = vld [vmem:[#allocation2 + $0xc0] sm:$0xff]
        %v2369 = vld [vmem:[#allocation2 + $0xc8] sm:$0xf]
        %v2370 = vld [vmem:[#allocation2 + $0xcc] sm:$0xff]
        %v2371 = vld [vmem:[#allocation2 + $0xd4] sm:$0xf]
        %s2372 = scalar_lea.vmem [#allocation9], 192
        %v2373 = vld [vmem:[%s2372] sm:$0xf]
        %v2374 = vld [vmem:[%s2372 + $0x4] sm:$0xf]
        %v2375 = vld [vmem:[%s2372 + $0x8] sm:$0xf]
        %v2376 = vld [vmem:[%s2372 + $0xc] sm:$0xf]
        %v2377 = vld [vmem:[%s2372 + $0x10] sm:$0xf]
        %v2378 = vld [vmem:[%s2372 + $0x14] sm:$0xf]
        %v2379 = vld [vmem:[%s2372 + $0x18] sm:$0xf]
        %v2380 = vld [vmem:[%s2372 + $0x1c] sm:$0xf]
        %v2381 = vld [vmem:[%s2372 + $0x20] sm:$0xf]
        %v2382 = vld [vmem:[%s2372 + $0x24] sm:$0xf]
        %v2383 = vld [vmem:[%s2372 + $0x28] sm:$0xf]
        %v2384 = vld [vmem:[%s2372 + $0x2c] sm:$0xf]
        %v2385 = vld [vmem:[%s2372 + $0x30] sm:$0xf]
        %v2386 = vld [vmem:[%s2372 + $0x34] sm:$0xf]
        %v2387 = vld [vmem:[%s2372 + $0x38] sm:$0xf]
        %v2388 = vld [vmem:[%s2372 + $0x3c] sm:$0xf]
        %v2389 = vld [vmem:[%s2372 + $0x40] sm:$0xf]
        %v2390 = vld [vmem:[%s2372 + $0x44] sm:$0xf]
        %v2391 = vld [vmem:[%s2372 + $0x48] sm:$0xf]
        %v2392 = vld [vmem:[%s2372 + $0x4c] sm:$0xf]
        %v2393 = vld [vmem:[%s2372 + $0x50] sm:$0xf]
        %v2394 = vld [vmem:[%s2372 + $0x54] sm:$0xf]
        %v2395 = vld [vmem:[%s2372 + $0x58] sm:$0xf]
        %v2396 = vld [vmem:[%s2372 + $0x5c] sm:$0xf]
        %v2397 = vld [vmem:[%s2372 + $0x60] sm:$0xf]
        %v2398 = vld [vmem:[%s2372 + $0x64] sm:$0xf]
        %v2399 = vld [vmem:[%s2372 + $0x68] sm:$0xf]
        %v2400 = vld [vmem:[%s2372 + $0x6c] sm:$0xf]
        %v2401 = vld [vmem:[%s2372 + $0x70] sm:$0xf]
        %v2402 = vld [vmem:[%s2372 + $0x74] sm:$0xf]
        %v2403 = vld [vmem:[%s2372 + $0x78] sm:$0xf]
        %v2404 = vld [vmem:[%s2372 + $0x7c] sm:$0xf]
        %v2405 = vld [vmem:[%s2372 + $0x80] sm:$0xf]
        %v2406 = vld [vmem:[%s2372 + $0x84] sm:$0xf]
        %v2407 = vld [vmem:[%s2372 + $0x88] sm:$0xf]
        %v2408 = vld [vmem:[%s2372 + $0x8c] sm:$0xf]
        %v2409 = vld [vmem:[%s2372 + $0x90] sm:$0xf]
        %v2410 = vld [vmem:[%s2372 + $0x94] sm:$0xf]
        %v2411 = vld [vmem:[%s2372 + $0x98] sm:$0xf]
        %v2412 = vld [vmem:[%s2372 + $0x9c] sm:$0xf]
        %v2413 = vld [vmem:[%s2372 + $0xa0] sm:$0xf]
        %v2414 = vld [vmem:[%s2372 + $0xa4] sm:$0xf]
        %v2415 = vld [vmem:[%s2372 + $0xa8] sm:$0xf]
        %v2416 = vld [vmem:[%s2372 + $0xac] sm:$0xf]
        %v2417 = vld [vmem:[%s2372 + $0xb0] sm:$0xf]
        %v2418 = vld [vmem:[%s2372 + $0xb4] sm:$0xf]
        %v2419 = vld [vmem:[%s2372 + $0xb8] sm:$0xf]
        %v2420 = vld [vmem:[%s2372 + $0xbc] sm:$0xf]
        %v2453 = vunpack.c.l.b16 %v2292
        %v2454 = vunpack.c.h.b16 %v2292
        %v2455 = vunpack.c.l.b16 %v2293
        %v2456 = vunpack.c.l.b16 %v2294
        %v2457 = vunpack.c.h.b16 %v2294
        %v2458 = vunpack.c.l.b16 %v2295
        %v2459 = vunpack.c.l.b16 %v2296
        %v2460 = vunpack.c.h.b16 %v2296
        %v2461 = vunpack.c.l.b16 %v2297
        %v2462 = vunpack.c.l.b16 %v2298
        %v2463 = vunpack.c.h.b16 %v2298
        %v2464 = vunpack.c.l.b16 %v2299
        %v2465 = vunpack.c.l.b16 %v2300
        %v2466 = vunpack.c.h.b16 %v2300
        %v2467 = vunpack.c.l.b16 %v2301
        %v2468 = vunpack.c.l.b16 %v2302
        %v2469 = vunpack.c.h.b16 %v2302
        %v2470 = vunpack.c.l.b16 %v2303
        %v2471 = vunpack.c.l.b16 %v2304
        %v2472 = vunpack.c.h.b16 %v2304
        %v2473 = vunpack.c.l.b16 %v2305
        %v2474 = vunpack.c.l.b16 %v2306
        %v2475 = vunpack.c.h.b16 %v2306
        %v2476 = vunpack.c.l.b16 %v2307
        %v2477 = vunpack.c.l.b16 %v2308
        %v2478 = vunpack.c.h.b16 %v2308
        %v2479 = vunpack.c.l.b16 %v2309
        %v2480 = vunpack.c.l.b16 %v2310
        %v2481 = vunpack.c.h.b16 %v2310
        %v2482 = vunpack.c.l.b16 %v2311
        %v2483 = vunpack.c.l.b16 %v2312
        %v2484 = vunpack.c.h.b16 %v2312
        %v2485 = vunpack.c.l.b16 %v2313
        %v2486 = vunpack.c.l.b16 %v2314
        %v2487 = vunpack.c.h.b16 %v2314
        %v2488 = vunpack.c.l.b16 %v2315
        %v2489 = vunpack.c.l.b16 %v2316
        %v2490 = vunpack.c.h.b16 %v2316
        %v2491 = vunpack.c.l.b16 %v2317
        %v2492 = vunpack.c.l.b16 %v2318
        %v2493 = vunpack.c.h.b16 %v2318
        %v2494 = vunpack.c.l.b16 %v2319
        %v2495 = vunpack.c.l.b16 %v2368
        %v2496 = vunpack.c.h.b16 %v2368
        %v2497 = vunpack.c.l.b16 %v2369
        %v2498 = vunpack.c.l.b16 %v2370
        %v2499 = vunpack.c.h.b16 %v2370
        %v2500 = vunpack.c.l.b16 %v2371
        %v2501 = vpack.c.b16 %v2456, %v2453
        %v2502 = vpack.c.b16 %v2457, %v2454
        %v2503 = vpack.c.b16 %v2458, %v2455
        %v2504 = vpack.c.b16 %v2462, %v2459
        %v2505 = vpack.c.b16 %v2463, %v2460
        %v2506 = vpack.c.b16 %v2464, %v2461
        %v2507 = vpack.c.b16 %v2468, %v2465
        %v2508 = vpack.c.b16 %v2469, %v2466
        %v2509 = vpack.c.b16 %v2470, %v2467
        %v2510 = vpack.c.b16 %v2474, %v2471
        %v2511 = vpack.c.b16 %v2475, %v2472
        %v2512 = vpack.c.b16 %v2476, %v2473
        %v2513 = vpack.c.b16 %v2480, %v2477
        %v2514 = vpack.c.b16 %v2481, %v2478
        %v2515 = vpack.c.b16 %v2482, %v2479
        %v2516 = vpack.c.b16 %v2486, %v2483
        %v2517 = vpack.c.b16 %v2487, %v2484
        %v2518 = vpack.c.b16 %v2488, %v2485
        %v2519 = vpack.c.b16 %v2492, %v2489
        %v2520 = vpack.c.b16 %v2493, %v2490
        %v2521 = vpack.c.b16 %v2494, %v2491
        %v2522 = vpack.c.b16 %v2498, %v2495
        %v2523 = vpack.c.b16 %v2499, %v2496
        %v2524 = vpack.c.b16 %v2500, %v2497
        %v2597 = vunpack.c.l.b16 %v2373
        %v2598 = vunpack.c.l.b16 %v2374
        %v2599 = vunpack.c.l.b16 %v2375
        %v2600 = vunpack.c.l.b16 %v2376
        %v2601 = vunpack.c.l.b16 %v2377
        %v2602 = vunpack.c.l.b16 %v2378
        %v2603 = vunpack.c.l.b16 %v2379
        %v2604 = vunpack.c.l.b16 %v2380
        %v2605 = vunpack.c.l.b16 %v2381
        %v2606 = vunpack.c.l.b16 %v2382
        %v2607 = vunpack.c.l.b16 %v2383
        %v2608 = vunpack.c.l.b16 %v2384
        %v2609 = vunpack.c.l.b16 %v2385
        %v2610 = vunpack.c.l.b16 %v2386
        %v2611 = vunpack.c.l.b16 %v2387
        %v2612 = vunpack.c.l.b16 %v2388
        %v2613 = vunpack.c.l.b16 %v2389
        %v2614 = vunpack.c.l.b16 %v2390
        %v2615 = vunpack.c.l.b16 %v2391
        %v2616 = vunpack.c.l.b16 %v2392
        %v2617 = vunpack.c.l.b16 %v2393
        %v2618 = vunpack.c.l.b16 %v2394
        %v2619 = vunpack.c.l.b16 %v2395
        %v2620 = vunpack.c.l.b16 %v2396
        %v2621 = vunpack.c.l.b16 %v2397
        %v2622 = vunpack.c.l.b16 %v2398
        %v2623 = vunpack.c.l.b16 %v2399
        %v2624 = vunpack.c.l.b16 %v2400
        %v2625 = vunpack.c.l.b16 %v2401
        %v2626 = vunpack.c.l.b16 %v2402
        %v2627 = vunpack.c.l.b16 %v2403
        %v2628 = vunpack.c.l.b16 %v2404
        %v2629 = vunpack.c.l.b16 %v2405
        %v2630 = vunpack.c.l.b16 %v2406
        %v2631 = vunpack.c.l.b16 %v2407
        %v2632 = vunpack.c.l.b16 %v2408
        %v2633 = vunpack.c.l.b16 %v2409
        %v2634 = vunpack.c.l.b16 %v2410
        %v2635 = vunpack.c.l.b16 %v2411
        %v2636 = vunpack.c.l.b16 %v2412
        %v2637 = vunpack.c.l.b16 %v2413
        %v2638 = vunpack.c.l.b16 %v2414
        %v2639 = vunpack.c.l.b16 %v2415
        %v2640 = vunpack.c.l.b16 %v2416
        %v2641 = vunpack.c.l.b16 %v2417
        %v2642 = vunpack.c.l.b16 %v2418
        %v2643 = vunpack.c.l.b16 %v2419
        %v2644 = vunpack.c.l.b16 %v2420
        %v2645 = vpack.c.b16 %v2598, %v2597
        %v2646 = vpack.c.b16 %v2600, %v2599
        %v2647 = vpack.c.b16 %v2602, %v2601
        %v2648 = vpack.c.b16 %v2604, %v2603
        %v2649 = vpack.c.b16 %v2606, %v2605
        %v2650 = vpack.c.b16 %v2608, %v2607
        %v2651 = vpack.c.b16 %v2610, %v2609
        %v2652 = vpack.c.b16 %v2612, %v2611
        %v2653 = vpack.c.b16 %v2614, %v2613
        %v2654 = vpack.c.b16 %v2616, %v2615
        %v2655 = vpack.c.b16 %v2618, %v2617
        %v2656 = vpack.c.b16 %v2620, %v2619
        %v2657 = vpack.c.b16 %v2622, %v2621
        %v2658 = vpack.c.b16 %v2624, %v2623
        %v2659 = vpack.c.b16 %v2626, %v2625
        %v2660 = vpack.c.b16 %v2628, %v2627
        %v2661 = vpack.c.b16 %v2630, %v2629
        %v2662 = vpack.c.b16 %v2632, %v2631
        %v2663 = vpack.c.b16 %v2634, %v2633
        %v2664 = vpack.c.b16 %v2636, %v2635
        %v2665 = vpack.c.b16 %v2638, %v2637
        %v2666 = vpack.c.b16 %v2640, %v2639
        %v2667 = vpack.c.b16 %v2642, %v2641
        %v2668 = vpack.c.b16 %v2644, %v2643
        %2693 = vmatprep.subr.bf16.mxu0 0
        %2694 = vmatpush1.bf16.msra.mxu0 %v2652
        %2695 = vmatprep.subr.bf16.mxu0 0
        %2696 = vmatpush1.bf16.msra.mxu0 %v2651
        %2697 = vmatprep.subr.bf16.mxu0 0
        %2698 = vmatpush1.bf16.msra.mxu0 %v2650
        %2699 = vmatprep.subr.bf16.mxu0 0
        %2700 = vmatpush1.bf16.msra.mxu0 %v2649
        %2701 = vmatprep.subr.bf16.mxu0 0
        %2702 = vmatpush1.bf16.msra.mxu0 %v2648
        %2703 = vmatprep.subr.bf16.mxu0 0
        %2704 = vmatpush1.bf16.msra.mxu0 %v2647
        %2705 = vmatprep.subr.bf16.mxu0 0
        %2706 = vmatpush1.bf16.msra.mxu0 %v2646
        %2707 = vmatprep.subr.bf16.mxu0 0
        %2708 = vmatpush1.bf16.msra.mxu0 %v2645
        %2709 = vmatprep.subr.bf16.mxu0 0
        %2710 = vmatpush2.bf16.msra.mxu0 %v2660
        %2711 = vmatprep.subr.bf16.mxu0 0
        %2712 = vmatpush2.bf16.msra.mxu0 %v2659
        %2713 = vmatprep.subr.bf16.mxu0 0
        %2714 = vmatpush2.bf16.msra.mxu0 %v2658
        %2715 = vmatprep.subr.bf16.mxu0 0
        %2716 = vmatpush2.bf16.msra.mxu0 %v2657
        %2717 = vmatprep.subr.bf16.mxu0 0
        %2718 = vmatpush2.bf16.msra.mxu0 %v2656
        %2719 = vmatprep.subr.bf16.mxu0 0
        %2720 = vmatpush2.bf16.msra.mxu0 %v2655
        %2721 = vmatprep.subr.bf16.mxu0 0
        %2722 = vmatpush2.bf16.msra.mxu0 %v2654
        %2723 = vmatprep.subr.bf16.mxu0 0
        %2724 = vmatpush2.bf16.msra.mxu0 %v2653
        %2725 = vmatprep.mubr.bf16.mxu0 %v2502
        %2726 = vmatmul.mubr.bf16.gmra.mxu0 %v2501
        %v2727 = vpop.f32.mrf.mxu0
        %v2728 = vadd.f32 0.0, %v2727
        %v2729 = vpop.f32.mrf.mxu0
        %v2730 = vpop.f32.mrf.mxu0
        %v2731 = vadd.f32 0.0, %v2730
        %v2732 = vpop.f32.mrf.mxu0
        %2733 = vmatprep.mubr.bf16.mxu0 %v2505
        %2734 = vmatmul.mubr.bf16.gmra.mxu0 %v2504
        %v2735 = vpop.f32.mrf.mxu0
        %v2736 = vadd.f32 0.0, %v2735
        %v2737 = vpop.f32.mrf.mxu0
        %v2738 = vpop.f32.mrf.mxu0
        %v2739 = vadd.f32 0.0, %v2738
        %v2740 = vpop.f32.mrf.mxu0
        %2741 = vmatprep.mubr.bf16.mxu0 %v2508
        %2742 = vmatmul.mubr.bf16.gmra.mxu0 %v2507
        %v2743 = vpop.f32.mrf.mxu0
        %v2744 = vadd.f32 0.0, %v2743
        %v2745 = vpop.f32.mrf.mxu0
        %v2746 = vpop.f32.mrf.mxu0
        %v2747 = vadd.f32 0.0, %v2746
        %v2748 = vpop.f32.mrf.mxu0
        %2749 = vmatprep.mubr.bf16.mxu0 %v2511
        %2750 = vmatmul.mubr.bf16.gmra.mxu0 %v2510
        %v2751 = vpop.f32.mrf.mxu0
        %v2752 = vadd.f32 0.0, %v2751
        %v2753 = vpop.f32.mrf.mxu0
        %v2754 = vpop.f32.mrf.mxu0
        %v2755 = vadd.f32 0.0, %v2754
        %v2756 = vpop.f32.mrf.mxu0
        %2757 = vmatprep.mubr.bf16.mxu0 %v2514
        %2758 = vmatmul.mubr.bf16.gmra.mxu0 %v2513
        %v2759 = vpop.f32.mrf.mxu0
        %v2760 = vadd.f32 0.0, %v2759
        %v2761 = vpop.f32.mrf.mxu0
        %v2762 = vpop.f32.mrf.mxu0
        %v2763 = vadd.f32 0.0, %v2762
        %v2764 = vpop.f32.mrf.mxu0
        %2765 = vmatprep.mubr.bf16.mxu0 %v2517
        %2766 = vmatmul.mubr.bf16.gmra.mxu0 %v2516
        %v2767 = vpop.f32.mrf.mxu0
        %v2768 = vadd.f32 0.0, %v2767
        %v2769 = vpop.f32.mrf.mxu0
        %v2770 = vpop.f32.mrf.mxu0
        %v2771 = vadd.f32 0.0, %v2770
        %v2772 = vpop.f32.mrf.mxu0
        %2773 = vmatprep.mubr.bf16.mxu0 %v2520
        %2774 = vmatmul.mubr.bf16.gmra.mxu0 %v2519
        %v2775 = vpop.f32.mrf.mxu0
        %v2776 = vadd.f32 0.0, %v2775
        %v2777 = vpop.f32.mrf.mxu0
        %v2778 = vpop.f32.mrf.mxu0
        %v2779 = vadd.f32 0.0, %v2778
        %v2780 = vpop.f32.mrf.mxu0
        %2781 = vmatprep.mubr.bf16.mxu0 %v2523
        %2782 = vmatmul.mubr.bf16.gmra.mxu0 %v2522
        %v2783 = vpop.f32.mrf.mxu0
        %v2784 = vadd.f32 0.0, %v2783
        %v2785 = vpop.f32.mrf.mxu0
        %v2786 = vpop.f32.mrf.mxu0
        %v2787 = vadd.f32 0.0, %v2786
        %v2788 = vpop.f32.mrf.mxu0
        %2789 = vdwg.mxu0
        %2790 = vmatprep.subr.bf16.mxu0 0
        %2791 = vmatpush1.bf16.msra.mxu0 %v2668
        %2792 = vmatprep.subr.bf16.mxu0 0
        %2793 = vmatpush1.bf16.msra.mxu0 %v2667
        %2794 = vmatprep.subr.bf16.mxu0 0
        %2795 = vmatpush1.bf16.msra.mxu0 %v2666
        %2796 = vmatprep.subr.bf16.mxu0 0
        %2797 = vmatpush1.bf16.msra.mxu0 %v2665
        %2798 = vmatprep.subr.bf16.mxu0 0
        %2799 = vmatpush1.bf16.msra.mxu0 %v2664
        %2800 = vmatprep.subr.bf16.mxu0 0
        %2801 = vmatpush1.bf16.msra.mxu0 %v2663
        %2802 = vmatprep.subr.bf16.mxu0 0
        %2803 = vmatpush1.bf16.msra.mxu0 %v2662
        %2804 = vmatprep.subr.bf16.mxu0 0
        %2805 = vmatpush1.bf16.msra.mxu0 %v2661
        %2806 = vmatprep.subr.bf16.mxu0 0
        %2807 = vmatpush2.bf16.msra.mxu0 0
        %2808 = vmatprep.subr.bf16.mxu0 0
        %2809 = vmatpush2.bf16.msra.mxu0 0
        %2810 = vmatprep.subr.bf16.mxu0 0
        %2811 = vmatpush2.bf16.msra.mxu0 0
        %2812 = vmatprep.subr.bf16.mxu0 0
        %2813 = vmatpush2.bf16.msra.mxu0 0
        %2814 = vmatprep.subr.bf16.mxu0 0
        %2815 = vmatpush2.bf16.msra.mxu0 0
        %2816 = vmatprep.subr.bf16.mxu0 0
        %2817 = vmatpush2.bf16.msra.mxu0 0
        %2818 = vmatprep.subr.bf16.mxu0 0
        %2819 = vmatpush2.bf16.msra.mxu0 0
        %2820 = vmatprep.subr.bf16.mxu0 0
        %2821 = vmatpush2.bf16.msra.mxu0 0
        %2822 = vmatprep.mubr.bf16.mxu0 0
        %2823 = vmatmul.mubr.bf16.gmra.mxu0 %v2503
        %v2824 = vpop.f32.mrf.mxu0
        %v2825 = vadd.f32 %v2728, %v2824
        %v2826 = vpop.f32.mrf.mxu0
        %v2827 = vpop.f32.mrf.mxu0
        %v2828 = vadd.f32 %v2731, %v2827
        %v2829 = vpop.f32.mrf.mxu0
        %2830 = vmatprep.mubr.bf16.mxu0 0
        %2831 = vmatmul.mubr.bf16.gmra.mxu0 %v2506
        %v2832 = vpop.f32.mrf.mxu0
        %v2833 = vadd.f32 %v2736, %v2832
        %v2834 = vpop.f32.mrf.mxu0
        %v2835 = vpop.f32.mrf.mxu0
        %v2836 = vadd.f32 %v2739, %v2835
        %v2837 = vpop.f32.mrf.mxu0
        %2838 = vmatprep.mubr.bf16.mxu0 0
        %2839 = vmatmul.mubr.bf16.gmra.mxu0 %v2509
        %v2840 = vpop.f32.mrf.mxu0
        %v2841 = vadd.f32 %v2744, %v2840
        %v2842 = vpop.f32.mrf.mxu0
        %v2843 = vpop.f32.mrf.mxu0
        %v2844 = vadd.f32 %v2747, %v2843
        %v2845 = vpop.f32.mrf.mxu0
        %2846 = vmatprep.mubr.bf16.mxu0 0
        %2847 = vmatmul.mubr.bf16.gmra.mxu0 %v2512
        %v2848 = vpop.f32.mrf.mxu0
        %v2849 = vadd.f32 %v2752, %v2848
        %v2850 = vpop.f32.mrf.mxu0
        %v2851 = vpop.f32.mrf.mxu0
        %v2852 = vadd.f32 %v2755, %v2851
        %v2853 = vpop.f32.mrf.mxu0
        %2854 = vmatprep.mubr.bf16.mxu0 0
        %2855 = vmatmul.mubr.bf16.gmra.mxu0 %v2515
        %v2856 = vpop.f32.mrf.mxu0
        %v2857 = vadd.f32 %v2760, %v2856
        %v2858 = vpop.f32.mrf.mxu0
        %v2859 = vpop.f32.mrf.mxu0
        %v2860 = vadd.f32 %v2763, %v2859
        %v2861 = vpop.f32.mrf.mxu0
        %2862 = vmatprep.mubr.bf16.mxu0 0
        %2863 = vmatmul.mubr.bf16.gmra.mxu0 %v2518
        %v2864 = vpop.f32.mrf.mxu0
        %v2865 = vadd.f32 %v2768, %v2864
        %v2866 = vpop.f32.mrf.mxu0
        %v2867 = vpop.f32.mrf.mxu0
        %v2868 = vadd.f32 %v2771, %v2867
        %v2869 = vpop.f32.mrf.mxu0
        %2870 = vmatprep.mubr.bf16.mxu0 0
        %2871 = vmatmul.mubr.bf16.gmra.mxu0 %v2521
        %v2872 = vpop.f32.mrf.mxu0
        %v2873 = vadd.f32 %v2776, %v2872
        %v2874 = vpop.f32.mrf.mxu0
        %v2875 = vpop.f32.mrf.mxu0
        %v2876 = vadd.f32 %v2779, %v2875
        %v2877 = vpop.f32.mrf.mxu0
        %2878 = vmatprep.mubr.bf16.mxu0 0
        %2879 = vmatmul.mubr.bf16.gmra.mxu0 %v2524
        %v2880 = vpop.f32.mrf.mxu0
        %v2881 = vadd.f32 %v2784, %v2880
        %v2882 = vpop.f32.mrf.mxu0
        %v2883 = vpop.f32.mrf.mxu0
        %v2884 = vadd.f32 %v2787, %v2883
        %v2885 = vpop.f32.mrf.mxu0
        %2886 = vdwg.mxu0
        %v2891 = vunpack.c.l.b16 %v2288
        %v2892 = vunpack.c.h.b16 %v2288
        %v2893 = vunpack.c.l.b16 %v2289
        %v2894 = vunpack.c.l.b16 %v2290
        %v2895 = vunpack.c.h.b16 %v2290
        %v2896 = vunpack.c.l.b16 %v2291
        %v2897 = vpack.c.b16 %v2894, %v2891
        %v2898 = vpack.c.b16 %v2895, %v2892
        %v2899 = vpack.c.b16 %v2896, %v2893
        %v2951 = vunpack.c.l.b16 %v2320
        %v2952 = vunpack.c.l.b16 %v2321
        %v2953 = vunpack.c.l.b16 %v2322
        %v2954 = vunpack.c.l.b16 %v2323
        %v2955 = vunpack.c.l.b16 %v2324
        %v2956 = vunpack.c.l.b16 %v2325
        %v2957 = vunpack.c.l.b16 %v2326
        %v2958 = vunpack.c.l.b16 %v2327
        %v2959 = vunpack.c.l.b16 %v2328
        %v2960 = vunpack.c.l.b16 %v2329
        %v2961 = vunpack.c.l.b16 %v2330
        %v2962 = vunpack.c.l.b16 %v2331
        %v2963 = vunpack.c.l.b16 %v2332
        %v2964 = vunpack.c.l.b16 %v2333
        %v2965 = vunpack.c.l.b16 %v2334
        %v2966 = vunpack.c.l.b16 %v2335
        %v2967 = vunpack.c.l.b16 %v2336
        %v2968 = vunpack.c.l.b16 %v2337
        %v2969 = vunpack.c.l.b16 %v2338
        %v2970 = vunpack.c.l.b16 %v2339
        %v2971 = vunpack.c.l.b16 %v2340
        %v2972 = vunpack.c.l.b16 %v2341
        %v2973 = vunpack.c.l.b16 %v2342
        %v2974 = vunpack.c.l.b16 %v2343
        %v2975 = vunpack.c.l.b16 %v2344
        %v2976 = vunpack.c.l.b16 %v2345
        %v2977 = vunpack.c.l.b16 %v2346
        %v2978 = vunpack.c.l.b16 %v2347
        %v2979 = vunpack.c.l.b16 %v2348
        %v2980 = vunpack.c.l.b16 %v2349
        %v2981 = vunpack.c.l.b16 %v2350
        %v2982 = vunpack.c.l.b16 %v2351
        %v2983 = vunpack.c.l.b16 %v2352
        %v2984 = vunpack.c.l.b16 %v2353
        %v2985 = vunpack.c.l.b16 %v2354
        %v2986 = vunpack.c.l.b16 %v2355
        %v2987 = vunpack.c.l.b16 %v2356
        %v2988 = vunpack.c.l.b16 %v2357
        %v2989 = vunpack.c.l.b16 %v2358
        %v2990 = vunpack.c.l.b16 %v2359
        %v2991 = vunpack.c.l.b16 %v2360
        %v2992 = vunpack.c.l.b16 %v2361
        %v2993 = vunpack.c.l.b16 %v2362
        %v2994 = vunpack.c.l.b16 %v2363
        %v2995 = vunpack.c.l.b16 %v2364
        %v2996 = vunpack.c.l.b16 %v2365
        %v2997 = vunpack.c.l.b16 %v2366
        %v2998 = vunpack.c.l.b16 %v2367
        %v2999 = vpack.c.b16 %v2952, %v2951
        %v3000 = vpack.c.b16 %v2954, %v2953
        %v3001 = vpack.c.b16 %v2956, %v2955
        %v3002 = vpack.c.b16 %v2958, %v2957
        %v3003 = vpack.c.b16 %v2960, %v2959
        %v3004 = vpack.c.b16 %v2962, %v2961
        %v3005 = vpack.c.b16 %v2964, %v2963
        %v3006 = vpack.c.b16 %v2966, %v2965
        %v3007 = vpack.c.b16 %v2968, %v2967
        %v3008 = vpack.c.b16 %v2970, %v2969
        %v3009 = vpack.c.b16 %v2972, %v2971
        %v3010 = vpack.c.b16 %v2974, %v2973
        %v3011 = vpack.c.b16 %v2976, %v2975
        %v3012 = vpack.c.b16 %v2978, %v2977
        %v3013 = vpack.c.b16 %v2980, %v2979
        %v3014 = vpack.c.b16 %v2982, %v2981
        %v3015 = vpack.c.b16 %v2984, %v2983
        %v3016 = vpack.c.b16 %v2986, %v2985
        %v3017 = vpack.c.b16 %v2988, %v2987
        %v3018 = vpack.c.b16 %v2990, %v2989
        %v3019 = vpack.c.b16 %v2992, %v2991
        %v3020 = vpack.c.b16 %v2994, %v2993
        %v3021 = vpack.c.b16 %v2996, %v2995
        %v3022 = vpack.c.b16 %v2998, %v2997
        %3047 = vmatprep.subr.bf16.mxu0 0
        %3048 = vmatpush1.bf16.msra.mxu0 %v3006
        %3049 = vmatprep.subr.bf16.mxu0 0
        %3050 = vmatpush1.bf16.msra.mxu0 %v3005
        %3051 = vmatprep.subr.bf16.mxu0 0
        %3052 = vmatpush1.bf16.msra.mxu0 %v3004
        %3053 = vmatprep.subr.bf16.mxu0 0
        %3054 = vmatpush1.bf16.msra.mxu0 %v3003
        %3055 = vmatprep.subr.bf16.mxu0 0
        %3056 = vmatpush1.bf16.msra.mxu0 %v3002
        %3057 = vmatprep.subr.bf16.mxu0 0
        %3058 = vmatpush1.bf16.msra.mxu0 %v3001
        %3059 = vmatprep.subr.bf16.mxu0 0
        %3060 = vmatpush1.bf16.msra.mxu0 %v3000
        %3061 = vmatprep.subr.bf16.mxu0 0
        %3062 = vmatpush1.bf16.msra.mxu0 %v2999
        %3063 = vmatprep.subr.bf16.mxu0 0
        %3064 = vmatpush2.bf16.msra.mxu0 %v3014
        %3065 = vmatprep.subr.bf16.mxu0 0
        %3066 = vmatpush2.bf16.msra.mxu0 %v3013
        %3067 = vmatprep.subr.bf16.mxu0 0
        %3068 = vmatpush2.bf16.msra.mxu0 %v3012
        %3069 = vmatprep.subr.bf16.mxu0 0
        %3070 = vmatpush2.bf16.msra.mxu0 %v3011
        %3071 = vmatprep.subr.bf16.mxu0 0
        %3072 = vmatpush2.bf16.msra.mxu0 %v3010
        %3073 = vmatprep.subr.bf16.mxu0 0
        %3074 = vmatpush2.bf16.msra.mxu0 %v3009
        %3075 = vmatprep.subr.bf16.mxu0 0
        %3076 = vmatpush2.bf16.msra.mxu0 %v3008
        %3077 = vmatprep.subr.bf16.mxu0 0
        %3078 = vmatpush2.bf16.msra.mxu0 %v3007
        %3079 = vmatprep.mubr.bf16.mxu0 %v2898
        %3080 = vmatmul.mubr.bf16.gmra.mxu0 %v2897
        %v3081 = vpop.f32.mrf.mxu0
        %v3082 = vadd.f32 %v2825, %v3081
        %v3083 = vpop.f32.mrf.mxu0
        %v3084 = vpop.f32.mrf.mxu0
        %v3085 = vadd.f32 %v2828, %v3084
        %v3086 = vpop.f32.mrf.mxu0
        %3087 = vmatprep.mubr.bf16.mxu0 %v2502
        %3088 = vmatmul.mubr.bf16.gmra.mxu0 %v2501
        %v3089 = vpop.f32.mrf.mxu0
        %v3090 = vadd.f32 %v2833, %v3089
        %v3091 = vpop.f32.mrf.mxu0
        %v3092 = vpop.f32.mrf.mxu0
        %v3093 = vadd.f32 %v2836, %v3092
        %v3094 = vpop.f32.mrf.mxu0
        %3095 = vmatprep.mubr.bf16.mxu0 %v2505
        %3096 = vmatmul.mubr.bf16.gmra.mxu0 %v2504
        %v3097 = vpop.f32.mrf.mxu0
        %v3098 = vadd.f32 %v2841, %v3097
        %v3099 = vpop.f32.mrf.mxu0
        %v3100 = vpop.f32.mrf.mxu0
        %v3101 = vadd.f32 %v2844, %v3100
        %v3102 = vpop.f32.mrf.mxu0
        %3103 = vmatprep.mubr.bf16.mxu0 %v2508
        %3104 = vmatmul.mubr.bf16.gmra.mxu0 %v2507
        %v3105 = vpop.f32.mrf.mxu0
        %v3106 = vadd.f32 %v2849, %v3105
        %v3107 = vpop.f32.mrf.mxu0
        %v3108 = vpop.f32.mrf.mxu0
        %v3109 = vadd.f32 %v2852, %v3108
        %v3110 = vpop.f32.mrf.mxu0
        %3111 = vmatprep.mubr.bf16.mxu0 %v2511
        %3112 = vmatmul.mubr.bf16.gmra.mxu0 %v2510
        %v3113 = vpop.f32.mrf.mxu0
        %v3114 = vadd.f32 %v2857, %v3113
        %v3115 = vpop.f32.mrf.mxu0
        %v3116 = vpop.f32.mrf.mxu0
        %v3117 = vadd.f32 %v2860, %v3116
        %v3118 = vpop.f32.mrf.mxu0
        %3119 = vmatprep.mubr.bf16.mxu0 %v2514
        %3120 = vmatmul.mubr.bf16.gmra.mxu0 %v2513
        %v3121 = vpop.f32.mrf.mxu0
        %v3122 = vadd.f32 %v2865, %v3121
        %v3123 = vpop.f32.mrf.mxu0
        %v3124 = vpop.f32.mrf.mxu0
        %v3125 = vadd.f32 %v2868, %v3124
        %v3126 = vpop.f32.mrf.mxu0
        %3127 = vmatprep.mubr.bf16.mxu0 %v2517
        %3128 = vmatmul.mubr.bf16.gmra.mxu0 %v2516
        %v3129 = vpop.f32.mrf.mxu0
        %v3130 = vadd.f32 %v2873, %v3129
        %v3131 = vpop.f32.mrf.mxu0
        %v3132 = vpop.f32.mrf.mxu0
        %v3133 = vadd.f32 %v2876, %v3132
        %v3134 = vpop.f32.mrf.mxu0
        %3135 = vmatprep.mubr.bf16.mxu0 %v2520
        %3136 = vmatmul.mubr.bf16.gmra.mxu0 %v2519
        %v3137 = vpop.f32.mrf.mxu0
        %v3138 = vadd.f32 %v2881, %v3137
        %v3139 = vpop.f32.mrf.mxu0
        %v3140 = vpop.f32.mrf.mxu0
        %v3141 = vadd.f32 %v2884, %v3140
        %v3142 = vpop.f32.mrf.mxu0
        %3143 = vdwg.mxu0
        %3144 = vmatprep.subr.bf16.mxu0 0
        %3145 = vmatpush1.bf16.msra.mxu0 %v3022
        %3146 = vmatprep.subr.bf16.mxu0 0
        %3147 = vmatpush1.bf16.msra.mxu0 %v3021
        %3148 = vmatprep.subr.bf16.mxu0 0
        %3149 = vmatpush1.bf16.msra.mxu0 %v3020
        %3150 = vmatprep.subr.bf16.mxu0 0
        %3151 = vmatpush1.bf16.msra.mxu0 %v3019
        %3152 = vmatprep.subr.bf16.mxu0 0
        %3153 = vmatpush1.bf16.msra.mxu0 %v3018
        %3154 = vmatprep.subr.bf16.mxu0 0
        %3155 = vmatpush1.bf16.msra.mxu0 %v3017
        %3156 = vmatprep.subr.bf16.mxu0 0
        %3157 = vmatpush1.bf16.msra.mxu0 %v3016
        %3158 = vmatprep.subr.bf16.mxu0 0
        %3159 = vmatpush1.bf16.msra.mxu0 %v3015
        %3160 = vmatprep.subr.bf16.mxu0 0
        %3161 = vmatpush2.bf16.msra.mxu0 0
        %3162 = vmatprep.subr.bf16.mxu0 0
        %3163 = vmatpush2.bf16.msra.mxu0 0
        %3164 = vmatprep.subr.bf16.mxu0 0
        %3165 = vmatpush2.bf16.msra.mxu0 0
        %3166 = vmatprep.subr.bf16.mxu0 0
        %3167 = vmatpush2.bf16.msra.mxu0 0
        %3168 = vmatprep.subr.bf16.mxu0 0
        %3169 = vmatpush2.bf16.msra.mxu0 0
        %3170 = vmatprep.subr.bf16.mxu0 0
        %3171 = vmatpush2.bf16.msra.mxu0 0
        %3172 = vmatprep.subr.bf16.mxu0 0
        %3173 = vmatpush2.bf16.msra.mxu0 0
        %3174 = vmatprep.subr.bf16.mxu0 0
        %3175 = vmatpush2.bf16.msra.mxu0 0
        %3176 = vmatprep.mubr.bf16.mxu0 0
        %3177 = vmatmul.mubr.bf16.gmra.mxu0 %v2899
        %v3178 = vpop.f32.mrf.mxu0
        %v3179 = vadd.f32 %v3082, %v3178
        %v3180 = vpop.f32.mrf.mxu0
        %v3181 = vpop.f32.mrf.mxu0
        %v3182 = vadd.f32 %v3085, %v3181
        %v3183 = vpop.f32.mrf.mxu0
        %3184 = vmatprep.mubr.bf16.mxu0 0
        %3185 = vmatmul.mubr.bf16.gmra.mxu0 %v2503
        %v3186 = vpop.f32.mrf.mxu0
        %v3187 = vadd.f32 %v3090, %v3186
        %v3188 = vpop.f32.mrf.mxu0
        %v3189 = vpop.f32.mrf.mxu0
        %v3190 = vadd.f32 %v3093, %v3189
        %v3191 = vpop.f32.mrf.mxu0
        %3192 = vmatprep.mubr.bf16.mxu0 0
        %3193 = vmatmul.mubr.bf16.gmra.mxu0 %v2506
        %v3194 = vpop.f32.mrf.mxu0
        %v3195 = vadd.f32 %v3098, %v3194
        %v3196 = vpop.f32.mrf.mxu0
        %v3197 = vpop.f32.mrf.mxu0
        %v3198 = vadd.f32 %v3101, %v3197
        %v3199 = vpop.f32.mrf.mxu0
        %3200 = vmatprep.mubr.bf16.mxu0 0
        %3201 = vmatmul.mubr.bf16.gmra.mxu0 %v2509
        %v3202 = vpop.f32.mrf.mxu0
        %v3203 = vadd.f32 %v3106, %v3202
        %v3204 = vpop.f32.mrf.mxu0
        %v3205 = vpop.f32.mrf.mxu0
        %v3206 = vadd.f32 %v3109, %v3205
        %v3207 = vpop.f32.mrf.mxu0
        %3208 = vmatprep.mubr.bf16.mxu0 0
        %3209 = vmatmul.mubr.bf16.gmra.mxu0 %v2512
        %v3210 = vpop.f32.mrf.mxu0
        %v3211 = vadd.f32 %v3114, %v3210
        %v3212 = vpop.f32.mrf.mxu0
        %v3213 = vpop.f32.mrf.mxu0
        %v3214 = vadd.f32 %v3117, %v3213
        %v3215 = vpop.f32.mrf.mxu0
        %3216 = vmatprep.mubr.bf16.mxu0 0
        %3217 = vmatmul.mubr.bf16.gmra.mxu0 %v2515
        %v3218 = vpop.f32.mrf.mxu0
        %v3219 = vadd.f32 %v3122, %v3218
        %v3220 = vpop.f32.mrf.mxu0
        %v3221 = vpop.f32.mrf.mxu0
        %v3222 = vadd.f32 %v3125, %v3221
        %v3223 = vpop.f32.mrf.mxu0
        %3224 = vmatprep.mubr.bf16.mxu0 0
        %3225 = vmatmul.mubr.bf16.gmra.mxu0 %v2518
        %v3226 = vpop.f32.mrf.mxu0
        %v3227 = vadd.f32 %v3130, %v3226
        %v3228 = vpop.f32.mrf.mxu0
        %v3229 = vpop.f32.mrf.mxu0
        %v3230 = vadd.f32 %v3133, %v3229
        %v3231 = vpop.f32.mrf.mxu0
        %3232 = vmatprep.mubr.bf16.mxu0 0
        %3233 = vmatmul.mubr.bf16.gmra.mxu0 %v2521
        %v3234 = vpop.f32.mrf.mxu0
        %v3235 = vadd.f32 %v3138, %v3234
        %v3236 = vpop.f32.mrf.mxu0
        %v3237 = vpop.f32.mrf.mxu0
        %v3238 = vadd.f32 %v3141, %v3237
        %v3239 = vpop.f32.mrf.mxu0
        %3240 = vdwg.mxu0
        %v3241 = vld [vmem:[#allocation2 + $0x30] sm:$0xff]
        %v3242 = vld [vmem:[#allocation2 + $0x38] sm:$0xf]
        %v3243 = vld [vmem:[#allocation2 + $0x3c] sm:$0xff]
        %v3244 = vld [vmem:[#allocation2 + $0x44] sm:$0xf]
        %v3245 = vld [vmem:[#allocation2 + $0x48] sm:$0xff]
        %v3246 = vld [vmem:[#allocation2 + $0x50] sm:$0xf]
        %v3247 = vld [vmem:[#allocation2 + $0x54] sm:$0xff]
        %v3248 = vld [vmem:[#allocation2 + $0x5c] sm:$0xf]
        %v3249 = vld [vmem:[#allocation2 + $0x60] sm:$0xff]
        %v3250 = vld [vmem:[#allocation2 + $0x68] sm:$0xf]
        %v3251 = vld [vmem:[#allocation2 + $0x6c] sm:$0xff]
        %v3252 = vld [vmem:[#allocation2 + $0x74] sm:$0xf]
        %v3253 = vld [vmem:[#allocation2 + $0x78] sm:$0xff]
        %v3254 = vld [vmem:[#allocation2 + $0x80] sm:$0xf]
        %v3255 = vld [vmem:[#allocation2 + $0x84] sm:$0xff]
        %v3256 = vld [vmem:[#allocation2 + $0x8c] sm:$0xf]
        %v3257 = vld [vmem:[#allocation2 + $0x90] sm:$0xff]
        %v3258 = vld [vmem:[#allocation2 + $0x98] sm:$0xf]
        %v3259 = vld [vmem:[#allocation2 + $0x9c] sm:$0xff]
        %v3260 = vld [vmem:[#allocation2 + $0xa4] sm:$0xf]
        %v3261 = vld [vmem:[#allocation2 + $0xa8] sm:$0xff]
        %v3262 = vld [vmem:[#allocation2 + $0xb0] sm:$0xf]
        %v3263 = vld [vmem:[#allocation2 + $0xb4] sm:$0xff]
        %v3264 = vld [vmem:[#allocation2 + $0xbc] sm:$0xf]
        %v3265 = vld [vmem:[#allocation2 + $0xc0] sm:$0xff]
        %v3266 = vld [vmem:[#allocation2 + $0xc8] sm:$0xf]
        %v3267 = vld [vmem:[#allocation2 + $0xcc] sm:$0xff]
        %v3268 = vld [vmem:[#allocation2 + $0xd4] sm:$0xf]
        %v3269 = vld [vmem:[#allocation2 + $0xd8] sm:$0xff]
        %v3270 = vld [vmem:[#allocation2 + $0xe0] sm:$0xf]
        %v3271 = vld [vmem:[#allocation2 + $0xe4] sm:$0xff]
        %v3272 = vld [vmem:[#allocation2 + $0xec] sm:$0xf]
        %s3273 = scalar_lea.vmem [#allocation9], 384
        %v3274 = vld [vmem:[%s3273] sm:$0xf]
        %v3275 = vld [vmem:[%s3273 + $0x4] sm:$0xf]
        %v3276 = vld [vmem:[%s3273 + $0x8] sm:$0xf]
        %v3277 = vld [vmem:[%s3273 + $0xc] sm:$0xf]
        %v3278 = vld [vmem:[%s3273 + $0x10] sm:$0xf]
        %v3279 = vld [vmem:[%s3273 + $0x14] sm:$0xf]
        %v3280 = vld [vmem:[%s3273 + $0x18] sm:$0xf]
        %v3281 = vld [vmem:[%s3273 + $0x1c] sm:$0xf]
        %v3282 = vld [vmem:[%s3273 + $0x20] sm:$0xf]
        %v3283 = vld [vmem:[%s3273 + $0x24] sm:$0xf]
        %v3284 = vld [vmem:[%s3273 + $0x28] sm:$0xf]
        %v3285 = vld [vmem:[%s3273 + $0x2c] sm:$0xf]
        %v3286 = vld [vmem:[%s3273 + $0x30] sm:$0xf]
        %v3287 = vld [vmem:[%s3273 + $0x34] sm:$0xf]
        %v3288 = vld [vmem:[%s3273 + $0x38] sm:$0xf]
        %v3289 = vld [vmem:[%s3273 + $0x3c] sm:$0xf]
        %v3290 = vld [vmem:[%s3273 + $0x40] sm:$0xf]
        %v3291 = vld [vmem:[%s3273 + $0x44] sm:$0xf]
        %v3292 = vld [vmem:[%s3273 + $0x48] sm:$0xf]
        %v3293 = vld [vmem:[%s3273 + $0x4c] sm:$0xf]
        %v3294 = vld [vmem:[%s3273 + $0x50] sm:$0xf]
        %v3295 = vld [vmem:[%s3273 + $0x54] sm:$0xf]
        %v3296 = vld [vmem:[%s3273 + $0x58] sm:$0xf]
        %v3297 = vld [vmem:[%s3273 + $0x5c] sm:$0xf]
        %v3298 = vld [vmem:[%s3273 + $0x60] sm:$0xf]
        %v3299 = vld [vmem:[%s3273 + $0x64] sm:$0xf]
        %v3300 = vld [vmem:[%s3273 + $0x68] sm:$0xf]
        %v3301 = vld [vmem:[%s3273 + $0x6c] sm:$0xf]
        %v3302 = vld [vmem:[%s3273 + $0x70] sm:$0xf]
        %v3303 = vld [vmem:[%s3273 + $0x74] sm:$0xf]
        %v3304 = vld [vmem:[%s3273 + $0x78] sm:$0xf]
        %v3305 = vld [vmem:[%s3273 + $0x7c] sm:$0xf]
        %v3306 = vld [vmem:[%s3273 + $0x80] sm:$0xf]
        %v3307 = vld [vmem:[%s3273 + $0x84] sm:$0xf]
        %v3308 = vld [vmem:[%s3273 + $0x88] sm:$0xf]
        %v3309 = vld [vmem:[%s3273 + $0x8c] sm:$0xf]
        %v3310 = vld [vmem:[%s3273 + $0x90] sm:$0xf]
        %v3311 = vld [vmem:[%s3273 + $0x94] sm:$0xf]
        %v3312 = vld [vmem:[%s3273 + $0x98] sm:$0xf]
        %v3313 = vld [vmem:[%s3273 + $0x9c] sm:$0xf]
        %v3314 = vld [vmem:[%s3273 + $0xa0] sm:$0xf]
        %v3315 = vld [vmem:[%s3273 + $0xa4] sm:$0xf]
        %v3316 = vld [vmem:[%s3273 + $0xa8] sm:$0xf]
        %v3317 = vld [vmem:[%s3273 + $0xac] sm:$0xf]
        %v3318 = vld [vmem:[%s3273 + $0xb0] sm:$0xf]
        %v3319 = vld [vmem:[%s3273 + $0xb4] sm:$0xf]
        %v3320 = vld [vmem:[%s3273 + $0xb8] sm:$0xf]
        %v3321 = vld [vmem:[%s3273 + $0xbc] sm:$0xf]
        %v3354 = vunpack.c.l.b16 %v3241
        %v3355 = vunpack.c.h.b16 %v3241
        %v3356 = vunpack.c.l.b16 %v3242
        %v3357 = vunpack.c.l.b16 %v3243
        %v3358 = vunpack.c.h.b16 %v3243
        %v3359 = vunpack.c.l.b16 %v3244
        %v3360 = vunpack.c.l.b16 %v3245
        %v3361 = vunpack.c.h.b16 %v3245
        %v3362 = vunpack.c.l.b16 %v3246
        %v3363 = vunpack.c.l.b16 %v3247
        %v3364 = vunpack.c.h.b16 %v3247
        %v3365 = vunpack.c.l.b16 %v3248
        %v3366 = vunpack.c.l.b16 %v3249
        %v3367 = vunpack.c.h.b16 %v3249
        %v3368 = vunpack.c.l.b16 %v3250
        %v3369 = vunpack.c.l.b16 %v3251
        %v3370 = vunpack.c.h.b16 %v3251
        %v3371 = vunpack.c.l.b16 %v3252
        %v3372 = vunpack.c.l.b16 %v3253
        %v3373 = vunpack.c.h.b16 %v3253
        %v3374 = vunpack.c.l.b16 %v3254
        %v3375 = vunpack.c.l.b16 %v3255
        %v3376 = vunpack.c.h.b16 %v3255
        %v3377 = vunpack.c.l.b16 %v3256
        %v3378 = vunpack.c.l.b16 %v3257
        %v3379 = vunpack.c.h.b16 %v3257
        %v3380 = vunpack.c.l.b16 %v3258
        %v3381 = vunpack.c.l.b16 %v3259
        %v3382 = vunpack.c.h.b16 %v3259
        %v3383 = vunpack.c.l.b16 %v3260
        %v3384 = vunpack.c.l.b16 %v3261
        %v3385 = vunpack.c.h.b16 %v3261
        %v3386 = vunpack.c.l.b16 %v3262
        %v3387 = vunpack.c.l.b16 %v3263
        %v3388 = vunpack.c.h.b16 %v3263
        %v3389 = vunpack.c.l.b16 %v3264
        %v3390 = vunpack.c.l.b16 %v3265
        %v3391 = vunpack.c.h.b16 %v3265
        %v3392 = vunpack.c.l.b16 %v3266
        %v3393 = vunpack.c.l.b16 %v3267
        %v3394 = vunpack.c.h.b16 %v3267
        %v3395 = vunpack.c.l.b16 %v3268
        %v3396 = vunpack.c.l.b16 %v3269
        %v3397 = vunpack.c.h.b16 %v3269
        %v3398 = vunpack.c.l.b16 %v3270
        %v3399 = vunpack.c.l.b16 %v3271
        %v3400 = vunpack.c.h.b16 %v3271
        %v3401 = vunpack.c.l.b16 %v3272
        %v3402 = vpack.c.b16 %v3357, %v3354
        %v3403 = vpack.c.b16 %v3358, %v3355
        %v3404 = vpack.c.b16 %v3359, %v3356
        %v3405 = vpack.c.b16 %v3363, %v3360
        %v3406 = vpack.c.b16 %v3364, %v3361
        %v3407 = vpack.c.b16 %v3365, %v3362
        %v3408 = vpack.c.b16 %v3369, %v3366
        %v3409 = vpack.c.b16 %v3370, %v3367
        %v3410 = vpack.c.b16 %v3371, %v3368
        %v3411 = vpack.c.b16 %v3375, %v3372
        %v3412 = vpack.c.b16 %v3376, %v3373
        %v3413 = vpack.c.b16 %v3377, %v3374
        %v3414 = vpack.c.b16 %v3381, %v3378
        %v3415 = vpack.c.b16 %v3382, %v3379
        %v3416 = vpack.c.b16 %v3383, %v3380
        %v3417 = vpack.c.b16 %v3387, %v3384
        %v3418 = vpack.c.b16 %v3388, %v3385
        %v3419 = vpack.c.b16 %v3389, %v3386
        %v3420 = vpack.c.b16 %v3393, %v3390
        %v3421 = vpack.c.b16 %v3394, %v3391
        %v3422 = vpack.c.b16 %v3395, %v3392
        %v3423 = vpack.c.b16 %v3399, %v3396
        %v3424 = vpack.c.b16 %v3400, %v3397
        %v3425 = vpack.c.b16 %v3401, %v3398
        %v3498 = vunpack.c.l.b16 %v3274
        %v3499 = vunpack.c.l.b16 %v3275
        %v3500 = vunpack.c.l.b16 %v3276
        %v3501 = vunpack.c.l.b16 %v3277
        %v3502 = vunpack.c.l.b16 %v3278
        %v3503 = vunpack.c.l.b16 %v3279
        %v3504 = vunpack.c.l.b16 %v3280
        %v3505 = vunpack.c.l.b16 %v3281
        %v3506 = vunpack.c.l.b16 %v3282
        %v3507 = vunpack.c.l.b16 %v3283
        %v3508 = vunpack.c.l.b16 %v3284
        %v3509 = vunpack.c.l.b16 %v3285
        %v3510 = vunpack.c.l.b16 %v3286
        %v3511 = vunpack.c.l.b16 %v3287
        %v3512 = vunpack.c.l.b16 %v3288
        %v3513 = vunpack.c.l.b16 %v3289
        %v3514 = vunpack.c.l.b16 %v3290
        %v3515 = vunpack.c.l.b16 %v3291
        %v3516 = vunpack.c.l.b16 %v3292
        %v3517 = vunpack.c.l.b16 %v3293
        %v3518 = vunpack.c.l.b16 %v3294
        %v3519 = vunpack.c.l.b16 %v3295
        %v3520 = vunpack.c.l.b16 %v3296
        %v3521 = vunpack.c.l.b16 %v3297
        %v3522 = vunpack.c.l.b16 %v3298
        %v3523 = vunpack.c.l.b16 %v3299
        %v3524 = vunpack.c.l.b16 %v3300
        %v3525 = vunpack.c.l.b16 %v3301
        %v3526 = vunpack.c.l.b16 %v3302
        %v3527 = vunpack.c.l.b16 %v3303
        %v3528 = vunpack.c.l.b16 %v3304
        %v3529 = vunpack.c.l.b16 %v3305
        %v3530 = vunpack.c.l.b16 %v3306
        %v3531 = vunpack.c.l.b16 %v3307
        %v3532 = vunpack.c.l.b16 %v3308
        %v3533 = vunpack.c.l.b16 %v3309
        %v3534 = vunpack.c.l.b16 %v3310
        %v3535 = vunpack.c.l.b16 %v3311
        %v3536 = vunpack.c.l.b16 %v3312
        %v3537 = vunpack.c.l.b16 %v3313
        %v3538 = vunpack.c.l.b16 %v3314
        %v3539 = vunpack.c.l.b16 %v3315
        %v3540 = vunpack.c.l.b16 %v3316
        %v3541 = vunpack.c.l.b16 %v3317
        %v3542 = vunpack.c.l.b16 %v3318
        %v3543 = vunpack.c.l.b16 %v3319
        %v3544 = vunpack.c.l.b16 %v3320
        %v3545 = vunpack.c.l.b16 %v3321
        %v3546 = vpack.c.b16 %v3499, %v3498
        %v3547 = vpack.c.b16 %v3501, %v3500
        %v3548 = vpack.c.b16 %v3503, %v3502
        %v3549 = vpack.c.b16 %v3505, %v3504
        %v3550 = vpack.c.b16 %v3507, %v3506
        %v3551 = vpack.c.b16 %v3509, %v3508
        %v3552 = vpack.c.b16 %v3511, %v3510
        %v3553 = vpack.c.b16 %v3513, %v3512
        %v3554 = vpack.c.b16 %v3515, %v3514
        %v3555 = vpack.c.b16 %v3517, %v3516
        %v3556 = vpack.c.b16 %v3519, %v3518
        %v3557 = vpack.c.b16 %v3521, %v3520
        %v3558 = vpack.c.b16 %v3523, %v3522
        %v3559 = vpack.c.b16 %v3525, %v3524
        %v3560 = vpack.c.b16 %v3527, %v3526
        %v3561 = vpack.c.b16 %v3529, %v3528
        %v3562 = vpack.c.b16 %v3531, %v3530
        %v3563 = vpack.c.b16 %v3533, %v3532
        %v3564 = vpack.c.b16 %v3535, %v3534
        %v3565 = vpack.c.b16 %v3537, %v3536
        %v3566 = vpack.c.b16 %v3539, %v3538
        %v3567 = vpack.c.b16 %v3541, %v3540
        %v3568 = vpack.c.b16 %v3543, %v3542
        %v3569 = vpack.c.b16 %v3545, %v3544
        %3594 = vmatprep.subr.bf16.mxu0 0
        %3595 = vmatpush1.bf16.msra.mxu0 %v3553
        %3596 = vmatprep.subr.bf16.mxu0 0
        %3597 = vmatpush1.bf16.msra.mxu0 %v3552
        %3598 = vmatprep.subr.bf16.mxu0 0
        %3599 = vmatpush1.bf16.msra.mxu0 %v3551
        %3600 = vmatprep.subr.bf16.mxu0 0
        %3601 = vmatpush1.bf16.msra.mxu0 %v3550
        %3602 = vmatprep.subr.bf16.mxu0 0
        %3603 = vmatpush1.bf16.msra.mxu0 %v3549
        %3604 = vmatprep.subr.bf16.mxu0 0
        %3605 = vmatpush1.bf16.msra.mxu0 %v3548
        %3606 = vmatprep.subr.bf16.mxu0 0
        %3607 = vmatpush1.bf16.msra.mxu0 %v3547
        %3608 = vmatprep.subr.bf16.mxu0 0
        %3609 = vmatpush1.bf16.msra.mxu0 %v3546
        %3610 = vmatprep.subr.bf16.mxu0 0
        %3611 = vmatpush2.bf16.msra.mxu0 %v3561
        %3612 = vmatprep.subr.bf16.mxu0 0
        %3613 = vmatpush2.bf16.msra.mxu0 %v3560
        %3614 = vmatprep.subr.bf16.mxu0 0
        %3615 = vmatpush2.bf16.msra.mxu0 %v3559
        %3616 = vmatprep.subr.bf16.mxu0 0
        %3617 = vmatpush2.bf16.msra.mxu0 %v3558
        %3618 = vmatprep.subr.bf16.mxu0 0
        %3619 = vmatpush2.bf16.msra.mxu0 %v3557
        %3620 = vmatprep.subr.bf16.mxu0 0
        %3621 = vmatpush2.bf16.msra.mxu0 %v3556
        %3622 = vmatprep.subr.bf16.mxu0 0
        %3623 = vmatpush2.bf16.msra.mxu0 %v3555
        %3624 = vmatprep.subr.bf16.mxu0 0
        %3625 = vmatpush2.bf16.msra.mxu0 %v3554
        %3626 = vmatprep.mubr.bf16.mxu0 %v3403
        %3627 = vmatmul.mubr.bf16.gmra.mxu0 %v3402
        %v3628 = vpop.f32.mrf.mxu0
        %v3629 = vadd.f32 0.0, %v3628
        %v3630 = vpop.f32.mrf.mxu0
        %v3631 = vpop.f32.mrf.mxu0
        %v3632 = vadd.f32 0.0, %v3631
        %v3633 = vpop.f32.mrf.mxu0
        %3634 = vmatprep.mubr.bf16.mxu0 %v3406
        %3635 = vmatmul.mubr.bf16.gmra.mxu0 %v3405
        %v3636 = vpop.f32.mrf.mxu0
        %v3637 = vadd.f32 0.0, %v3636
        %v3638 = vpop.f32.mrf.mxu0
        %v3639 = vpop.f32.mrf.mxu0
        %v3640 = vadd.f32 0.0, %v3639
        %v3641 = vpop.f32.mrf.mxu0
        %3642 = vmatprep.mubr.bf16.mxu0 %v3409
        %3643 = vmatmul.mubr.bf16.gmra.mxu0 %v3408
        %v3644 = vpop.f32.mrf.mxu0
        %v3645 = vadd.f32 0.0, %v3644
        %v3646 = vpop.f32.mrf.mxu0
        %v3647 = vpop.f32.mrf.mxu0
        %v3648 = vadd.f32 0.0, %v3647
        %v3649 = vpop.f32.mrf.mxu0
        %3650 = vmatprep.mubr.bf16.mxu0 %v3412
        %3651 = vmatmul.mubr.bf16.gmra.mxu0 %v3411
        %v3652 = vpop.f32.mrf.mxu0
        %v3653 = vadd.f32 0.0, %v3652
        %v3654 = vpop.f32.mrf.mxu0
        %v3655 = vpop.f32.mrf.mxu0
        %v3656 = vadd.f32 0.0, %v3655
        %v3657 = vpop.f32.mrf.mxu0
        %3658 = vmatprep.mubr.bf16.mxu0 %v3415
        %3659 = vmatmul.mubr.bf16.gmra.mxu0 %v3414
        %v3660 = vpop.f32.mrf.mxu0
        %v3661 = vadd.f32 0.0, %v3660
        %v3662 = vpop.f32.mrf.mxu0
        %v3663 = vpop.f32.mrf.mxu0
        %v3664 = vadd.f32 0.0, %v3663
        %v3665 = vpop.f32.mrf.mxu0
        %3666 = vmatprep.mubr.bf16.mxu0 %v3418
        %3667 = vmatmul.mubr.bf16.gmra.mxu0 %v3417
        %v3668 = vpop.f32.mrf.mxu0
        %v3669 = vadd.f32 0.0, %v3668
        %v3670 = vpop.f32.mrf.mxu0
        %v3671 = vpop.f32.mrf.mxu0
        %v3672 = vadd.f32 0.0, %v3671
        %v3673 = vpop.f32.mrf.mxu0
        %3674 = vmatprep.mubr.bf16.mxu0 %v3421
        %3675 = vmatmul.mubr.bf16.gmra.mxu0 %v3420
        %v3676 = vpop.f32.mrf.mxu0
        %v3677 = vadd.f32 0.0, %v3676
        %v3678 = vpop.f32.mrf.mxu0
        %v3679 = vpop.f32.mrf.mxu0
        %v3680 = vadd.f32 0.0, %v3679
        %v3681 = vpop.f32.mrf.mxu0
        %3682 = vmatprep.mubr.bf16.mxu0 %v3424
        %3683 = vmatmul.mubr.bf16.gmra.mxu0 %v3423
        %v3684 = vpop.f32.mrf.mxu0
        %v3685 = vadd.f32 0.0, %v3684
        %v3686 = vpop.f32.mrf.mxu0
        %v3687 = vpop.f32.mrf.mxu0
        %v3688 = vadd.f32 0.0, %v3687
        %v3689 = vpop.f32.mrf.mxu0
        %3690 = vdwg.mxu0
        %3691 = vmatprep.subr.bf16.mxu0 0
        %3692 = vmatpush1.bf16.msra.mxu0 %v3569
        %3693 = vmatprep.subr.bf16.mxu0 0
        %3694 = vmatpush1.bf16.msra.mxu0 %v3568
        %3695 = vmatprep.subr.bf16.mxu0 0
        %3696 = vmatpush1.bf16.msra.mxu0 %v3567
        %3697 = vmatprep.subr.bf16.mxu0 0
        %3698 = vmatpush1.bf16.msra.mxu0 %v3566
        %3699 = vmatprep.subr.bf16.mxu0 0
        %3700 = vmatpush1.bf16.msra.mxu0 %v3565
        %3701 = vmatprep.subr.bf16.mxu0 0
        %3702 = vmatpush1.bf16.msra.mxu0 %v3564
        %3703 = vmatprep.subr.bf16.mxu0 0
        %3704 = vmatpush1.bf16.msra.mxu0 %v3563
        %3705 = vmatprep.subr.bf16.mxu0 0
        %3706 = vmatpush1.bf16.msra.mxu0 %v3562
        %3707 = vmatprep.subr.bf16.mxu0 0
        %3708 = vmatpush2.bf16.msra.mxu0 0
        %3709 = vmatprep.subr.bf16.mxu0 0
        %3710 = vmatpush2.bf16.msra.mxu0 0
        %3711 = vmatprep.subr.bf16.mxu0 0
        %3712 = vmatpush2.bf16.msra.mxu0 0
        %3713 = vmatprep.subr.bf16.mxu0 0
        %3714 = vmatpush2.bf16.msra.mxu0 0
        %3715 = vmatprep.subr.bf16.mxu0 0
        %3716 = vmatpush2.bf16.msra.mxu0 0
        %3717 = vmatprep.subr.bf16.mxu0 0
        %3718 = vmatpush2.bf16.msra.mxu0 0
        %3719 = vmatprep.subr.bf16.mxu0 0
        %3720 = vmatpush2.bf16.msra.mxu0 0
        %3721 = vmatprep.subr.bf16.mxu0 0
        %3722 = vmatpush2.bf16.msra.mxu0 0
        %3723 = vmatprep.mubr.bf16.mxu0 0
        %3724 = vmatmul.mubr.bf16.gmra.mxu0 %v3404
        %v3725 = vpop.f32.mrf.mxu0
        %v3726 = vadd.f32 %v3629, %v3725
        %v3727 = vpop.f32.mrf.mxu0
        %v3728 = vpop.f32.mrf.mxu0
        %v3729 = vadd.f32 %v3632, %v3728
        %v3730 = vpop.f32.mrf.mxu0
        %3731 = vmatprep.mubr.bf16.mxu0 0
        %3732 = vmatmul.mubr.bf16.gmra.mxu0 %v3407
        %v3733 = vpop.f32.mrf.mxu0
        %v3734 = vadd.f32 %v3637, %v3733
        %v3735 = vpop.f32.mrf.mxu0
        %v3736 = vpop.f32.mrf.mxu0
        %v3737 = vadd.f32 %v3640, %v3736
        %v3738 = vpop.f32.mrf.mxu0
        %3739 = vmatprep.mubr.bf16.mxu0 0
        %3740 = vmatmul.mubr.bf16.gmra.mxu0 %v3410
        %v3741 = vpop.f32.mrf.mxu0
        %v3742 = vadd.f32 %v3645, %v3741
        %v3743 = vpop.f32.mrf.mxu0
        %v3744 = vpop.f32.mrf.mxu0
        %v3745 = vadd.f32 %v3648, %v3744
        %v3746 = vpop.f32.mrf.mxu0
        %3747 = vmatprep.mubr.bf16.mxu0 0
        %3748 = vmatmul.mubr.bf16.gmra.mxu0 %v3413
        %v3749 = vpop.f32.mrf.mxu0
        %v3750 = vadd.f32 %v3653, %v3749
        %v3751 = vpop.f32.mrf.mxu0
        %v3752 = vpop.f32.mrf.mxu0
        %v3753 = vadd.f32 %v3656, %v3752
        %v3754 = vpop.f32.mrf.mxu0
        %3755 = vmatprep.mubr.bf16.mxu0 0
        %3756 = vmatmul.mubr.bf16.gmra.mxu0 %v3416
        %v3757 = vpop.f32.mrf.mxu0
        %v3758 = vadd.f32 %v3661, %v3757
        %v3759 = vpop.f32.mrf.mxu0
        %v3760 = vpop.f32.mrf.mxu0
        %v3761 = vadd.f32 %v3664, %v3760
        %v3762 = vpop.f32.mrf.mxu0
        %3763 = vmatprep.mubr.bf16.mxu0 0
        %3764 = vmatmul.mubr.bf16.gmra.mxu0 %v3419
        %v3765 = vpop.f32.mrf.mxu0
        %v3766 = vadd.f32 %v3669, %v3765
        %v3767 = vpop.f32.mrf.mxu0
        %v3768 = vpop.f32.mrf.mxu0
        %v3769 = vadd.f32 %v3672, %v3768
        %v3770 = vpop.f32.mrf.mxu0
        %3771 = vmatprep.mubr.bf16.mxu0 0
        %3772 = vmatmul.mubr.bf16.gmra.mxu0 %v3422
        %v3773 = vpop.f32.mrf.mxu0
        %v3774 = vadd.f32 %v3677, %v3773
        %v3775 = vpop.f32.mrf.mxu0
        %v3776 = vpop.f32.mrf.mxu0
        %v3777 = vadd.f32 %v3680, %v3776
        %v3778 = vpop.f32.mrf.mxu0
        %3779 = vmatprep.mubr.bf16.mxu0 0
        %3780 = vmatmul.mubr.bf16.gmra.mxu0 %v3425
        %v3781 = vpop.f32.mrf.mxu0
        %v3782 = vadd.f32 %v3685, %v3781
        %v3783 = vpop.f32.mrf.mxu0
        %v3784 = vpop.f32.mrf.mxu0
        %v3785 = vadd.f32 %v3688, %v3784
        %v3786 = vpop.f32.mrf.mxu0
        %3787 = vdwg.mxu0
        %v3788 = vadd.f32 %v3179, %v3726
        %v3789 = vadd.f32 %v3182, %v3729
        %v3790 = vadd.f32 %v3187, %v3734
        %v3791 = vadd.f32 %v3190, %v3737
        %v3792 = vadd.f32 %v3195, %v3742
        %v3793 = vadd.f32 %v3198, %v3745
        %v3794 = vadd.f32 %v3203, %v3750
        %v3795 = vadd.f32 %v3206, %v3753
        %v3796 = vadd.f32 %v3211, %v3758
        %v3797 = vadd.f32 %v3214, %v3761
        %v3798 = vadd.f32 %v3219, %v3766
        %v3799 = vadd.f32 %v3222, %v3769
        %v3800 = vadd.f32 %v3227, %v3774
        %v3801 = vadd.f32 %v3230, %v3777
        %v3802 = vadd.f32 %v3235, %v3782
        %v3803 = vadd.f32 %v3238, %v3785
        %v3804 = vld [vmem:[%s5] sm:$0x1]
        %v3806 = vlaneseq
        %v3807 = vshrl.u32 %v3806, 7
        %v3808 = vsub.s32 0, %v3807
        %v3809 = vrot.slane %v3804, %v3808
        %v3811 = vadd.f32 %v3788, %v3809
        %v3812 = vadd.f32 %v3789, %v3809
        %v3813 = vadd.f32 %v3790, %v3809
        %v3814 = vadd.f32 %v3791, %v3809
        %v3815 = vadd.f32 %v3792, %v3809
        %v3816 = vadd.f32 %v3793, %v3809
        %v3817 = vadd.f32 %v3794, %v3809
        %v3818 = vadd.f32 %v3795, %v3809
        %v3819 = vadd.f32 %v3796, %v3809
        %v3820 = vadd.f32 %v3797, %v3809
        %v3821 = vadd.f32 %v3798, %v3809
        %v3822 = vadd.f32 %v3799, %v3809
        %v3823 = vadd.f32 %v3800, %v3809
        %v3824 = vadd.f32 %v3801, %v3809
        %v3825 = vadd.f32 %v3802, %v3809
        %v3826 = vadd.f32 %v3803, %v3809
        %v3827 = vmax.f32 %v3811, 0.0
        %v3828 = vmax.f32 %v3812, 0.0
        %v3829 = vmax.f32 %v3813, 0.0
        %v3830 = vmax.f32 %v3814, 0.0
        %v3831 = vmax.f32 %v3815, 0.0
        %v3832 = vmax.f32 %v3816, 0.0
        %v3833 = vmax.f32 %v3817, 0.0
        %v3834 = vmax.f32 %v3818, 0.0
        %v3835 = vmax.f32 %v3819, 0.0
        %v3836 = vmax.f32 %v3820, 0.0
        %v3837 = vmax.f32 %v3821, 0.0
        %v3838 = vmax.f32 %v3822, 0.0
        %v3839 = vmax.f32 %v3823, 0.0
        %v3840 = vmax.f32 %v3824, 0.0
        %v3841 = vmax.f32 %v3825, 0.0
        %v3842 = vmax.f32 %v3826, 0.0
        %v3843 = vpack.c.bf16 %v3828, %v3827
        %v3844 = vpack.c.bf16 %v3830, %v3829
        %v3845 = vpack.c.bf16 %v3832, %v3831
        %v3846 = vpack.c.bf16 %v3834, %v3833
        %v3847 = vpack.c.bf16 %v3836, %v3835
        %v3848 = vpack.c.bf16 %v3838, %v3837
        %v3849 = vpack.c.bf16 %v3840, %v3839
        %v3850 = vpack.c.bf16 %v3842, %v3841
        %v3851 = vld [vmem:[#allocation11] sm:$0xf]
        %v3852 = vld [vmem:[#allocation11 + $0x4] sm:$0xf]
        %v3853 = vld [vmem:[#allocation11 + $0x8] sm:$0xf]
        %v3854 = vld [vmem:[#allocation11 + $0xc] sm:$0xf]
        %v3855 = vld [vmem:[#allocation11 + $0x10] sm:$0xf]
        %v3856 = vld [vmem:[#allocation11 + $0x14] sm:$0xf]
        %v3857 = vld [vmem:[#allocation11 + $0x18] sm:$0xf]
        %v3858 = vld [vmem:[#allocation11 + $0x1c] sm:$0xf]
        %v3859 = vld [vmem:[#allocation11 + $0x20] sm:$0xf]
        %v3860 = vld [vmem:[#allocation11 + $0x24] sm:$0xf]
        %v3861 = vld [vmem:[#allocation11 + $0x28] sm:$0xf]
        %v3862 = vld [vmem:[#allocation11 + $0x2c] sm:$0xf]
        %v3863 = vld [vmem:[#allocation11 + $0x30] sm:$0xf]
        %v3864 = vld [vmem:[#allocation11 + $0x34] sm:$0xf]
        %v3865 = vld [vmem:[#allocation11 + $0x38] sm:$0xf]
        %v3866 = vld [vmem:[#allocation11 + $0x3c] sm:$0xf]
        %v3867 = vld [vmem:[%s7] sm:$0x1]
        %v3869 = vlaneseq
        %v3870 = vshrl.u32 %v3869, 7
        %v3871 = vsub.s32 0, %v3870
        %v3872 = vrot.slane %v3867, %v3871
        %v3890 = vunpack.c.l.b16 %v3851
        %v3891 = vunpack.c.l.b16 %v3852
        %v3892 = vunpack.c.l.b16 %v3853
        %v3893 = vunpack.c.l.b16 %v3854
        %v3894 = vunpack.c.l.b16 %v3855
        %v3895 = vunpack.c.l.b16 %v3856
        %v3896 = vunpack.c.l.b16 %v3857
        %v3897 = vunpack.c.l.b16 %v3858
        %v3898 = vunpack.c.l.b16 %v3859
        %v3899 = vunpack.c.l.b16 %v3860
        %v3900 = vunpack.c.l.b16 %v3861
        %v3901 = vunpack.c.l.b16 %v3862
        %v3902 = vunpack.c.l.b16 %v3863
        %v3903 = vunpack.c.l.b16 %v3864
        %v3904 = vunpack.c.l.b16 %v3865
        %v3905 = vunpack.c.l.b16 %v3866
        %v3906 = vpack.c.b16 %v3891, %v3890
        %v3907 = vpack.c.b16 %v3893, %v3892
        %v3908 = vpack.c.b16 %v3895, %v3894
        %v3909 = vpack.c.b16 %v3897, %v3896
        %v3910 = vpack.c.b16 %v3899, %v3898
        %v3911 = vpack.c.b16 %v3901, %v3900
        %v3912 = vpack.c.b16 %v3903, %v3902
        %v3913 = vpack.c.b16 %v3905, %v3904
        %3922 = vmatprep.subr.bf16.mxu0 0
        %3923 = vmatpush1.bf16.msra.mxu0 %v3913
        %3924 = vmatprep.subr.bf16.mxu0 0
        %3925 = vmatpush1.bf16.msra.mxu0 %v3912
        %3926 = vmatprep.subr.bf16.mxu0 0
        %3927 = vmatpush1.bf16.msra.mxu0 %v3911
        %3928 = vmatprep.subr.bf16.mxu0 0
        %3929 = vmatpush1.bf16.msra.mxu0 %v3910
        %3930 = vmatprep.subr.bf16.mxu0 0
        %3931 = vmatpush1.bf16.msra.mxu0 %v3909
        %3932 = vmatprep.subr.bf16.mxu0 0
        %3933 = vmatpush1.bf16.msra.mxu0 %v3908
        %3934 = vmatprep.subr.bf16.mxu0 0
        %3935 = vmatpush1.bf16.msra.mxu0 %v3907
        %3936 = vmatprep.subr.bf16.mxu0 0
        %3937 = vmatpush1.bf16.msra.mxu0 %v3906
        %3938 = vmatprep.subr.bf16.mxu0 0
        %3939 = vmatpush2.bf16.msra.mxu0 0
        %3940 = vmatprep.subr.bf16.mxu0 0
        %3941 = vmatpush2.bf16.msra.mxu0 0
        %3942 = vmatprep.subr.bf16.mxu0 0
        %3943 = vmatpush2.bf16.msra.mxu0 0
        %3944 = vmatprep.subr.bf16.mxu0 0
        %3945 = vmatpush2.bf16.msra.mxu0 0
        %3946 = vmatprep.subr.bf16.mxu0 0
        %3947 = vmatpush2.bf16.msra.mxu0 0
        %3948 = vmatprep.subr.bf16.mxu0 0
        %3949 = vmatpush2.bf16.msra.mxu0 0
        %3950 = vmatprep.subr.bf16.mxu0 0
        %3951 = vmatpush2.bf16.msra.mxu0 0
        %3952 = vmatprep.subr.bf16.mxu0 0
        %3953 = vmatpush2.bf16.msra.mxu0 0
        %3954 = vmatprep.mubr.bf16.mxu0 0
        %3955 = vmatmul.mubr.bf16.gmra.mxu0 %v3843
        %v3956 = vpop.f32.mrf.mxu0
        %v3957 = vadd.f32 %v3872, %v3956
        %v3958 = vpop.f32.mrf.mxu0
        %v3959 = vpop.f32.mrf.mxu0
        %v3960 = vadd.f32 %v3872, %v3959
        %v3961 = vpop.f32.mrf.mxu0
        %3962 = vmatprep.mubr.bf16.mxu0 0
        %3963 = vmatmul.mubr.bf16.gmra.mxu0 %v3844
        %v3964 = vpop.f32.mrf.mxu0
        %v3965 = vadd.f32 %v3872, %v3964
        %v3966 = vpop.f32.mrf.mxu0
        %v3967 = vpop.f32.mrf.mxu0
        %v3968 = vadd.f32 %v3872, %v3967
        %v3969 = vpop.f32.mrf.mxu0
        %3970 = vmatprep.mubr.bf16.mxu0 0
        %3971 = vmatmul.mubr.bf16.gmra.mxu0 %v3845
        %v3972 = vpop.f32.mrf.mxu0
        %v3973 = vadd.f32 %v3872, %v3972
        %v3974 = vpop.f32.mrf.mxu0
        %v3975 = vpop.f32.mrf.mxu0
        %v3976 = vadd.f32 %v3872, %v3975
        %v3977 = vpop.f32.mrf.mxu0
        %3978 = vmatprep.mubr.bf16.mxu0 0
        %3979 = vmatmul.mubr.bf16.gmra.mxu0 %v3846
        %v3980 = vpop.f32.mrf.mxu0
        %v3981 = vadd.f32 %v3872, %v3980
        %v3982 = vpop.f32.mrf.mxu0
        %v3983 = vpop.f32.mrf.mxu0
        %v3984 = vadd.f32 %v3872, %v3983
        %v3985 = vpop.f32.mrf.mxu0
        %3986 = vmatprep.mubr.bf16.mxu0 0
        %3987 = vmatmul.mubr.bf16.gmra.mxu0 %v3847
        %v3988 = vpop.f32.mrf.mxu0
        %v3989 = vadd.f32 %v3872, %v3988
        %v3990 = vpop.f32.mrf.mxu0
        %v3991 = vpop.f32.mrf.mxu0
        %v3992 = vadd.f32 %v3872, %v3991
        %v3993 = vpop.f32.mrf.mxu0
        %3994 = vmatprep.mubr.bf16.mxu0 0
        %3995 = vmatmul.mubr.bf16.gmra.mxu0 %v3848
        %v3996 = vpop.f32.mrf.mxu0
        %v3997 = vadd.f32 %v3872, %v3996
        %v3998 = vpop.f32.mrf.mxu0
        %v3999 = vpop.f32.mrf.mxu0
        %v4000 = vadd.f32 %v3872, %v3999
        %v4001 = vpop.f32.mrf.mxu0
        %4002 = vmatprep.mubr.bf16.mxu0 0
        %4003 = vmatmul.mubr.bf16.gmra.mxu0 %v3849
        %v4004 = vpop.f32.mrf.mxu0
        %v4005 = vadd.f32 %v3872, %v4004
        %v4006 = vpop.f32.mrf.mxu0
        %v4007 = vpop.f32.mrf.mxu0
        %v4008 = vadd.f32 %v3872, %v4007
        %v4009 = vpop.f32.mrf.mxu0
        %4010 = vmatprep.mubr.bf16.mxu0 0
        %4011 = vmatmul.mubr.bf16.gmra.mxu0 %v3850
        %v4012 = vpop.f32.mrf.mxu0
        %v4013 = vadd.f32 %v3872, %v4012
        %v4014 = vpop.f32.mrf.mxu0
        %v4015 = vpop.f32.mrf.mxu0
        %v4016 = vadd.f32 %v3872, %v4015
        %v4017 = vpop.f32.mrf.mxu0
        %4018 = vdwg.mxu0
        %v4019 = vld [vmem:[%s409] sm:$0xf]
        %v4020 = vld [vmem:[%s409 + $0x4] sm:$0xf]
        %v4021 = vld [vmem:[%s409 + $0x8] sm:$0xf]
        %v4022 = vld [vmem:[%s409 + $0xc] sm:$0xf]
        %v4023 = vld [vmem:[%s409 + $0x10] sm:$0xf]
        %v4024 = vld [vmem:[%s409 + $0x14] sm:$0xf]
        %v4025 = vld [vmem:[%s409 + $0x18] sm:$0xf]
        %v4026 = vld [vmem:[%s409 + $0x1c] sm:$0xf]
        %v4027 = vld [vmem:[%s409 + $0x20] sm:$0xf]
        %v4028 = vld [vmem:[%s409 + $0x24] sm:$0xf]
        %v4029 = vld [vmem:[%s409 + $0x28] sm:$0xf]
        %v4030 = vld [vmem:[%s409 + $0x2c] sm:$0xf]
        %v4031 = vld [vmem:[%s409 + $0x30] sm:$0xf]
        %v4032 = vld [vmem:[%s409 + $0x34] sm:$0xf]
        %v4033 = vld [vmem:[%s409 + $0x38] sm:$0xf]
        %v4034 = vld [vmem:[%s409 + $0x3c] sm:$0xf]
        %v4035 = vld [vmem:[#allocation12] sm:$0xf]
        %v4036 = vld [vmem:[#allocation12 + $0x4] sm:$0xf]
        %v4037 = vld [vmem:[#allocation12 + $0x8] sm:$0xf]
        %v4038 = vld [vmem:[#allocation12 + $0xc] sm:$0xf]
        %v4039 = vld [vmem:[#allocation12 + $0x10] sm:$0xf]
        %v4040 = vld [vmem:[#allocation12 + $0x14] sm:$0xf]
        %v4041 = vld [vmem:[#allocation12 + $0x18] sm:$0xf]
        %v4042 = vld [vmem:[#allocation12 + $0x1c] sm:$0xf]
        %v4043 = vld [vmem:[#allocation12 + $0x20] sm:$0xf]
        %v4044 = vld [vmem:[#allocation12 + $0x24] sm:$0xf]
        %v4045 = vld [vmem:[#allocation12 + $0x28] sm:$0xf]
        %v4046 = vld [vmem:[#allocation12 + $0x2c] sm:$0xf]
        %v4047 = vld [vmem:[#allocation12 + $0x30] sm:$0xf]
        %v4048 = vld [vmem:[#allocation12 + $0x34] sm:$0xf]
        %v4049 = vld [vmem:[#allocation12 + $0x38] sm:$0xf]
        %v4050 = vld [vmem:[#allocation12 + $0x3c] sm:$0xf]
        %v4051 = vld [vmem:[%s9] sm:$0x1]
        %v4053 = vlaneseq
        %v4054 = vshrl.u32 %v4053, 7
        %v4055 = vsub.s32 0, %v4054
        %v4056 = vrot.slane %v4051, %v4055
        %v4074 = vunpack.c.l.b16 %v4019
        %v4075 = vunpack.c.l.b16 %v4020
        %v4076 = vunpack.c.l.b16 %v4021
        %v4077 = vunpack.c.l.b16 %v4022
        %v4078 = vunpack.c.l.b16 %v4023
        %v4079 = vunpack.c.l.b16 %v4024
        %v4080 = vunpack.c.l.b16 %v4025
        %v4081 = vunpack.c.l.b16 %v4026
        %v4082 = vunpack.c.l.b16 %v4027
        %v4083 = vunpack.c.l.b16 %v4028
        %v4084 = vunpack.c.l.b16 %v4029
        %v4085 = vunpack.c.l.b16 %v4030
        %v4086 = vunpack.c.l.b16 %v4031
        %v4087 = vunpack.c.l.b16 %v4032
        %v4088 = vunpack.c.l.b16 %v4033
        %v4089 = vunpack.c.l.b16 %v4034
        %v4090 = vpack.c.b16 %v4075, %v4074
        %v4091 = vpack.c.b16 %v4077, %v4076
        %v4092 = vpack.c.b16 %v4079, %v4078
        %v4093 = vpack.c.b16 %v4081, %v4080
        %v4094 = vpack.c.b16 %v4083, %v4082
        %v4095 = vpack.c.b16 %v4085, %v4084
        %v4096 = vpack.c.b16 %v4087, %v4086
        %v4097 = vpack.c.b16 %v4089, %v4088
        %v4122 = vunpack.c.l.b16 %v4035
        %v4123 = vunpack.c.l.b16 %v4036
        %v4124 = vunpack.c.l.b16 %v4037
        %v4125 = vunpack.c.l.b16 %v4038
        %v4126 = vunpack.c.l.b16 %v4039
        %v4127 = vunpack.c.l.b16 %v4040
        %v4128 = vunpack.c.l.b16 %v4041
        %v4129 = vunpack.c.l.b16 %v4042
        %v4130 = vunpack.c.l.b16 %v4043
        %v4131 = vunpack.c.l.b16 %v4044
        %v4132 = vunpack.c.l.b16 %v4045
        %v4133 = vunpack.c.l.b16 %v4046
        %v4134 = vunpack.c.l.b16 %v4047
        %v4135 = vunpack.c.l.b16 %v4048
        %v4136 = vunpack.c.l.b16 %v4049
        %v4137 = vunpack.c.l.b16 %v4050
        %v4138 = vpack.c.b16 %v4123, %v4122
        %v4139 = vpack.c.b16 %v4125, %v4124
        %v4140 = vpack.c.b16 %v4127, %v4126
        %v4141 = vpack.c.b16 %v4129, %v4128
        %v4142 = vpack.c.b16 %v4131, %v4130
        %v4143 = vpack.c.b16 %v4133, %v4132
        %v4144 = vpack.c.b16 %v4135, %v4134
        %v4145 = vpack.c.b16 %v4137, %v4136
        %4154 = vmatprep.subr.bf16.mxu0 0
        %4155 = vmatpush1.bf16.msra.mxu0 %v4145
        %4156 = vmatprep.subr.bf16.mxu0 0
        %4157 = vmatpush1.bf16.msra.mxu0 %v4144
        %4158 = vmatprep.subr.bf16.mxu0 0
        %4159 = vmatpush1.bf16.msra.mxu0 %v4143
        %4160 = vmatprep.subr.bf16.mxu0 0
        %4161 = vmatpush1.bf16.msra.mxu0 %v4142
        %4162 = vmatprep.subr.bf16.mxu0 0
        %4163 = vmatpush1.bf16.msra.mxu0 %v4141
        %4164 = vmatprep.subr.bf16.mxu0 0
        %4165 = vmatpush1.bf16.msra.mxu0 %v4140
        %4166 = vmatprep.subr.bf16.mxu0 0
        %4167 = vmatpush1.bf16.msra.mxu0 %v4139
        %4168 = vmatprep.subr.bf16.mxu0 0
        %4169 = vmatpush1.bf16.msra.mxu0 %v4138
        %4170 = vmatprep.subr.bf16.mxu0 0
        %4171 = vmatpush2.bf16.msra.mxu0 0
        %4172 = vmatprep.subr.bf16.mxu0 0
        %4173 = vmatpush2.bf16.msra.mxu0 0
        %4174 = vmatprep.subr.bf16.mxu0 0
        %4175 = vmatpush2.bf16.msra.mxu0 0
        %4176 = vmatprep.subr.bf16.mxu0 0
        %4177 = vmatpush2.bf16.msra.mxu0 0
        %4178 = vmatprep.subr.bf16.mxu0 0
        %4179 = vmatpush2.bf16.msra.mxu0 0
        %4180 = vmatprep.subr.bf16.mxu0 0
        %4181 = vmatpush2.bf16.msra.mxu0 0
        %4182 = vmatprep.subr.bf16.mxu0 0
        %4183 = vmatpush2.bf16.msra.mxu0 0
        %4184 = vmatprep.subr.bf16.mxu0 0
        %4185 = vmatpush2.bf16.msra.mxu0 0
        %4186 = vmatprep.mubr.bf16.mxu0 0
        %4187 = vmatmul.mubr.bf16.gmra.mxu0 %v4090
        %v4188 = vpop.f32.mrf.mxu0
        %v4189 = vadd.f32 %v4056, %v4188
        %v4190 = vpop.f32.mrf.mxu0
        %v4191 = vpop.f32.mrf.mxu0
        %v4192 = vadd.f32 %v4056, %v4191
        %v4193 = vpop.f32.mrf.mxu0
        %4194 = vmatprep.mubr.bf16.mxu0 0
        %4195 = vmatmul.mubr.bf16.gmra.mxu0 %v4091
        %v4196 = vpop.f32.mrf.mxu0
        %v4197 = vadd.f32 %v4056, %v4196
        %v4198 = vpop.f32.mrf.mxu0
        %v4199 = vpop.f32.mrf.mxu0
        %v4200 = vadd.f32 %v4056, %v4199
        %v4201 = vpop.f32.mrf.mxu0
        %4202 = vmatprep.mubr.bf16.mxu0 0
        %4203 = vmatmul.mubr.bf16.gmra.mxu0 %v4092
        %v4204 = vpop.f32.mrf.mxu0
        %v4205 = vadd.f32 %v4056, %v4204
        %v4206 = vpop.f32.mrf.mxu0
        %v4207 = vpop.f32.mrf.mxu0
        %v4208 = vadd.f32 %v4056, %v4207
        %v4209 = vpop.f32.mrf.mxu0
        %4210 = vmatprep.mubr.bf16.mxu0 0
        %4211 = vmatmul.mubr.bf16.gmra.mxu0 %v4093
        %v4212 = vpop.f32.mrf.mxu0
        %v4213 = vadd.f32 %v4056, %v4212
        %v4214 = vpop.f32.mrf.mxu0
        %v4215 = vpop.f32.mrf.mxu0
        %v4216 = vadd.f32 %v4056, %v4215
        %v4217 = vpop.f32.mrf.mxu0
        %4218 = vmatprep.mubr.bf16.mxu0 0
        %4219 = vmatmul.mubr.bf16.gmra.mxu0 %v4094
        %v4220 = vpop.f32.mrf.mxu0
        %v4221 = vadd.f32 %v4056, %v4220
        %v4222 = vpop.f32.mrf.mxu0
        %v4223 = vpop.f32.mrf.mxu0
        %v4224 = vadd.f32 %v4056, %v4223
        %v4225 = vpop.f32.mrf.mxu0
        %4226 = vmatprep.mubr.bf16.mxu0 0
        %4227 = vmatmul.mubr.bf16.gmra.mxu0 %v4095
        %v4228 = vpop.f32.mrf.mxu0
        %v4229 = vadd.f32 %v4056, %v4228
        %v4230 = vpop.f32.mrf.mxu0
        %v4231 = vpop.f32.mrf.mxu0
        %v4232 = vadd.f32 %v4056, %v4231
        %v4233 = vpop.f32.mrf.mxu0
        %4234 = vmatprep.mubr.bf16.mxu0 0
        %4235 = vmatmul.mubr.bf16.gmra.mxu0 %v4096
        %v4236 = vpop.f32.mrf.mxu0
        %v4237 = vadd.f32 %v4056, %v4236
        %v4238 = vpop.f32.mrf.mxu0
        %v4239 = vpop.f32.mrf.mxu0
        %v4240 = vadd.f32 %v4056, %v4239
        %v4241 = vpop.f32.mrf.mxu0
        %4242 = vmatprep.mubr.bf16.mxu0 0
        %4243 = vmatmul.mubr.bf16.gmra.mxu0 %v4097
        %v4244 = vpop.f32.mrf.mxu0
        %v4245 = vadd.f32 %v4056, %v4244
        %v4246 = vpop.f32.mrf.mxu0
        %v4247 = vpop.f32.mrf.mxu0
        %v4248 = vadd.f32 %v4056, %v4247
        %v4249 = vpop.f32.mrf.mxu0
        %4250 = vdwg.mxu0
        %v4251 = vadd.f32 %v3957, %v4189
        %v4252 = vadd.f32 %v3960, %v4192
        %v4253 = vadd.f32 %v3965, %v4197
        %v4254 = vadd.f32 %v3968, %v4200
        %v4255 = vadd.f32 %v3973, %v4205
        %v4256 = vadd.f32 %v3976, %v4208
        %v4257 = vadd.f32 %v3981, %v4213
        %v4258 = vadd.f32 %v3984, %v4216
        %v4259 = vadd.f32 %v3989, %v4221
        %v4260 = vadd.f32 %v3992, %v4224
        %v4261 = vadd.f32 %v3997, %v4229
        %v4262 = vadd.f32 %v4000, %v4232
        %v4263 = vadd.f32 %v4005, %v4237
        %v4264 = vadd.f32 %v4008, %v4240
        %v4265 = vadd.f32 %v4013, %v4245
        %v4266 = vadd.f32 %v4016, %v4248
        %v4267 = vmax.f32 %v4251, 0.0
        %v4268 = vmax.f32 %v4252, 0.0
        %v4269 = vmax.f32 %v4253, 0.0
        %v4270 = vmax.f32 %v4254, 0.0
        %v4271 = vmax.f32 %v4255, 0.0
        %v4272 = vmax.f32 %v4256, 0.0
        %v4273 = vmax.f32 %v4257, 0.0
        %v4274 = vmax.f32 %v4258, 0.0
        %v4275 = vmax.f32 %v4259, 0.0
        %v4276 = vmax.f32 %v4260, 0.0
        %v4277 = vmax.f32 %v4261, 0.0
        %v4278 = vmax.f32 %v4262, 0.0
        %v4279 = vmax.f32 %v4263, 0.0
        %v4280 = vmax.f32 %v4264, 0.0
        %v4281 = vmax.f32 %v4265, 0.0
        %v4282 = vmax.f32 %v4266, 0.0
        %4283 = vst [vmem:[%s475] sm:$0xff] %v4267
        %4284 = vst [vmem:[%s475 + $0x8] sm:$0xff] %v4268
        %4285 = vst [vmem:[%s475 + $0x10] sm:$0xff] %v4269
        %4286 = vst [vmem:[%s475 + $0x18] sm:$0xff] %v4270
        %4287 = vst [vmem:[%s475 + $0x20] sm:$0xff] %v4271
        %4288 = vst [vmem:[%s475 + $0x28] sm:$0xff] %v4272
        %4289 = vst [vmem:[%s475 + $0x30] sm:$0xff] %v4273
        %4290 = vst [vmem:[%s475 + $0x38] sm:$0xff] %v4274
        %4291 = vst [vmem:[%s475 + $0x40] sm:$0xff] %v4275
        %4292 = vst [vmem:[%s475 + $0x48] sm:$0xff] %v4276
        %4293 = vst [vmem:[%s475 + $0x50] sm:$0xff] %v4277
        %4294 = vst [vmem:[%s475 + $0x58] sm:$0xff] %v4278
        %4295 = vst [vmem:[%s475 + $0x60] sm:$0xff] %v4279
        %4296 = vst [vmem:[%s475 + $0x68] sm:$0xff] %v4280
        %4297 = vst [vmem:[%s475 + $0x70] sm:$0xff] %v4281
        %4298 = vst [vmem:[%s475 + $0x78] sm:$0xff] %v4282
        %v4299 = vld [vmem:[#allocation2 + $0xc0] sm:$0xff]
        %v4300 = vld [vmem:[#allocation2 + $0xc8] sm:$0xf]
        %v4301 = vld [vmem:[#allocation2 + $0xcc] sm:$0xff]
        %v4302 = vld [vmem:[#allocation2 + $0xd4] sm:$0xf]
        %v4303 = vld [vmem:[#allocation2 + $0xd8] sm:$0xff]
        %v4304 = vld [vmem:[#allocation2 + $0xe0] sm:$0xf]
        %v4305 = vld [vmem:[#allocation2 + $0xe4] sm:$0xff]
        %v4306 = vld [vmem:[#allocation2 + $0xec] sm:$0xf]
        %v4307 = vld [vmem:[#allocation2 + $0xf0] sm:$0xff]
        %v4308 = vld [vmem:[#allocation2 + $0xf8] sm:$0xf]
        %v4309 = vld [vmem:[#allocation2 + $0xfc] sm:$0xff]
        %v4310 = vld [vmem:[#allocation2 + $0x104] sm:$0xf]
        %v4311 = vld [vmem:[#allocation2 + $0x108] sm:$0xff]
        %v4312 = vld [vmem:[#allocation2 + $0x110] sm:$0xf]
        %v4313 = vld [vmem:[#allocation2 + $0x114] sm:$0xff]
        %v4314 = vld [vmem:[#allocation2 + $0x11c] sm:$0xf]
        %v4315 = vld [vmem:[#allocation2 + $0x120] sm:$0xff]
        %v4316 = vld [vmem:[#allocation2 + $0x128] sm:$0xf]
        %v4317 = vld [vmem:[#allocation2 + $0x12c] sm:$0xff]
        %v4318 = vld [vmem:[#allocation2 + $0x134] sm:$0xf]
        %v4319 = vld [vmem:[#allocation2 + $0x138] sm:$0xff]
        %v4320 = vld [vmem:[#allocation2 + $0x140] sm:$0xf]
        %v4321 = vld [vmem:[#allocation2 + $0x144] sm:$0xff]
        %v4322 = vld [vmem:[#allocation2 + $0x14c] sm:$0xf]
        %v4323 = vld [vmem:[#allocation2 + $0x150] sm:$0xff]
        %v4324 = vld [vmem:[#allocation2 + $0x158] sm:$0xf]
        %v4325 = vld [vmem:[#allocation2 + $0x15c] sm:$0xff]
        %v4326 = vld [vmem:[#allocation2 + $0x164] sm:$0xf]
        %v4327 = vld [vmem:[#allocation2 + $0x168] sm:$0xff]
        %v4328 = vld [vmem:[#allocation2 + $0x170] sm:$0xf]
        %v4329 = vld [vmem:[#allocation2 + $0x174] sm:$0xff]
        %v4330 = vld [vmem:[#allocation2 + $0x17c] sm:$0xf]
        %v4331 = vld [vmem:[#allocation9] sm:$0xf]
        %v4332 = vld [vmem:[#allocation9 + $0x4] sm:$0xf]
        %v4333 = vld [vmem:[#allocation9 + $0x8] sm:$0xf]
        %v4334 = vld [vmem:[#allocation9 + $0xc] sm:$0xf]
        %v4335 = vld [vmem:[#allocation9 + $0x10] sm:$0xf]
        %v4336 = vld [vmem:[#allocation9 + $0x14] sm:$0xf]
        %v4337 = vld [vmem:[#allocation9 + $0x18] sm:$0xf]
        %v4338 = vld [vmem:[#allocation9 + $0x1c] sm:$0xf]
        %v4339 = vld [vmem:[#allocation9 + $0x20] sm:$0xf]
        %v4340 = vld [vmem:[#allocation9 + $0x24] sm:$0xf]
        %v4341 = vld [vmem:[#allocation9 + $0x28] sm:$0xf]
        %v4342 = vld [vmem:[#allocation9 + $0x2c] sm:$0xf]
        %v4343 = vld [vmem:[#allocation9 + $0x30] sm:$0xf]
        %v4344 = vld [vmem:[#allocation9 + $0x34] sm:$0xf]
        %v4345 = vld [vmem:[#allocation9 + $0x38] sm:$0xf]
        %v4346 = vld [vmem:[#allocation9 + $0x3c] sm:$0xf]
        %v4347 = vld [vmem:[#allocation9 + $0x40] sm:$0xf]
        %v4348 = vld [vmem:[#allocation9 + $0x44] sm:$0xf]
        %v4349 = vld [vmem:[#allocation9 + $0x48] sm:$0xf]
        %v4350 = vld [vmem:[#allocation9 + $0x4c] sm:$0xf]
        %v4351 = vld [vmem:[#allocation9 + $0x50] sm:$0xf]
        %v4352 = vld [vmem:[#allocation9 + $0x54] sm:$0xf]
        %v4353 = vld [vmem:[#allocation9 + $0x58] sm:$0xf]
        %v4354 = vld [vmem:[#allocation9 + $0x5c] sm:$0xf]
        %v4355 = vld [vmem:[#allocation9 + $0x60] sm:$0xf]
        %v4356 = vld [vmem:[#allocation9 + $0x64] sm:$0xf]
        %v4357 = vld [vmem:[#allocation9 + $0x68] sm:$0xf]
        %v4358 = vld [vmem:[#allocation9 + $0x6c] sm:$0xf]
        %v4359 = vld [vmem:[#allocation9 + $0x70] sm:$0xf]
        %v4360 = vld [vmem:[#allocation9 + $0x74] sm:$0xf]
        %v4361 = vld [vmem:[#allocation9 + $0x78] sm:$0xf]
        %v4362 = vld [vmem:[#allocation9 + $0x7c] sm:$0xf]
        %v4363 = vld [vmem:[#allocation9 + $0x80] sm:$0xf]
        %v4364 = vld [vmem:[#allocation9 + $0x84] sm:$0xf]
        %v4365 = vld [vmem:[#allocation9 + $0x88] sm:$0xf]
        %v4366 = vld [vmem:[#allocation9 + $0x8c] sm:$0xf]
        %v4367 = vld [vmem:[#allocation9 + $0x90] sm:$0xf]
        %v4368 = vld [vmem:[#allocation9 + $0x94] sm:$0xf]
        %v4369 = vld [vmem:[#allocation9 + $0x98] sm:$0xf]
        %v4370 = vld [vmem:[#allocation9 + $0x9c] sm:$0xf]
        %v4371 = vld [vmem:[#allocation9 + $0xa0] sm:$0xf]
        %v4372 = vld [vmem:[#allocation9 + $0xa4] sm:$0xf]
        %v4373 = vld [vmem:[#allocation9 + $0xa8] sm:$0xf]
        %v4374 = vld [vmem:[#allocation9 + $0xac] sm:$0xf]
        %v4375 = vld [vmem:[#allocation9 + $0xb0] sm:$0xf]
        %v4376 = vld [vmem:[#allocation9 + $0xb4] sm:$0xf]
        %v4377 = vld [vmem:[#allocation9 + $0xb8] sm:$0xf]
        %v4378 = vld [vmem:[#allocation9 + $0xbc] sm:$0xf]
        %v4379 = vld [vmem:[#allocation2 + $0x180] sm:$0xff]
        %v4380 = vld [vmem:[#allocation2 + $0x188] sm:$0xf]
        %v4381 = vld [vmem:[#allocation2 + $0x18c] sm:$0xff]
        %v4382 = vld [vmem:[#allocation2 + $0x194] sm:$0xf]
        %v4383 = vld [vmem:[%s2372] sm:$0xf]
        %v4384 = vld [vmem:[%s2372 + $0x4] sm:$0xf]
        %v4385 = vld [vmem:[%s2372 + $0x8] sm:$0xf]
        %v4386 = vld [vmem:[%s2372 + $0xc] sm:$0xf]
        %v4387 = vld [vmem:[%s2372 + $0x10] sm:$0xf]
        %v4388 = vld [vmem:[%s2372 + $0x14] sm:$0xf]
        %v4389 = vld [vmem:[%s2372 + $0x18] sm:$0xf]
        %v4390 = vld [vmem:[%s2372 + $0x1c] sm:$0xf]
        %v4391 = vld [vmem:[%s2372 + $0x20] sm:$0xf]
        %v4392 = vld [vmem:[%s2372 + $0x24] sm:$0xf]
        %v4393 = vld [vmem:[%s2372 + $0x28] sm:$0xf]
        %v4394 = vld [vmem:[%s2372 + $0x2c] sm:$0xf]
        %v4395 = vld [vmem:[%s2372 + $0x30] sm:$0xf]
        %v4396 = vld [vmem:[%s2372 + $0x34] sm:$0xf]
        %v4397 = vld [vmem:[%s2372 + $0x38] sm:$0xf]
        %v4398 = vld [vmem:[%s2372 + $0x3c] sm:$0xf]
        %v4399 = vld [vmem:[%s2372 + $0x40] sm:$0xf]
        %v4400 = vld [vmem:[%s2372 + $0x44] sm:$0xf]
        %v4401 = vld [vmem:[%s2372 + $0x48] sm:$0xf]
        %v4402 = vld [vmem:[%s2372 + $0x4c] sm:$0xf]
        %v4403 = vld [vmem:[%s2372 + $0x50] sm:$0xf]
        %v4404 = vld [vmem:[%s2372 + $0x54] sm:$0xf]
        %v4405 = vld [vmem:[%s2372 + $0x58] sm:$0xf]
        %v4406 = vld [vmem:[%s2372 + $0x5c] sm:$0xf]
        %v4407 = vld [vmem:[%s2372 + $0x60] sm:$0xf]
        %v4408 = vld [vmem:[%s2372 + $0x64] sm:$0xf]
        %v4409 = vld [vmem:[%s2372 + $0x68] sm:$0xf]
        %v4410 = vld [vmem:[%s2372 + $0x6c] sm:$0xf]
        %v4411 = vld [vmem:[%s2372 + $0x70] sm:$0xf]
        %v4412 = vld [vmem:[%s2372 + $0x74] sm:$0xf]
        %v4413 = vld [vmem:[%s2372 + $0x78] sm:$0xf]
        %v4414 = vld [vmem:[%s2372 + $0x7c] sm:$0xf]
        %v4415 = vld [vmem:[%s2372 + $0x80] sm:$0xf]
        %v4416 = vld [vmem:[%s2372 + $0x84] sm:$0xf]
        %v4417 = vld [vmem:[%s2372 + $0x88] sm:$0xf]
        %v4418 = vld [vmem:[%s2372 + $0x8c] sm:$0xf]
        %v4419 = vld [vmem:[%s2372 + $0x90] sm:$0xf]
        %v4420 = vld [vmem:[%s2372 + $0x94] sm:$0xf]
        %v4421 = vld [vmem:[%s2372 + $0x98] sm:$0xf]
        %v4422 = vld [vmem:[%s2372 + $0x9c] sm:$0xf]
        %v4423 = vld [vmem:[%s2372 + $0xa0] sm:$0xf]
        %v4424 = vld [vmem:[%s2372 + $0xa4] sm:$0xf]
        %v4425 = vld [vmem:[%s2372 + $0xa8] sm:$0xf]
        %v4426 = vld [vmem:[%s2372 + $0xac] sm:$0xf]
        %v4427 = vld [vmem:[%s2372 + $0xb0] sm:$0xf]
        %v4428 = vld [vmem:[%s2372 + $0xb4] sm:$0xf]
        %v4429 = vld [vmem:[%s2372 + $0xb8] sm:$0xf]
        %v4430 = vld [vmem:[%s2372 + $0xbc] sm:$0xf]
        %v4463 = vunpack.c.l.b16 %v4303
        %v4464 = vunpack.c.h.b16 %v4303
        %v4465 = vunpack.c.l.b16 %v4304
        %v4466 = vunpack.c.l.b16 %v4305
        %v4467 = vunpack.c.h.b16 %v4305
        %v4468 = vunpack.c.l.b16 %v4306
        %v4469 = vunpack.c.l.b16 %v4307
        %v4470 = vunpack.c.h.b16 %v4307
        %v4471 = vunpack.c.l.b16 %v4308
        %v4472 = vunpack.c.l.b16 %v4309
        %v4473 = vunpack.c.h.b16 %v4309
        %v4474 = vunpack.c.l.b16 %v4310
        %v4475 = vunpack.c.l.b16 %v4311
        %v4476 = vunpack.c.h.b16 %v4311
        %v4477 = vunpack.c.l.b16 %v4312
        %v4478 = vunpack.c.l.b16 %v4313
        %v4479 = vunpack.c.h.b16 %v4313
        %v4480 = vunpack.c.l.b16 %v4314
        %v4481 = vunpack.c.l.b16 %v4315
        %v4482 = vunpack.c.h.b16 %v4315
        %v4483 = vunpack.c.l.b16 %v4316
        %v4484 = vunpack.c.l.b16 %v4317
        %v4485 = vunpack.c.h.b16 %v4317
        %v4486 = vunpack.c.l.b16 %v4318
        %v4487 = vunpack.c.l.b16 %v4319
        %v4488 = vunpack.c.h.b16 %v4319
        %v4489 = vunpack.c.l.b16 %v4320
        %v4490 = vunpack.c.l.b16 %v4321
        %v4491 = vunpack.c.h.b16 %v4321
        %v4492 = vunpack.c.l.b16 %v4322
        %v4493 = vunpack.c.l.b16 %v4323
        %v4494 = vunpack.c.h.b16 %v4323
        %v4495 = vunpack.c.l.b16 %v4324
        %v4496 = vunpack.c.l.b16 %v4325
        %v4497 = vunpack.c.h.b16 %v4325
        %v4498 = vunpack.c.l.b16 %v4326
        %v4499 = vunpack.c.l.b16 %v4327
        %v4500 = vunpack.c.h.b16 %v4327
        %v4501 = vunpack.c.l.b16 %v4328
        %v4502 = vunpack.c.l.b16 %v4329
        %v4503 = vunpack.c.h.b16 %v4329
        %v4504 = vunpack.c.l.b16 %v4330
        %v4505 = vunpack.c.l.b16 %v4379
        %v4506 = vunpack.c.h.b16 %v4379
        %v4507 = vunpack.c.l.b16 %v4380
        %v4508 = vunpack.c.l.b16 %v4381
        %v4509 = vunpack.c.h.b16 %v4381
        %v4510 = vunpack.c.l.b16 %v4382
        %v4511 = vpack.c.b16 %v4466, %v4463
        %v4512 = vpack.c.b16 %v4467, %v4464
        %v4513 = vpack.c.b16 %v4468, %v4465
        %v4514 = vpack.c.b16 %v4472, %v4469
        %v4515 = vpack.c.b16 %v4473, %v4470
        %v4516 = vpack.c.b16 %v4474, %v4471
        %v4517 = vpack.c.b16 %v4478, %v4475
        %v4518 = vpack.c.b16 %v4479, %v4476
        %v4519 = vpack.c.b16 %v4480, %v4477
        %v4520 = vpack.c.b16 %v4484, %v4481
        %v4521 = vpack.c.b16 %v4485, %v4482
        %v4522 = vpack.c.b16 %v4486, %v4483
        %v4523 = vpack.c.b16 %v4490, %v4487
        %v4524 = vpack.c.b16 %v4491, %v4488
        %v4525 = vpack.c.b16 %v4492, %v4489
        %v4526 = vpack.c.b16 %v4496, %v4493
        %v4527 = vpack.c.b16 %v4497, %v4494
        %v4528 = vpack.c.b16 %v4498, %v4495
        %v4529 = vpack.c.b16 %v4502, %v4499
        %v4530 = vpack.c.b16 %v4503, %v4500
        %v4531 = vpack.c.b16 %v4504, %v4501
        %v4532 = vpack.c.b16 %v4508, %v4505
        %v4533 = vpack.c.b16 %v4509, %v4506
        %v4534 = vpack.c.b16 %v4510, %v4507
        %v4607 = vunpack.c.l.b16 %v4383
        %v4608 = vunpack.c.l.b16 %v4384
        %v4609 = vunpack.c.l.b16 %v4385
        %v4610 = vunpack.c.l.b16 %v4386
        %v4611 = vunpack.c.l.b16 %v4387
        %v4612 = vunpack.c.l.b16 %v4388
        %v4613 = vunpack.c.l.b16 %v4389
        %v4614 = vunpack.c.l.b16 %v4390
        %v4615 = vunpack.c.l.b16 %v4391
        %v4616 = vunpack.c.l.b16 %v4392
        %v4617 = vunpack.c.l.b16 %v4393
        %v4618 = vunpack.c.l.b16 %v4394
        %v4619 = vunpack.c.l.b16 %v4395
        %v4620 = vunpack.c.l.b16 %v4396
        %v4621 = vunpack.c.l.b16 %v4397
        %v4622 = vunpack.c.l.b16 %v4398
        %v4623 = vunpack.c.l.b16 %v4399
        %v4624 = vunpack.c.l.b16 %v4400
        %v4625 = vunpack.c.l.b16 %v4401
        %v4626 = vunpack.c.l.b16 %v4402
        %v4627 = vunpack.c.l.b16 %v4403
        %v4628 = vunpack.c.l.b16 %v4404
        %v4629 = vunpack.c.l.b16 %v4405
        %v4630 = vunpack.c.l.b16 %v4406
        %v4631 = vunpack.c.l.b16 %v4407
        %v4632 = vunpack.c.l.b16 %v4408
        %v4633 = vunpack.c.l.b16 %v4409
        %v4634 = vunpack.c.l.b16 %v4410
        %v4635 = vunpack.c.l.b16 %v4411
        %v4636 = vunpack.c.l.b16 %v4412
        %v4637 = vunpack.c.l.b16 %v4413
        %v4638 = vunpack.c.l.b16 %v4414
        %v4639 = vunpack.c.l.b16 %v4415
        %v4640 = vunpack.c.l.b16 %v4416
        %v4641 = vunpack.c.l.b16 %v4417
        %v4642 = vunpack.c.l.b16 %v4418
        %v4643 = vunpack.c.l.b16 %v4419
        %v4644 = vunpack.c.l.b16 %v4420
        %v4645 = vunpack.c.l.b16 %v4421
        %v4646 = vunpack.c.l.b16 %v4422
        %v4647 = vunpack.c.l.b16 %v4423
        %v4648 = vunpack.c.l.b16 %v4424
        %v4649 = vunpack.c.l.b16 %v4425
        %v4650 = vunpack.c.l.b16 %v4426
        %v4651 = vunpack.c.l.b16 %v4427
        %v4652 = vunpack.c.l.b16 %v4428
        %v4653 = vunpack.c.l.b16 %v4429
        %v4654 = vunpack.c.l.b16 %v4430
        %v4655 = vpack.c.b16 %v4608, %v4607
        %v4656 = vpack.c.b16 %v4610, %v4609
        %v4657 = vpack.c.b16 %v4612, %v4611
        %v4658 = vpack.c.b16 %v4614, %v4613
        %v4659 = vpack.c.b16 %v4616, %v4615
        %v4660 = vpack.c.b16 %v4618, %v4617
        %v4661 = vpack.c.b16 %v4620, %v4619
        %v4662 = vpack.c.b16 %v4622, %v4621
        %v4663 = vpack.c.b16 %v4624, %v4623
        %v4664 = vpack.c.b16 %v4626, %v4625
        %v4665 = vpack.c.b16 %v4628, %v4627
        %v4666 = vpack.c.b16 %v4630, %v4629
        %v4667 = vpack.c.b16 %v4632, %v4631
        %v4668 = vpack.c.b16 %v4634, %v4633
        %v4669 = vpack.c.b16 %v4636, %v4635
        %v4670 = vpack.c.b16 %v4638, %v4637
        %v4671 = vpack.c.b16 %v4640, %v4639
        %v4672 = vpack.c.b16 %v4642, %v4641
        %v4673 = vpack.c.b16 %v4644, %v4643
        %v4674 = vpack.c.b16 %v4646, %v4645
        %v4675 = vpack.c.b16 %v4648, %v4647
        %v4676 = vpack.c.b16 %v4650, %v4649
        %v4677 = vpack.c.b16 %v4652, %v4651
        %v4678 = vpack.c.b16 %v4654, %v4653
        %4703 = vmatprep.subr.bf16.mxu0 0
        %4704 = vmatpush1.bf16.msra.mxu0 %v4662
        %4705 = vmatprep.subr.bf16.mxu0 0
        %4706 = vmatpush1.bf16.msra.mxu0 %v4661
        %4707 = vmatprep.subr.bf16.mxu0 0
        %4708 = vmatpush1.bf16.msra.mxu0 %v4660
        %4709 = vmatprep.subr.bf16.mxu0 0
        %4710 = vmatpush1.bf16.msra.mxu0 %v4659
        %4711 = vmatprep.subr.bf16.mxu0 0
        %4712 = vmatpush1.bf16.msra.mxu0 %v4658
        %4713 = vmatprep.subr.bf16.mxu0 0
        %4714 = vmatpush1.bf16.msra.mxu0 %v4657
        %4715 = vmatprep.subr.bf16.mxu0 0
        %4716 = vmatpush1.bf16.msra.mxu0 %v4656
        %4717 = vmatprep.subr.bf16.mxu0 0
        %4718 = vmatpush1.bf16.msra.mxu0 %v4655
        %4719 = vmatprep.subr.bf16.mxu0 0
        %4720 = vmatpush2.bf16.msra.mxu0 %v4670
        %4721 = vmatprep.subr.bf16.mxu0 0
        %4722 = vmatpush2.bf16.msra.mxu0 %v4669
        %4723 = vmatprep.subr.bf16.mxu0 0
        %4724 = vmatpush2.bf16.msra.mxu0 %v4668
        %4725 = vmatprep.subr.bf16.mxu0 0
        %4726 = vmatpush2.bf16.msra.mxu0 %v4667
        %4727 = vmatprep.subr.bf16.mxu0 0
        %4728 = vmatpush2.bf16.msra.mxu0 %v4666
        %4729 = vmatprep.subr.bf16.mxu0 0
        %4730 = vmatpush2.bf16.msra.mxu0 %v4665
        %4731 = vmatprep.subr.bf16.mxu0 0
        %4732 = vmatpush2.bf16.msra.mxu0 %v4664
        %4733 = vmatprep.subr.bf16.mxu0 0
        %4734 = vmatpush2.bf16.msra.mxu0 %v4663
        %4735 = vmatprep.mubr.bf16.mxu0 %v4512
        %4736 = vmatmul.mubr.bf16.gmra.mxu0 %v4511
        %v4737 = vpop.f32.mrf.mxu0
        %v4738 = vadd.f32 0.0, %v4737
        %v4739 = vpop.f32.mrf.mxu0
        %v4740 = vpop.f32.mrf.mxu0
        %v4741 = vadd.f32 0.0, %v4740
        %v4742 = vpop.f32.mrf.mxu0
        %4743 = vmatprep.mubr.bf16.mxu0 %v4515
        %4744 = vmatmul.mubr.bf16.gmra.mxu0 %v4514
        %v4745 = vpop.f32.mrf.mxu0
        %v4746 = vadd.f32 0.0, %v4745
        %v4747 = vpop.f32.mrf.mxu0
        %v4748 = vpop.f32.mrf.mxu0
        %v4749 = vadd.f32 0.0, %v4748
        %v4750 = vpop.f32.mrf.mxu0
        %4751 = vmatprep.mubr.bf16.mxu0 %v4518
        %4752 = vmatmul.mubr.bf16.gmra.mxu0 %v4517
        %v4753 = vpop.f32.mrf.mxu0
        %v4754 = vadd.f32 0.0, %v4753
        %v4755 = vpop.f32.mrf.mxu0
        %v4756 = vpop.f32.mrf.mxu0
        %v4757 = vadd.f32 0.0, %v4756
        %v4758 = vpop.f32.mrf.mxu0
        %4759 = vmatprep.mubr.bf16.mxu0 %v4521
        %4760 = vmatmul.mubr.bf16.gmra.mxu0 %v4520
        %v4761 = vpop.f32.mrf.mxu0
        %v4762 = vadd.f32 0.0, %v4761
        %v4763 = vpop.f32.mrf.mxu0
        %v4764 = vpop.f32.mrf.mxu0
        %v4765 = vadd.f32 0.0, %v4764
        %v4766 = vpop.f32.mrf.mxu0
        %4767 = vmatprep.mubr.bf16.mxu0 %v4524
        %4768 = vmatmul.mubr.bf16.gmra.mxu0 %v4523
        %v4769 = vpop.f32.mrf.mxu0
        %v4770 = vadd.f32 0.0, %v4769
        %v4771 = vpop.f32.mrf.mxu0
        %v4772 = vpop.f32.mrf.mxu0
        %v4773 = vadd.f32 0.0, %v4772
        %v4774 = vpop.f32.mrf.mxu0
        %4775 = vmatprep.mubr.bf16.mxu0 %v4527
        %4776 = vmatmul.mubr.bf16.gmra.mxu0 %v4526
        %v4777 = vpop.f32.mrf.mxu0
        %v4778 = vadd.f32 0.0, %v4777
        %v4779 = vpop.f32.mrf.mxu0
        %v4780 = vpop.f32.mrf.mxu0
        %v4781 = vadd.f32 0.0, %v4780
        %v4782 = vpop.f32.mrf.mxu0
        %4783 = vmatprep.mubr.bf16.mxu0 %v4530
        %4784 = vmatmul.mubr.bf16.gmra.mxu0 %v4529
        %v4785 = vpop.f32.mrf.mxu0
        %v4786 = vadd.f32 0.0, %v4785
        %v4787 = vpop.f32.mrf.mxu0
        %v4788 = vpop.f32.mrf.mxu0
        %v4789 = vadd.f32 0.0, %v4788
        %v4790 = vpop.f32.mrf.mxu0
        %4791 = vmatprep.mubr.bf16.mxu0 %v4533
        %4792 = vmatmul.mubr.bf16.gmra.mxu0 %v4532
        %v4793 = vpop.f32.mrf.mxu0
        %v4794 = vadd.f32 0.0, %v4793
        %v4795 = vpop.f32.mrf.mxu0
        %v4796 = vpop.f32.mrf.mxu0
        %v4797 = vadd.f32 0.0, %v4796
        %v4798 = vpop.f32.mrf.mxu0
        %4799 = vdwg.mxu0
        %4800 = vmatprep.subr.bf16.mxu0 0
        %4801 = vmatpush1.bf16.msra.mxu0 %v4678
        %4802 = vmatprep.subr.bf16.mxu0 0
        %4803 = vmatpush1.bf16.msra.mxu0 %v4677
        %4804 = vmatprep.subr.bf16.mxu0 0
        %4805 = vmatpush1.bf16.msra.mxu0 %v4676
        %4806 = vmatprep.subr.bf16.mxu0 0
        %4807 = vmatpush1.bf16.msra.mxu0 %v4675
        %4808 = vmatprep.subr.bf16.mxu0 0
        %4809 = vmatpush1.bf16.msra.mxu0 %v4674
        %4810 = vmatprep.subr.bf16.mxu0 0
        %4811 = vmatpush1.bf16.msra.mxu0 %v4673
        %4812 = vmatprep.subr.bf16.mxu0 0
        %4813 = vmatpush1.bf16.msra.mxu0 %v4672
        %4814 = vmatprep.subr.bf16.mxu0 0
        %4815 = vmatpush1.bf16.msra.mxu0 %v4671
        %4816 = vmatprep.subr.bf16.mxu0 0
        %4817 = vmatpush2.bf16.msra.mxu0 0
        %4818 = vmatprep.subr.bf16.mxu0 0
        %4819 = vmatpush2.bf16.msra.mxu0 0
        %4820 = vmatprep.subr.bf16.mxu0 0
        %4821 = vmatpush2.bf16.msra.mxu0 0
        %4822 = vmatprep.subr.bf16.mxu0 0
        %4823 = vmatpush2.bf16.msra.mxu0 0
        %4824 = vmatprep.subr.bf16.mxu0 0
        %4825 = vmatpush2.bf16.msra.mxu0 0
        %4826 = vmatprep.subr.bf16.mxu0 0
        %4827 = vmatpush2.bf16.msra.mxu0 0
        %4828 = vmatprep.subr.bf16.mxu0 0
        %4829 = vmatpush2.bf16.msra.mxu0 0
        %4830 = vmatprep.subr.bf16.mxu0 0
        %4831 = vmatpush2.bf16.msra.mxu0 0
        %4832 = vmatprep.mubr.bf16.mxu0 0
        %4833 = vmatmul.mubr.bf16.gmra.mxu0 %v4513
        %v4834 = vpop.f32.mrf.mxu0
        %v4835 = vadd.f32 %v4738, %v4834
        %v4836 = vpop.f32.mrf.mxu0
        %v4837 = vpop.f32.mrf.mxu0
        %v4838 = vadd.f32 %v4741, %v4837
        %v4839 = vpop.f32.mrf.mxu0
        %4840 = vmatprep.mubr.bf16.mxu0 0
        %4841 = vmatmul.mubr.bf16.gmra.mxu0 %v4516
        %v4842 = vpop.f32.mrf.mxu0
        %v4843 = vadd.f32 %v4746, %v4842
        %v4844 = vpop.f32.mrf.mxu0
        %v4845 = vpop.f32.mrf.mxu0
        %v4846 = vadd.f32 %v4749, %v4845
        %v4847 = vpop.f32.mrf.mxu0
        %4848 = vmatprep.mubr.bf16.mxu0 0
        %4849 = vmatmul.mubr.bf16.gmra.mxu0 %v4519
        %v4850 = vpop.f32.mrf.mxu0
        %v4851 = vadd.f32 %v4754, %v4850
        %v4852 = vpop.f32.mrf.mxu0
        %v4853 = vpop.f32.mrf.mxu0
        %v4854 = vadd.f32 %v4757, %v4853
        %v4855 = vpop.f32.mrf.mxu0
        %4856 = vmatprep.mubr.bf16.mxu0 0
        %4857 = vmatmul.mubr.bf16.gmra.mxu0 %v4522
        %v4858 = vpop.f32.mrf.mxu0
        %v4859 = vadd.f32 %v4762, %v4858
        %v4860 = vpop.f32.mrf.mxu0
        %v4861 = vpop.f32.mrf.mxu0
        %v4862 = vadd.f32 %v4765, %v4861
        %v4863 = vpop.f32.mrf.mxu0
        %4864 = vmatprep.mubr.bf16.mxu0 0
        %4865 = vmatmul.mubr.bf16.gmra.mxu0 %v4525
        %v4866 = vpop.f32.mrf.mxu0
        %v4867 = vadd.f32 %v4770, %v4866
        %v4868 = vpop.f32.mrf.mxu0
        %v4869 = vpop.f32.mrf.mxu0
        %v4870 = vadd.f32 %v4773, %v4869
        %v4871 = vpop.f32.mrf.mxu0
        %4872 = vmatprep.mubr.bf16.mxu0 0
        %4873 = vmatmul.mubr.bf16.gmra.mxu0 %v4528
        %v4874 = vpop.f32.mrf.mxu0
        %v4875 = vadd.f32 %v4778, %v4874
        %v4876 = vpop.f32.mrf.mxu0
        %v4877 = vpop.f32.mrf.mxu0
        %v4878 = vadd.f32 %v4781, %v4877
        %v4879 = vpop.f32.mrf.mxu0
        %4880 = vmatprep.mubr.bf16.mxu0 0
        %4881 = vmatmul.mubr.bf16.gmra.mxu0 %v4531
        %v4882 = vpop.f32.mrf.mxu0
        %v4883 = vadd.f32 %v4786, %v4882
        %v4884 = vpop.f32.mrf.mxu0
        %v4885 = vpop.f32.mrf.mxu0
        %v4886 = vadd.f32 %v4789, %v4885
        %v4887 = vpop.f32.mrf.mxu0
        %4888 = vmatprep.mubr.bf16.mxu0 0
        %4889 = vmatmul.mubr.bf16.gmra.mxu0 %v4534
        %v4890 = vpop.f32.mrf.mxu0
        %v4891 = vadd.f32 %v4794, %v4890
        %v4892 = vpop.f32.mrf.mxu0
        %v4893 = vpop.f32.mrf.mxu0
        %v4894 = vadd.f32 %v4797, %v4893
        %v4895 = vpop.f32.mrf.mxu0
        %4896 = vdwg.mxu0
        %v4901 = vunpack.c.l.b16 %v4299
        %v4902 = vunpack.c.h.b16 %v4299
        %v4903 = vunpack.c.l.b16 %v4300
        %v4904 = vunpack.c.l.b16 %v4301
        %v4905 = vunpack.c.h.b16 %v4301
        %v4906 = vunpack.c.l.b16 %v4302
        %v4907 = vpack.c.b16 %v4904, %v4901
        %v4908 = vpack.c.b16 %v4905, %v4902
        %v4909 = vpack.c.b16 %v4906, %v4903
        %v4961 = vunpack.c.l.b16 %v4331
        %v4962 = vunpack.c.l.b16 %v4332
        %v4963 = vunpack.c.l.b16 %v4333
        %v4964 = vunpack.c.l.b16 %v4334
        %v4965 = vunpack.c.l.b16 %v4335
        %v4966 = vunpack.c.l.b16 %v4336
        %v4967 = vunpack.c.l.b16 %v4337
        %v4968 = vunpack.c.l.b16 %v4338
        %v4969 = vunpack.c.l.b16 %v4339
        %v4970 = vunpack.c.l.b16 %v4340
        %v4971 = vunpack.c.l.b16 %v4341
        %v4972 = vunpack.c.l.b16 %v4342
        %v4973 = vunpack.c.l.b16 %v4343
        %v4974 = vunpack.c.l.b16 %v4344
        %v4975 = vunpack.c.l.b16 %v4345
        %v4976 = vunpack.c.l.b16 %v4346
        %v4977 = vunpack.c.l.b16 %v4347
        %v4978 = vunpack.c.l.b16 %v4348
        %v4979 = vunpack.c.l.b16 %v4349
        %v4980 = vunpack.c.l.b16 %v4350
        %v4981 = vunpack.c.l.b16 %v4351
        %v4982 = vunpack.c.l.b16 %v4352
        %v4983 = vunpack.c.l.b16 %v4353
        %v4984 = vunpack.c.l.b16 %v4354
        %v4985 = vunpack.c.l.b16 %v4355
        %v4986 = vunpack.c.l.b16 %v4356
        %v4987 = vunpack.c.l.b16 %v4357
        %v4988 = vunpack.c.l.b16 %v4358
        %v4989 = vunpack.c.l.b16 %v4359
        %v4990 = vunpack.c.l.b16 %v4360
        %v4991 = vunpack.c.l.b16 %v4361
        %v4992 = vunpack.c.l.b16 %v4362
        %v4993 = vunpack.c.l.b16 %v4363
        %v4994 = vunpack.c.l.b16 %v4364
        %v4995 = vunpack.c.l.b16 %v4365
        %v4996 = vunpack.c.l.b16 %v4366
        %v4997 = vunpack.c.l.b16 %v4367
        %v4998 = vunpack.c.l.b16 %v4368
        %v4999 = vunpack.c.l.b16 %v4369
        %v5000 = vunpack.c.l.b16 %v4370
        %v5001 = vunpack.c.l.b16 %v4371
        %v5002 = vunpack.c.l.b16 %v4372
        %v5003 = vunpack.c.l.b16 %v4373
        %v5004 = vunpack.c.l.b16 %v4374
        %v5005 = vunpack.c.l.b16 %v4375
        %v5006 = vunpack.c.l.b16 %v4376
        %v5007 = vunpack.c.l.b16 %v4377
        %v5008 = vunpack.c.l.b16 %v4378
        %v5009 = vpack.c.b16 %v4962, %v4961
        %v5010 = vpack.c.b16 %v4964, %v4963
        %v5011 = vpack.c.b16 %v4966, %v4965
        %v5012 = vpack.c.b16 %v4968, %v4967
        %v5013 = vpack.c.b16 %v4970, %v4969
        %v5014 = vpack.c.b16 %v4972, %v4971
        %v5015 = vpack.c.b16 %v4974, %v4973
        %v5016 = vpack.c.b16 %v4976, %v4975
        %v5017 = vpack.c.b16 %v4978, %v4977
        %v5018 = vpack.c.b16 %v4980, %v4979
        %v5019 = vpack.c.b16 %v4982, %v4981
        %v5020 = vpack.c.b16 %v4984, %v4983
        %v5021 = vpack.c.b16 %v4986, %v4985
        %v5022 = vpack.c.b16 %v4988, %v4987
        %v5023 = vpack.c.b16 %v4990, %v4989
        %v5024 = vpack.c.b16 %v4992, %v4991
        %v5025 = vpack.c.b16 %v4994, %v4993
        %v5026 = vpack.c.b16 %v4996, %v4995
        %v5027 = vpack.c.b16 %v4998, %v4997
        %v5028 = vpack.c.b16 %v5000, %v4999
        %v5029 = vpack.c.b16 %v5002, %v5001
        %v5030 = vpack.c.b16 %v5004, %v5003
        %v5031 = vpack.c.b16 %v5006, %v5005
        %v5032 = vpack.c.b16 %v5008, %v5007
        %5057 = vmatprep.subr.bf16.mxu0 0
        %5058 = vmatpush1.bf16.msra.mxu0 %v5016
        %5059 = vmatprep.subr.bf16.mxu0 0
        %5060 = vmatpush1.bf16.msra.mxu0 %v5015
        %5061 = vmatprep.subr.bf16.mxu0 0
        %5062 = vmatpush1.bf16.msra.mxu0 %v5014
        %5063 = vmatprep.subr.bf16.mxu0 0
        %5064 = vmatpush1.bf16.msra.mxu0 %v5013
        %5065 = vmatprep.subr.bf16.mxu0 0
        %5066 = vmatpush1.bf16.msra.mxu0 %v5012
        %5067 = vmatprep.subr.bf16.mxu0 0
        %5068 = vmatpush1.bf16.msra.mxu0 %v5011
        %5069 = vmatprep.subr.bf16.mxu0 0
        %5070 = vmatpush1.bf16.msra.mxu0 %v5010
        %5071 = vmatprep.subr.bf16.mxu0 0
        %5072 = vmatpush1.bf16.msra.mxu0 %v5009
        %5073 = vmatprep.subr.bf16.mxu0 0
        %5074 = vmatpush2.bf16.msra.mxu0 %v5024
        %5075 = vmatprep.subr.bf16.mxu0 0
        %5076 = vmatpush2.bf16.msra.mxu0 %v5023
        %5077 = vmatprep.subr.bf16.mxu0 0
        %5078 = vmatpush2.bf16.msra.mxu0 %v5022
        %5079 = vmatprep.subr.bf16.mxu0 0
        %5080 = vmatpush2.bf16.msra.mxu0 %v5021
        %5081 = vmatprep.subr.bf16.mxu0 0
        %5082 = vmatpush2.bf16.msra.mxu0 %v5020
        %5083 = vmatprep.subr.bf16.mxu0 0
        %5084 = vmatpush2.bf16.msra.mxu0 %v5019
        %5085 = vmatprep.subr.bf16.mxu0 0
        %5086 = vmatpush2.bf16.msra.mxu0 %v5018
        %5087 = vmatprep.subr.bf16.mxu0 0
        %5088 = vmatpush2.bf16.msra.mxu0 %v5017
        %5089 = vmatprep.mubr.bf16.mxu0 %v4908
        %5090 = vmatmul.mubr.bf16.gmra.mxu0 %v4907
        %v5091 = vpop.f32.mrf.mxu0
        %v5092 = vadd.f32 %v4835, %v5091
        %v5093 = vpop.f32.mrf.mxu0
        %v5094 = vpop.f32.mrf.mxu0
        %v5095 = vadd.f32 %v4838, %v5094
        %v5096 = vpop.f32.mrf.mxu0
        %5097 = vmatprep.mubr.bf16.mxu0 %v4512
        %5098 = vmatmul.mubr.bf16.gmra.mxu0 %v4511
        %v5099 = vpop.f32.mrf.mxu0
        %v5100 = vadd.f32 %v4843, %v5099
        %v5101 = vpop.f32.mrf.mxu0
        %v5102 = vpop.f32.mrf.mxu0
        %v5103 = vadd.f32 %v4846, %v5102
        %v5104 = vpop.f32.mrf.mxu0
        %5105 = vmatprep.mubr.bf16.mxu0 %v4515
        %5106 = vmatmul.mubr.bf16.gmra.mxu0 %v4514
        %v5107 = vpop.f32.mrf.mxu0
        %v5108 = vadd.f32 %v4851, %v5107
        %v5109 = vpop.f32.mrf.mxu0
        %v5110 = vpop.f32.mrf.mxu0
        %v5111 = vadd.f32 %v4854, %v5110
        %v5112 = vpop.f32.mrf.mxu0
        %5113 = vmatprep.mubr.bf16.mxu0 %v4518
        %5114 = vmatmul.mubr.bf16.gmra.mxu0 %v4517
        %v5115 = vpop.f32.mrf.mxu0
        %v5116 = vadd.f32 %v4859, %v5115
        %v5117 = vpop.f32.mrf.mxu0
        %v5118 = vpop.f32.mrf.mxu0
        %v5119 = vadd.f32 %v4862, %v5118
        %v5120 = vpop.f32.mrf.mxu0
        %5121 = vmatprep.mubr.bf16.mxu0 %v4521
        %5122 = vmatmul.mubr.bf16.gmra.mxu0 %v4520
        %v5123 = vpop.f32.mrf.mxu0
        %v5124 = vadd.f32 %v4867, %v5123
        %v5125 = vpop.f32.mrf.mxu0
        %v5126 = vpop.f32.mrf.mxu0
        %v5127 = vadd.f32 %v4870, %v5126
        %v5128 = vpop.f32.mrf.mxu0
        %5129 = vmatprep.mubr.bf16.mxu0 %v4524
        %5130 = vmatmul.mubr.bf16.gmra.mxu0 %v4523
        %v5131 = vpop.f32.mrf.mxu0
        %v5132 = vadd.f32 %v4875, %v5131
        %v5133 = vpop.f32.mrf.mxu0
        %v5134 = vpop.f32.mrf.mxu0
        %v5135 = vadd.f32 %v4878, %v5134
        %v5136 = vpop.f32.mrf.mxu0
        %5137 = vmatprep.mubr.bf16.mxu0 %v4527
        %5138 = vmatmul.mubr.bf16.gmra.mxu0 %v4526
        %v5139 = vpop.f32.mrf.mxu0
        %v5140 = vadd.f32 %v4883, %v5139
        %v5141 = vpop.f32.mrf.mxu0
        %v5142 = vpop.f32.mrf.mxu0
        %v5143 = vadd.f32 %v4886, %v5142
        %v5144 = vpop.f32.mrf.mxu0
        %5145 = vmatprep.mubr.bf16.mxu0 %v4530
        %5146 = vmatmul.mubr.bf16.gmra.mxu0 %v4529
        %v5147 = vpop.f32.mrf.mxu0
        %v5148 = vadd.f32 %v4891, %v5147
        %v5149 = vpop.f32.mrf.mxu0
        %v5150 = vpop.f32.mrf.mxu0
        %v5151 = vadd.f32 %v4894, %v5150
        %v5152 = vpop.f32.mrf.mxu0
        %5153 = vdwg.mxu0
        %5154 = vmatprep.subr.bf16.mxu0 0
        %5155 = vmatpush1.bf16.msra.mxu0 %v5032
        %5156 = vmatprep.subr.bf16.mxu0 0
        %5157 = vmatpush1.bf16.msra.mxu0 %v5031
        %5158 = vmatprep.subr.bf16.mxu0 0
        %5159 = vmatpush1.bf16.msra.mxu0 %v5030
        %5160 = vmatprep.subr.bf16.mxu0 0
        %5161 = vmatpush1.bf16.msra.mxu0 %v5029
        %5162 = vmatprep.subr.bf16.mxu0 0
        %5163 = vmatpush1.bf16.msra.mxu0 %v5028
        %5164 = vmatprep.subr.bf16.mxu0 0
        %5165 = vmatpush1.bf16.msra.mxu0 %v5027
        %5166 = vmatprep.subr.bf16.mxu0 0
        %5167 = vmatpush1.bf16.msra.mxu0 %v5026
        %5168 = vmatprep.subr.bf16.mxu0 0
        %5169 = vmatpush1.bf16.msra.mxu0 %v5025
        %5170 = vmatprep.subr.bf16.mxu0 0
        %5171 = vmatpush2.bf16.msra.mxu0 0
        %5172 = vmatprep.subr.bf16.mxu0 0
        %5173 = vmatpush2.bf16.msra.mxu0 0
        %5174 = vmatprep.subr.bf16.mxu0 0
        %5175 = vmatpush2.bf16.msra.mxu0 0
        %5176 = vmatprep.subr.bf16.mxu0 0
        %5177 = vmatpush2.bf16.msra.mxu0 0
        %5178 = vmatprep.subr.bf16.mxu0 0
        %5179 = vmatpush2.bf16.msra.mxu0 0
        %5180 = vmatprep.subr.bf16.mxu0 0
        %5181 = vmatpush2.bf16.msra.mxu0 0
        %5182 = vmatprep.subr.bf16.mxu0 0
        %5183 = vmatpush2.bf16.msra.mxu0 0
        %5184 = vmatprep.subr.bf16.mxu0 0
        %5185 = vmatpush2.bf16.msra.mxu0 0
        %5186 = vmatprep.mubr.bf16.mxu0 0
        %5187 = vmatmul.mubr.bf16.gmra.mxu0 %v4909
        %v5188 = vpop.f32.mrf.mxu0
        %v5189 = vadd.f32 %v5092, %v5188
        %v5190 = vpop.f32.mrf.mxu0
        %v5191 = vpop.f32.mrf.mxu0
        %v5192 = vadd.f32 %v5095, %v5191
        %v5193 = vpop.f32.mrf.mxu0
        %5194 = vmatprep.mubr.bf16.mxu0 0
        %5195 = vmatmul.mubr.bf16.gmra.mxu0 %v4513
        %v5196 = vpop.f32.mrf.mxu0
        %v5197 = vadd.f32 %v5100, %v5196
        %v5198 = vpop.f32.mrf.mxu0
        %v5199 = vpop.f32.mrf.mxu0
        %v5200 = vadd.f32 %v5103, %v5199
        %v5201 = vpop.f32.mrf.mxu0
        %5202 = vmatprep.mubr.bf16.mxu0 0
        %5203 = vmatmul.mubr.bf16.gmra.mxu0 %v4516
        %v5204 = vpop.f32.mrf.mxu0
        %v5205 = vadd.f32 %v5108, %v5204
        %v5206 = vpop.f32.mrf.mxu0
        %v5207 = vpop.f32.mrf.mxu0
        %v5208 = vadd.f32 %v5111, %v5207
        %v5209 = vpop.f32.mrf.mxu0
        %5210 = vmatprep.mubr.bf16.mxu0 0
        %5211 = vmatmul.mubr.bf16.gmra.mxu0 %v4519
        %v5212 = vpop.f32.mrf.mxu0
        %v5213 = vadd.f32 %v5116, %v5212
        %v5214 = vpop.f32.mrf.mxu0
        %v5215 = vpop.f32.mrf.mxu0
        %v5216 = vadd.f32 %v5119, %v5215
        %v5217 = vpop.f32.mrf.mxu0
        %5218 = vmatprep.mubr.bf16.mxu0 0
        %5219 = vmatmul.mubr.bf16.gmra.mxu0 %v4522
        %v5220 = vpop.f32.mrf.mxu0
        %v5221 = vadd.f32 %v5124, %v5220
        %v5222 = vpop.f32.mrf.mxu0
        %v5223 = vpop.f32.mrf.mxu0
        %v5224 = vadd.f32 %v5127, %v5223
        %v5225 = vpop.f32.mrf.mxu0
        %5226 = vmatprep.mubr.bf16.mxu0 0
        %5227 = vmatmul.mubr.bf16.gmra.mxu0 %v4525
        %v5228 = vpop.f32.mrf.mxu0
        %v5229 = vadd.f32 %v5132, %v5228
        %v5230 = vpop.f32.mrf.mxu0
        %v5231 = vpop.f32.mrf.mxu0
        %v5232 = vadd.f32 %v5135, %v5231
        %v5233 = vpop.f32.mrf.mxu0
        %5234 = vmatprep.mubr.bf16.mxu0 0
        %5235 = vmatmul.mubr.bf16.gmra.mxu0 %v4528
        %v5236 = vpop.f32.mrf.mxu0
        %v5237 = vadd.f32 %v5140, %v5236
        %v5238 = vpop.f32.mrf.mxu0
        %v5239 = vpop.f32.mrf.mxu0
        %v5240 = vadd.f32 %v5143, %v5239
        %v5241 = vpop.f32.mrf.mxu0
        %5242 = vmatprep.mubr.bf16.mxu0 0
        %5243 = vmatmul.mubr.bf16.gmra.mxu0 %v4531
        %v5244 = vpop.f32.mrf.mxu0
        %v5245 = vadd.f32 %v5148, %v5244
        %v5246 = vpop.f32.mrf.mxu0
        %v5247 = vpop.f32.mrf.mxu0
        %v5248 = vadd.f32 %v5151, %v5247
        %v5249 = vpop.f32.mrf.mxu0
        %5250 = vdwg.mxu0
        %v5251 = vld [vmem:[#allocation2 + $0xf0] sm:$0xff]
        %v5252 = vld [vmem:[#allocation2 + $0xf8] sm:$0xf]
        %v5253 = vld [vmem:[#allocation2 + $0xfc] sm:$0xff]
        %v5254 = vld [vmem:[#allocation2 + $0x104] sm:$0xf]
        %v5255 = vld [vmem:[#allocation2 + $0x108] sm:$0xff]
        %v5256 = vld [vmem:[#allocation2 + $0x110] sm:$0xf]
        %v5257 = vld [vmem:[#allocation2 + $0x114] sm:$0xff]
        %v5258 = vld [vmem:[#allocation2 + $0x11c] sm:$0xf]
        %v5259 = vld [vmem:[#allocation2 + $0x120] sm:$0xff]
        %v5260 = vld [vmem:[#allocation2 + $0x128] sm:$0xf]
        %v5261 = vld [vmem:[#allocation2 + $0x12c] sm:$0xff]
        %v5262 = vld [vmem:[#allocation2 + $0x134] sm:$0xf]
        %v5263 = vld [vmem:[#allocation2 + $0x138] sm:$0xff]
        %v5264 = vld [vmem:[#allocation2 + $0x140] sm:$0xf]
        %v5265 = vld [vmem:[#allocation2 + $0x144] sm:$0xff]
        %v5266 = vld [vmem:[#allocation2 + $0x14c] sm:$0xf]
        %v5267 = vld [vmem:[#allocation2 + $0x150] sm:$0xff]
        %v5268 = vld [vmem:[#allocation2 + $0x158] sm:$0xf]
        %v5269 = vld [vmem:[#allocation2 + $0x15c] sm:$0xff]
        %v5270 = vld [vmem:[#allocation2 + $0x164] sm:$0xf]
        %v5271 = vld [vmem:[#allocation2 + $0x168] sm:$0xff]
        %v5272 = vld [vmem:[#allocation2 + $0x170] sm:$0xf]
        %v5273 = vld [vmem:[#allocation2 + $0x174] sm:$0xff]
        %v5274 = vld [vmem:[#allocation2 + $0x17c] sm:$0xf]
        %v5275 = vld [vmem:[#allocation2 + $0x180] sm:$0xff]
        %v5276 = vld [vmem:[#allocation2 + $0x188] sm:$0xf]
        %v5277 = vld [vmem:[#allocation2 + $0x18c] sm:$0xff]
        %v5278 = vld [vmem:[#allocation2 + $0x194] sm:$0xf]
        %v5279 = vld [vmem:[#allocation2 + $0x198] sm:$0xff]
        %v5280 = vld [vmem:[#allocation2 + $0x1a0] sm:$0xf]
        %v5281 = vld [vmem:[#allocation2 + $0x1a4] sm:$0xff]
        %v5282 = vld [vmem:[#allocation2 + $0x1ac] sm:$0xf]
        %v5283 = vld [vmem:[%s3273] sm:$0xf]
        %v5284 = vld [vmem:[%s3273 + $0x4] sm:$0xf]
        %v5285 = vld [vmem:[%s3273 + $0x8] sm:$0xf]
        %v5286 = vld [vmem:[%s3273 + $0xc] sm:$0xf]
        %v5287 = vld [vmem:[%s3273 + $0x10] sm:$0xf]
        %v5288 = vld [vmem:[%s3273 + $0x14] sm:$0xf]
        %v5289 = vld [vmem:[%s3273 + $0x18] sm:$0xf]
        %v5290 = vld [vmem:[%s3273 + $0x1c] sm:$0xf]
        %v5291 = vld [vmem:[%s3273 + $0x20] sm:$0xf]
        %v5292 = vld [vmem:[%s3273 + $0x24] sm:$0xf]
        %v5293 = vld [vmem:[%s3273 + $0x28] sm:$0xf]
        %v5294 = vld [vmem:[%s3273 + $0x2c] sm:$0xf]
        %v5295 = vld [vmem:[%s3273 + $0x30] sm:$0xf]
        %v5296 = vld [vmem:[%s3273 + $0x34] sm:$0xf]
        %v5297 = vld [vmem:[%s3273 + $0x38] sm:$0xf]
        %v5298 = vld [vmem:[%s3273 + $0x3c] sm:$0xf]
        %v5299 = vld [vmem:[%s3273 + $0x40] sm:$0xf]
        %v5300 = vld [vmem:[%s3273 + $0x44] sm:$0xf]
        %v5301 = vld [vmem:[%s3273 + $0x48] sm:$0xf]
        %v5302 = vld [vmem:[%s3273 + $0x4c] sm:$0xf]
        %v5303 = vld [vmem:[%s3273 + $0x50] sm:$0xf]
        %v5304 = vld [vmem:[%s3273 + $0x54] sm:$0xf]
        %v5305 = vld [vmem:[%s3273 + $0x58] sm:$0xf]
        %v5306 = vld [vmem:[%s3273 + $0x5c] sm:$0xf]
        %v5307 = vld [vmem:[%s3273 + $0x60] sm:$0xf]
        %v5308 = vld [vmem:[%s3273 + $0x64] sm:$0xf]
        %v5309 = vld [vmem:[%s3273 + $0x68] sm:$0xf]
        %v5310 = vld [vmem:[%s3273 + $0x6c] sm:$0xf]
        %v5311 = vld [vmem:[%s3273 + $0x70] sm:$0xf]
        %v5312 = vld [vmem:[%s3273 + $0x74] sm:$0xf]
        %v5313 = vld [vmem:[%s3273 + $0x78] sm:$0xf]
        %v5314 = vld [vmem:[%s3273 + $0x7c] sm:$0xf]
        %v5315 = vld [vmem:[%s3273 + $0x80] sm:$0xf]
        %v5316 = vld [vmem:[%s3273 + $0x84] sm:$0xf]
        %v5317 = vld [vmem:[%s3273 + $0x88] sm:$0xf]
        %v5318 = vld [vmem:[%s3273 + $0x8c] sm:$0xf]
        %v5319 = vld [vmem:[%s3273 + $0x90] sm:$0xf]
        %v5320 = vld [vmem:[%s3273 + $0x94] sm:$0xf]
        %v5321 = vld [vmem:[%s3273 + $0x98] sm:$0xf]
        %v5322 = vld [vmem:[%s3273 + $0x9c] sm:$0xf]
        %v5323 = vld [vmem:[%s3273 + $0xa0] sm:$0xf]
        %v5324 = vld [vmem:[%s3273 + $0xa4] sm:$0xf]
        %v5325 = vld [vmem:[%s3273 + $0xa8] sm:$0xf]
        %v5326 = vld [vmem:[%s3273 + $0xac] sm:$0xf]
        %v5327 = vld [vmem:[%s3273 + $0xb0] sm:$0xf]
        %v5328 = vld [vmem:[%s3273 + $0xb4] sm:$0xf]
        %v5329 = vld [vmem:[%s3273 + $0xb8] sm:$0xf]
        %v5330 = vld [vmem:[%s3273 + $0xbc] sm:$0xf]
        %v5363 = vunpack.c.l.b16 %v5251
        %v5364 = vunpack.c.h.b16 %v5251
        %v5365 = vunpack.c.l.b16 %v5252
        %v5366 = vunpack.c.l.b16 %v5253
        %v5367 = vunpack.c.h.b16 %v5253
        %v5368 = vunpack.c.l.b16 %v5254
        %v5369 = vunpack.c.l.b16 %v5255
        %v5370 = vunpack.c.h.b16 %v5255
        %v5371 = vunpack.c.l.b16 %v5256
        %v5372 = vunpack.c.l.b16 %v5257
        %v5373 = vunpack.c.h.b16 %v5257
        %v5374 = vunpack.c.l.b16 %v5258
        %v5375 = vunpack.c.l.b16 %v5259
        %v5376 = vunpack.c.h.b16 %v5259
        %v5377 = vunpack.c.l.b16 %v5260
        %v5378 = vunpack.c.l.b16 %v5261
        %v5379 = vunpack.c.h.b16 %v5261
        %v5380 = vunpack.c.l.b16 %v5262
        %v5381 = vunpack.c.l.b16 %v5263
        %v5382 = vunpack.c.h.b16 %v5263
        %v5383 = vunpack.c.l.b16 %v5264
        %v5384 = vunpack.c.l.b16 %v5265
        %v5385 = vunpack.c.h.b16 %v5265
        %v5386 = vunpack.c.l.b16 %v5266
        %v5387 = vunpack.c.l.b16 %v5267
        %v5388 = vunpack.c.h.b16 %v5267
        %v5389 = vunpack.c.l.b16 %v5268
        %v5390 = vunpack.c.l.b16 %v5269
        %v5391 = vunpack.c.h.b16 %v5269
        %v5392 = vunpack.c.l.b16 %v5270
        %v5393 = vunpack.c.l.b16 %v5271
        %v5394 = vunpack.c.h.b16 %v5271
        %v5395 = vunpack.c.l.b16 %v5272
        %v5396 = vunpack.c.l.b16 %v5273
        %v5397 = vunpack.c.h.b16 %v5273
        %v5398 = vunpack.c.l.b16 %v5274
        %v5399 = vunpack.c.l.b16 %v5275
        %v5400 = vunpack.c.h.b16 %v5275
        %v5401 = vunpack.c.l.b16 %v5276
        %v5402 = vunpack.c.l.b16 %v5277
        %v5403 = vunpack.c.h.b16 %v5277
        %v5404 = vunpack.c.l.b16 %v5278
        %v5405 = vunpack.c.l.b16 %v5279
        %v5406 = vunpack.c.h.b16 %v5279
        %v5407 = vunpack.c.l.b16 %v5280
        %v5408 = vunpack.c.l.b16 %v5281
        %v5409 = vunpack.c.h.b16 %v5281
        %v5410 = vunpack.c.l.b16 %v5282
        %v5411 = vpack.c.b16 %v5366, %v5363
        %v5412 = vpack.c.b16 %v5367, %v5364
        %v5413 = vpack.c.b16 %v5368, %v5365
        %v5414 = vpack.c.b16 %v5372, %v5369
        %v5415 = vpack.c.b16 %v5373, %v5370
        %v5416 = vpack.c.b16 %v5374, %v5371
        %v5417 = vpack.c.b16 %v5378, %v5375
        %v5418 = vpack.c.b16 %v5379, %v5376
        %v5419 = vpack.c.b16 %v5380, %v5377
        %v5420 = vpack.c.b16 %v5384, %v5381
        %v5421 = vpack.c.b16 %v5385, %v5382
        %v5422 = vpack.c.b16 %v5386, %v5383
        %v5423 = vpack.c.b16 %v5390, %v5387
        %v5424 = vpack.c.b16 %v5391, %v5388
        %v5425 = vpack.c.b16 %v5392, %v5389
        %v5426 = vpack.c.b16 %v5396, %v5393
        %v5427 = vpack.c.b16 %v5397, %v5394
        %v5428 = vpack.c.b16 %v5398, %v5395
        %v5429 = vpack.c.b16 %v5402, %v5399
        %v5430 = vpack.c.b16 %v5403, %v5400
        %v5431 = vpack.c.b16 %v5404, %v5401
        %v5432 = vpack.c.b16 %v5408, %v5405
        %v5433 = vpack.c.b16 %v5409, %v5406
        %v5434 = vpack.c.b16 %v5410, %v5407
        %v5507 = vunpack.c.l.b16 %v5283
        %v5508 = vunpack.c.l.b16 %v5284
        %v5509 = vunpack.c.l.b16 %v5285
        %v5510 = vunpack.c.l.b16 %v5286
        %v5511 = vunpack.c.l.b16 %v5287
        %v5512 = vunpack.c.l.b16 %v5288
        %v5513 = vunpack.c.l.b16 %v5289
        %v5514 = vunpack.c.l.b16 %v5290
        %v5515 = vunpack.c.l.b16 %v5291
        %v5516 = vunpack.c.l.b16 %v5292
        %v5517 = vunpack.c.l.b16 %v5293
        %v5518 = vunpack.c.l.b16 %v5294
        %v5519 = vunpack.c.l.b16 %v5295
        %v5520 = vunpack.c.l.b16 %v5296
        %v5521 = vunpack.c.l.b16 %v5297
        %v5522 = vunpack.c.l.b16 %v5298
        %v5523 = vunpack.c.l.b16 %v5299
        %v5524 = vunpack.c.l.b16 %v5300
        %v5525 = vunpack.c.l.b16 %v5301
        %v5526 = vunpack.c.l.b16 %v5302
        %v5527 = vunpack.c.l.b16 %v5303
        %v5528 = vunpack.c.l.b16 %v5304
        %v5529 = vunpack.c.l.b16 %v5305
        %v5530 = vunpack.c.l.b16 %v5306
        %v5531 = vunpack.c.l.b16 %v5307
        %v5532 = vunpack.c.l.b16 %v5308
        %v5533 = vunpack.c.l.b16 %v5309
        %v5534 = vunpack.c.l.b16 %v5310
        %v5535 = vunpack.c.l.b16 %v5311
        %v5536 = vunpack.c.l.b16 %v5312
        %v5537 = vunpack.c.l.b16 %v5313
        %v5538 = vunpack.c.l.b16 %v5314
        %v5539 = vunpack.c.l.b16 %v5315
        %v5540 = vunpack.c.l.b16 %v5316
        %v5541 = vunpack.c.l.b16 %v5317
        %v5542 = vunpack.c.l.b16 %v5318
        %v5543 = vunpack.c.l.b16 %v5319
        %v5544 = vunpack.c.l.b16 %v5320
        %v5545 = vunpack.c.l.b16 %v5321
        %v5546 = vunpack.c.l.b16 %v5322
        %v5547 = vunpack.c.l.b16 %v5323
        %v5548 = vunpack.c.l.b16 %v5324
        %v5549 = vunpack.c.l.b16 %v5325
        %v5550 = vunpack.c.l.b16 %v5326
        %v5551 = vunpack.c.l.b16 %v5327
        %v5552 = vunpack.c.l.b16 %v5328
        %v5553 = vunpack.c.l.b16 %v5329
        %v5554 = vunpack.c.l.b16 %v5330
        %v5555 = vpack.c.b16 %v5508, %v5507
        %v5556 = vpack.c.b16 %v5510, %v5509
        %v5557 = vpack.c.b16 %v5512, %v5511
        %v5558 = vpack.c.b16 %v5514, %v5513
        %v5559 = vpack.c.b16 %v5516, %v5515
        %v5560 = vpack.c.b16 %v5518, %v5517
        %v5561 = vpack.c.b16 %v5520, %v5519
        %v5562 = vpack.c.b16 %v5522, %v5521
        %v5563 = vpack.c.b16 %v5524, %v5523
        %v5564 = vpack.c.b16 %v5526, %v5525
        %v5565 = vpack.c.b16 %v5528, %v5527
        %v5566 = vpack.c.b16 %v5530, %v5529
        %v5567 = vpack.c.b16 %v5532, %v5531
        %v5568 = vpack.c.b16 %v5534, %v5533
        %v5569 = vpack.c.b16 %v5536, %v5535
        %v5570 = vpack.c.b16 %v5538, %v5537
        %v5571 = vpack.c.b16 %v5540, %v5539
        %v5572 = vpack.c.b16 %v5542, %v5541
        %v5573 = vpack.c.b16 %v5544, %v5543
        %v5574 = vpack.c.b16 %v5546, %v5545
        %v5575 = vpack.c.b16 %v5548, %v5547
        %v5576 = vpack.c.b16 %v5550, %v5549
        %v5577 = vpack.c.b16 %v5552, %v5551
        %v5578 = vpack.c.b16 %v5554, %v5553
        %5603 = vmatprep.subr.bf16.mxu0 0
        %5604 = vmatpush1.bf16.msra.mxu0 %v5562
        %5605 = vmatprep.subr.bf16.mxu0 0
        %5606 = vmatpush1.bf16.msra.mxu0 %v5561
        %5607 = vmatprep.subr.bf16.mxu0 0
        %5608 = vmatpush1.bf16.msra.mxu0 %v5560
        %5609 = vmatprep.subr.bf16.mxu0 0
        %5610 = vmatpush1.bf16.msra.mxu0 %v5559
        %5611 = vmatprep.subr.bf16.mxu0 0
        %5612 = vmatpush1.bf16.msra.mxu0 %v5558
        %5613 = vmatprep.subr.bf16.mxu0 0
        %5614 = vmatpush1.bf16.msra.mxu0 %v5557
        %5615 = vmatprep.subr.bf16.mxu0 0
        %5616 = vmatpush1.bf16.msra.mxu0 %v5556
        %5617 = vmatprep.subr.bf16.mxu0 0
        %5618 = vmatpush1.bf16.msra.mxu0 %v5555
        %5619 = vmatprep.subr.bf16.mxu0 0
        %5620 = vmatpush2.bf16.msra.mxu0 %v5570
        %5621 = vmatprep.subr.bf16.mxu0 0
        %5622 = vmatpush2.bf16.msra.mxu0 %v5569
        %5623 = vmatprep.subr.bf16.mxu0 0
        %5624 = vmatpush2.bf16.msra.mxu0 %v5568
        %5625 = vmatprep.subr.bf16.mxu0 0
        %5626 = vmatpush2.bf16.msra.mxu0 %v5567
        %5627 = vmatprep.subr.bf16.mxu0 0
        %5628 = vmatpush2.bf16.msra.mxu0 %v5566
        %5629 = vmatprep.subr.bf16.mxu0 0
        %5630 = vmatpush2.bf16.msra.mxu0 %v5565
        %5631 = vmatprep.subr.bf16.mxu0 0
        %5632 = vmatpush2.bf16.msra.mxu0 %v5564
        %5633 = vmatprep.subr.bf16.mxu0 0
        %5634 = vmatpush2.bf16.msra.mxu0 %v5563
        %5635 = vmatprep.mubr.bf16.mxu0 %v5412
        %5636 = vmatmul.mubr.bf16.gmra.mxu0 %v5411
        %v5637 = vpop.f32.mrf.mxu0
        %v5638 = vadd.f32 0.0, %v5637
        %v5639 = vpop.f32.mrf.mxu0
        %v5640 = vpop.f32.mrf.mxu0
        %v5641 = vadd.f32 0.0, %v5640
        %v5642 = vpop.f32.mrf.mxu0
        %5643 = vmatprep.mubr.bf16.mxu0 %v5415
        %5644 = vmatmul.mubr.bf16.gmra.mxu0 %v5414
        %v5645 = vpop.f32.mrf.mxu0
        %v5646 = vadd.f32 0.0, %v5645
        %v5647 = vpop.f32.mrf.mxu0
        %v5648 = vpop.f32.mrf.mxu0
        %v5649 = vadd.f32 0.0, %v5648
        %v5650 = vpop.f32.mrf.mxu0
        %5651 = vmatprep.mubr.bf16.mxu0 %v5418
        %5652 = vmatmul.mubr.bf16.gmra.mxu0 %v5417
        %v5653 = vpop.f32.mrf.mxu0
        %v5654 = vadd.f32 0.0, %v5653
        %v5655 = vpop.f32.mrf.mxu0
        %v5656 = vpop.f32.mrf.mxu0
        %v5657 = vadd.f32 0.0, %v5656
        %v5658 = vpop.f32.mrf.mxu0
        %5659 = vmatprep.mubr.bf16.mxu0 %v5421
        %5660 = vmatmul.mubr.bf16.gmra.mxu0 %v5420
        %v5661 = vpop.f32.mrf.mxu0
        %v5662 = vadd.f32 0.0, %v5661
        %v5663 = vpop.f32.mrf.mxu0
        %v5664 = vpop.f32.mrf.mxu0
        %v5665 = vadd.f32 0.0, %v5664
        %v5666 = vpop.f32.mrf.mxu0
        %5667 = vmatprep.mubr.bf16.mxu0 %v5424
        %5668 = vmatmul.mubr.bf16.gmra.mxu0 %v5423
        %v5669 = vpop.f32.mrf.mxu0
        %v5670 = vadd.f32 0.0, %v5669
        %v5671 = vpop.f32.mrf.mxu0
        %v5672 = vpop.f32.mrf.mxu0
        %v5673 = vadd.f32 0.0, %v5672
        %v5674 = vpop.f32.mrf.mxu0
        %5675 = vmatprep.mubr.bf16.mxu0 %v5427
        %5676 = vmatmul.mubr.bf16.gmra.mxu0 %v5426
        %v5677 = vpop.f32.mrf.mxu0
        %v5678 = vadd.f32 0.0, %v5677
        %v5679 = vpop.f32.mrf.mxu0
        %v5680 = vpop.f32.mrf.mxu0
        %v5681 = vadd.f32 0.0, %v5680
        %v5682 = vpop.f32.mrf.mxu0
        %5683 = vmatprep.mubr.bf16.mxu0 %v5430
        %5684 = vmatmul.mubr.bf16.gmra.mxu0 %v5429
        %v5685 = vpop.f32.mrf.mxu0
        %v5686 = vadd.f32 0.0, %v5685
        %v5687 = vpop.f32.mrf.mxu0
        %v5688 = vpop.f32.mrf.mxu0
        %v5689 = vadd.f32 0.0, %v5688
        %v5690 = vpop.f32.mrf.mxu0
        %5691 = vmatprep.mubr.bf16.mxu0 %v5433
        %5692 = vmatmul.mubr.bf16.gmra.mxu0 %v5432
        %v5693 = vpop.f32.mrf.mxu0
        %v5694 = vadd.f32 0.0, %v5693
        %v5695 = vpop.f32.mrf.mxu0
        %v5696 = vpop.f32.mrf.mxu0
        %v5697 = vadd.f32 0.0, %v5696
        %v5698 = vpop.f32.mrf.mxu0
        %5699 = vdwg.mxu0
        %5700 = vmatprep.subr.bf16.mxu0 0
        %5701 = vmatpush1.bf16.msra.mxu0 %v5578
        %5702 = vmatprep.subr.bf16.mxu0 0
        %5703 = vmatpush1.bf16.msra.mxu0 %v5577
        %5704 = vmatprep.subr.bf16.mxu0 0
        %5705 = vmatpush1.bf16.msra.mxu0 %v5576
        %5706 = vmatprep.subr.bf16.mxu0 0
        %5707 = vmatpush1.bf16.msra.mxu0 %v5575
        %5708 = vmatprep.subr.bf16.mxu0 0
        %5709 = vmatpush1.bf16.msra.mxu0 %v5574
        %5710 = vmatprep.subr.bf16.mxu0 0
        %5711 = vmatpush1.bf16.msra.mxu0 %v5573
        %5712 = vmatprep.subr.bf16.mxu0 0
        %5713 = vmatpush1.bf16.msra.mxu0 %v5572
        %5714 = vmatprep.subr.bf16.mxu0 0
        %5715 = vmatpush1.bf16.msra.mxu0 %v5571
        %5716 = vmatprep.subr.bf16.mxu0 0
        %5717 = vmatpush2.bf16.msra.mxu0 0
        %5718 = vmatprep.subr.bf16.mxu0 0
        %5719 = vmatpush2.bf16.msra.mxu0 0
        %5720 = vmatprep.subr.bf16.mxu0 0
        %5721 = vmatpush2.bf16.msra.mxu0 0
        %5722 = vmatprep.subr.bf16.mxu0 0
        %5723 = vmatpush2.bf16.msra.mxu0 0
        %5724 = vmatprep.subr.bf16.mxu0 0
        %5725 = vmatpush2.bf16.msra.mxu0 0
        %5726 = vmatprep.subr.bf16.mxu0 0
        %5727 = vmatpush2.bf16.msra.mxu0 0
        %5728 = vmatprep.subr.bf16.mxu0 0
        %5729 = vmatpush2.bf16.msra.mxu0 0
        %5730 = vmatprep.subr.bf16.mxu0 0
        %5731 = vmatpush2.bf16.msra.mxu0 0
        %5732 = vmatprep.mubr.bf16.mxu0 0
        %5733 = vmatmul.mubr.bf16.gmra.mxu0 %v5413
        %v5734 = vpop.f32.mrf.mxu0
        %v5735 = vadd.f32 %v5638, %v5734
        %v5736 = vpop.f32.mrf.mxu0
        %v5737 = vpop.f32.mrf.mxu0
        %v5738 = vadd.f32 %v5641, %v5737
        %v5739 = vpop.f32.mrf.mxu0
        %5740 = vmatprep.mubr.bf16.mxu0 0
        %5741 = vmatmul.mubr.bf16.gmra.mxu0 %v5416
        %v5742 = vpop.f32.mrf.mxu0
        %v5743 = vadd.f32 %v5646, %v5742
        %v5744 = vpop.f32.mrf.mxu0
        %v5745 = vpop.f32.mrf.mxu0
        %v5746 = vadd.f32 %v5649, %v5745
        %v5747 = vpop.f32.mrf.mxu0
        %5748 = vmatprep.mubr.bf16.mxu0 0
        %5749 = vmatmul.mubr.bf16.gmra.mxu0 %v5419
        %v5750 = vpop.f32.mrf.mxu0
        %v5751 = vadd.f32 %v5654, %v5750
        %v5752 = vpop.f32.mrf.mxu0
        %v5753 = vpop.f32.mrf.mxu0
        %v5754 = vadd.f32 %v5657, %v5753
        %v5755 = vpop.f32.mrf.mxu0
        %5756 = vmatprep.mubr.bf16.mxu0 0
        %5757 = vmatmul.mubr.bf16.gmra.mxu0 %v5422
        %v5758 = vpop.f32.mrf.mxu0
        %v5759 = vadd.f32 %v5662, %v5758
        %v5760 = vpop.f32.mrf.mxu0
        %v5761 = vpop.f32.mrf.mxu0
        %v5762 = vadd.f32 %v5665, %v5761
        %v5763 = vpop.f32.mrf.mxu0
        %5764 = vmatprep.mubr.bf16.mxu0 0
        %5765 = vmatmul.mubr.bf16.gmra.mxu0 %v5425
        %v5766 = vpop.f32.mrf.mxu0
        %v5767 = vadd.f32 %v5670, %v5766
        %v5768 = vpop.f32.mrf.mxu0
        %v5769 = vpop.f32.mrf.mxu0
        %v5770 = vadd.f32 %v5673, %v5769
        %v5771 = vpop.f32.mrf.mxu0
        %5772 = vmatprep.mubr.bf16.mxu0 0
        %5773 = vmatmul.mubr.bf16.gmra.mxu0 %v5428
        %v5774 = vpop.f32.mrf.mxu0
        %v5775 = vadd.f32 %v5678, %v5774
        %v5776 = vpop.f32.mrf.mxu0
        %v5777 = vpop.f32.mrf.mxu0
        %v5778 = vadd.f32 %v5681, %v5777
        %v5779 = vpop.f32.mrf.mxu0
        %5780 = vmatprep.mubr.bf16.mxu0 0
        %5781 = vmatmul.mubr.bf16.gmra.mxu0 %v5431
        %v5782 = vpop.f32.mrf.mxu0
        %v5783 = vadd.f32 %v5686, %v5782
        %v5784 = vpop.f32.mrf.mxu0
        %v5785 = vpop.f32.mrf.mxu0
        %v5786 = vadd.f32 %v5689, %v5785
        %v5787 = vpop.f32.mrf.mxu0
        %5788 = vmatprep.mubr.bf16.mxu0 0
        %5789 = vmatmul.mubr.bf16.gmra.mxu0 %v5434
        %v5790 = vpop.f32.mrf.mxu0
        %v5791 = vadd.f32 %v5694, %v5790
        %v5792 = vpop.f32.mrf.mxu0
        %v5793 = vpop.f32.mrf.mxu0
        %v5794 = vadd.f32 %v5697, %v5793
        %v5795 = vpop.f32.mrf.mxu0
        %5796 = vdwg.mxu0
        %v5797 = vadd.f32 %v5189, %v5735
        %v5798 = vadd.f32 %v5192, %v5738
        %v5799 = vadd.f32 %v5197, %v5743
        %v5800 = vadd.f32 %v5200, %v5746
        %v5801 = vadd.f32 %v5205, %v5751
        %v5802 = vadd.f32 %v5208, %v5754
        %v5803 = vadd.f32 %v5213, %v5759
        %v5804 = vadd.f32 %v5216, %v5762
        %v5805 = vadd.f32 %v5221, %v5767
        %v5806 = vadd.f32 %v5224, %v5770
        %v5807 = vadd.f32 %v5229, %v5775
        %v5808 = vadd.f32 %v5232, %v5778
        %v5809 = vadd.f32 %v5237, %v5783
        %v5810 = vadd.f32 %v5240, %v5786
        %v5811 = vadd.f32 %v5245, %v5791
        %v5812 = vadd.f32 %v5248, %v5794
        %v5813 = vld [vmem:[%s5] sm:$0x1]
        %v5815 = vlaneseq
        %v5816 = vshrl.u32 %v5815, 7
        %v5817 = vsub.s32 0, %v5816
        %v5818 = vrot.slane %v5813, %v5817
        %v5820 = vadd.f32 %v5797, %v5818
        %v5821 = vadd.f32 %v5798, %v5818
        %v5822 = vadd.f32 %v5799, %v5818
        %v5823 = vadd.f32 %v5800, %v5818
        %v5824 = vadd.f32 %v5801, %v5818
        %v5825 = vadd.f32 %v5802, %v5818
        %v5826 = vadd.f32 %v5803, %v5818
        %v5827 = vadd.f32 %v5804, %v5818
        %v5828 = vadd.f32 %v5805, %v5818
        %v5829 = vadd.f32 %v5806, %v5818
        %v5830 = vadd.f32 %v5807, %v5818
        %v5831 = vadd.f32 %v5808, %v5818
        %v5832 = vadd.f32 %v5809, %v5818
        %v5833 = vadd.f32 %v5810, %v5818
        %v5834 = vadd.f32 %v5811, %v5818
        %v5835 = vadd.f32 %v5812, %v5818
        %v5836 = vmax.f32 %v5820, 0.0
        %v5837 = vmax.f32 %v5821, 0.0
        %v5838 = vmax.f32 %v5822, 0.0
        %v5839 = vmax.f32 %v5823, 0.0
        %v5840 = vmax.f32 %v5824, 0.0
        %v5841 = vmax.f32 %v5825, 0.0
        %v5842 = vmax.f32 %v5826, 0.0
        %v5843 = vmax.f32 %v5827, 0.0
        %v5844 = vmax.f32 %v5828, 0.0
        %v5845 = vmax.f32 %v5829, 0.0
        %v5846 = vmax.f32 %v5830, 0.0
        %v5847 = vmax.f32 %v5831, 0.0
        %v5848 = vmax.f32 %v5832, 0.0
        %v5849 = vmax.f32 %v5833, 0.0
        %v5850 = vmax.f32 %v5834, 0.0
        %v5851 = vmax.f32 %v5835, 0.0
        %v5852 = vpack.c.bf16 %v5837, %v5836
        %v5853 = vpack.c.bf16 %v5839, %v5838
        %v5854 = vpack.c.bf16 %v5841, %v5840
        %v5855 = vpack.c.bf16 %v5843, %v5842
        %v5856 = vpack.c.bf16 %v5845, %v5844
        %v5857 = vpack.c.bf16 %v5847, %v5846
        %v5858 = vpack.c.bf16 %v5849, %v5848
        %v5859 = vpack.c.bf16 %v5851, %v5850
        %v5860 = vld [vmem:[#allocation11] sm:$0xf]
        %v5861 = vld [vmem:[#allocation11 + $0x4] sm:$0xf]
        %v5862 = vld [vmem:[#allocation11 + $0x8] sm:$0xf]
        %v5863 = vld [vmem:[#allocation11 + $0xc] sm:$0xf]
        %v5864 = vld [vmem:[#allocation11 + $0x10] sm:$0xf]
        %v5865 = vld [vmem:[#allocation11 + $0x14] sm:$0xf]
        %v5866 = vld [vmem:[#allocation11 + $0x18] sm:$0xf]
        %v5867 = vld [vmem:[#allocation11 + $0x1c] sm:$0xf]
        %v5868 = vld [vmem:[#allocation11 + $0x20] sm:$0xf]
        %v5869 = vld [vmem:[#allocation11 + $0x24] sm:$0xf]
        %v5870 = vld [vmem:[#allocation11 + $0x28] sm:$0xf]
        %v5871 = vld [vmem:[#allocation11 + $0x2c] sm:$0xf]
        %v5872 = vld [vmem:[#allocation11 + $0x30] sm:$0xf]
        %v5873 = vld [vmem:[#allocation11 + $0x34] sm:$0xf]
        %v5874 = vld [vmem:[#allocation11 + $0x38] sm:$0xf]
        %v5875 = vld [vmem:[#allocation11 + $0x3c] sm:$0xf]
        %v5876 = vld [vmem:[%s7] sm:$0x1]
        %v5878 = vlaneseq
        %v5879 = vshrl.u32 %v5878, 7
        %v5880 = vsub.s32 0, %v5879
        %v5881 = vrot.slane %v5876, %v5880
        %v5899 = vunpack.c.l.b16 %v5860
        %v5900 = vunpack.c.l.b16 %v5861
        %v5901 = vunpack.c.l.b16 %v5862
        %v5902 = vunpack.c.l.b16 %v5863
        %v5903 = vunpack.c.l.b16 %v5864
        %v5904 = vunpack.c.l.b16 %v5865
        %v5905 = vunpack.c.l.b16 %v5866
        %v5906 = vunpack.c.l.b16 %v5867
        %v5907 = vunpack.c.l.b16 %v5868
        %v5908 = vunpack.c.l.b16 %v5869
        %v5909 = vunpack.c.l.b16 %v5870
        %v5910 = vunpack.c.l.b16 %v5871
        %v5911 = vunpack.c.l.b16 %v5872
        %v5912 = vunpack.c.l.b16 %v5873
        %v5913 = vunpack.c.l.b16 %v5874
        %v5914 = vunpack.c.l.b16 %v5875
        %v5915 = vpack.c.b16 %v5900, %v5899
        %v5916 = vpack.c.b16 %v5902, %v5901
        %v5917 = vpack.c.b16 %v5904, %v5903
        %v5918 = vpack.c.b16 %v5906, %v5905
        %v5919 = vpack.c.b16 %v5908, %v5907
        %v5920 = vpack.c.b16 %v5910, %v5909
        %v5921 = vpack.c.b16 %v5912, %v5911
        %v5922 = vpack.c.b16 %v5914, %v5913
        %5931 = vmatprep.subr.bf16.mxu0 0
        %5932 = vmatpush1.bf16.msra.mxu0 %v5922
        %5933 = vmatprep.subr.bf16.mxu0 0
        %5934 = vmatpush1.bf16.msra.mxu0 %v5921
        %5935 = vmatprep.subr.bf16.mxu0 0
        %5936 = vmatpush1.bf16.msra.mxu0 %v5920
        %5937 = vmatprep.subr.bf16.mxu0 0
        %5938 = vmatpush1.bf16.msra.mxu0 %v5919
        %5939 = vmatprep.subr.bf16.mxu0 0
        %5940 = vmatpush1.bf16.msra.mxu0 %v5918
        %5941 = vmatprep.subr.bf16.mxu0 0
        %5942 = vmatpush1.bf16.msra.mxu0 %v5917
        %5943 = vmatprep.subr.bf16.mxu0 0
        %5944 = vmatpush1.bf16.msra.mxu0 %v5916
        %5945 = vmatprep.subr.bf16.mxu0 0
        %5946 = vmatpush1.bf16.msra.mxu0 %v5915
        %5947 = vmatprep.subr.bf16.mxu0 0
        %5948 = vmatpush2.bf16.msra.mxu0 0
        %5949 = vmatprep.subr.bf16.mxu0 0
        %5950 = vmatpush2.bf16.msra.mxu0 0
        %5951 = vmatprep.subr.bf16.mxu0 0
        %5952 = vmatpush2.bf16.msra.mxu0 0
        %5953 = vmatprep.subr.bf16.mxu0 0
        %5954 = vmatpush2.bf16.msra.mxu0 0
        %5955 = vmatprep.subr.bf16.mxu0 0
        %5956 = vmatpush2.bf16.msra.mxu0 0
        %5957 = vmatprep.subr.bf16.mxu0 0
        %5958 = vmatpush2.bf16.msra.mxu0 0
        %5959 = vmatprep.subr.bf16.mxu0 0
        %5960 = vmatpush2.bf16.msra.mxu0 0
        %5961 = vmatprep.subr.bf16.mxu0 0
        %5962 = vmatpush2.bf16.msra.mxu0 0
        %5963 = vmatprep.mubr.bf16.mxu0 0
        %5964 = vmatmul.mubr.bf16.gmra.mxu0 %v5852
        %v5965 = vpop.f32.mrf.mxu0
        %v5966 = vadd.f32 %v5881, %v5965
        %v5967 = vpop.f32.mrf.mxu0
        %v5968 = vpop.f32.mrf.mxu0
        %v5969 = vadd.f32 %v5881, %v5968
        %v5970 = vpop.f32.mrf.mxu0
        %5971 = vmatprep.mubr.bf16.mxu0 0
        %5972 = vmatmul.mubr.bf16.gmra.mxu0 %v5853
        %v5973 = vpop.f32.mrf.mxu0
        %v5974 = vadd.f32 %v5881, %v5973
        %v5975 = vpop.f32.mrf.mxu0
        %v5976 = vpop.f32.mrf.mxu0
        %v5977 = vadd.f32 %v5881, %v5976
        %v5978 = vpop.f32.mrf.mxu0
        %5979 = vmatprep.mubr.bf16.mxu0 0
        %5980 = vmatmul.mubr.bf16.gmra.mxu0 %v5854
        %v5981 = vpop.f32.mrf.mxu0
        %v5982 = vadd.f32 %v5881, %v5981
        %v5983 = vpop.f32.mrf.mxu0
        %v5984 = vpop.f32.mrf.mxu0
        %v5985 = vadd.f32 %v5881, %v5984
        %v5986 = vpop.f32.mrf.mxu0
        %5987 = vmatprep.mubr.bf16.mxu0 0
        %5988 = vmatmul.mubr.bf16.gmra.mxu0 %v5855
        %v5989 = vpop.f32.mrf.mxu0
        %v5990 = vadd.f32 %v5881, %v5989
        %v5991 = vpop.f32.mrf.mxu0
        %v5992 = vpop.f32.mrf.mxu0
        %v5993 = vadd.f32 %v5881, %v5992
        %v5994 = vpop.f32.mrf.mxu0
        %5995 = vmatprep.mubr.bf16.mxu0 0
        %5996 = vmatmul.mubr.bf16.gmra.mxu0 %v5856
        %v5997 = vpop.f32.mrf.mxu0
        %v5998 = vadd.f32 %v5881, %v5997
        %v5999 = vpop.f32.mrf.mxu0
        %v6000 = vpop.f32.mrf.mxu0
        %v6001 = vadd.f32 %v5881, %v6000
        %v6002 = vpop.f32.mrf.mxu0
        %6003 = vmatprep.mubr.bf16.mxu0 0
        %6004 = vmatmul.mubr.bf16.gmra.mxu0 %v5857
        %v6005 = vpop.f32.mrf.mxu0
        %v6006 = vadd.f32 %v5881, %v6005
        %v6007 = vpop.f32.mrf.mxu0
        %v6008 = vpop.f32.mrf.mxu0
        %v6009 = vadd.f32 %v5881, %v6008
        %v6010 = vpop.f32.mrf.mxu0
        %6011 = vmatprep.mubr.bf16.mxu0 0
        %6012 = vmatmul.mubr.bf16.gmra.mxu0 %v5858
        %v6013 = vpop.f32.mrf.mxu0
        %v6014 = vadd.f32 %v5881, %v6013
        %v6015 = vpop.f32.mrf.mxu0
        %v6016 = vpop.f32.mrf.mxu0
        %v6017 = vadd.f32 %v5881, %v6016
        %v6018 = vpop.f32.mrf.mxu0
        %6019 = vmatprep.mubr.bf16.mxu0 0
        %6020 = vmatmul.mubr.bf16.gmra.mxu0 %v5859
        %v6021 = vpop.f32.mrf.mxu0
        %v6022 = vadd.f32 %v5881, %v6021
        %v6023 = vpop.f32.mrf.mxu0
        %v6024 = vpop.f32.mrf.mxu0
        %v6025 = vadd.f32 %v5881, %v6024
        %v6026 = vpop.f32.mrf.mxu0
        %6027 = vdwg.mxu0
        %v6028 = vld [vmem:[%s409 + $0x40] sm:$0xf]
        %v6029 = vld [vmem:[%s409 + $0x44] sm:$0xf]
        %v6030 = vld [vmem:[%s409 + $0x48] sm:$0xf]
        %v6031 = vld [vmem:[%s409 + $0x4c] sm:$0xf]
        %v6032 = vld [vmem:[%s409 + $0x50] sm:$0xf]
        %v6033 = vld [vmem:[%s409 + $0x54] sm:$0xf]
        %v6034 = vld [vmem:[%s409 + $0x58] sm:$0xf]
        %v6035 = vld [vmem:[%s409 + $0x5c] sm:$0xf]
        %v6036 = vld [vmem:[%s409 + $0x60] sm:$0xf]
        %v6037 = vld [vmem:[%s409 + $0x64] sm:$0xf]
        %v6038 = vld [vmem:[%s409 + $0x68] sm:$0xf]
        %v6039 = vld [vmem:[%s409 + $0x6c] sm:$0xf]
        %v6040 = vld [vmem:[%s409 + $0x70] sm:$0xf]
        %v6041 = vld [vmem:[%s409 + $0x74] sm:$0xf]
        %v6042 = vld [vmem:[%s409 + $0x78] sm:$0xf]
        %v6043 = vld [vmem:[%s409 + $0x7c] sm:$0xf]
        %v6044 = vld [vmem:[#allocation12] sm:$0xf]
        %v6045 = vld [vmem:[#allocation12 + $0x4] sm:$0xf]
        %v6046 = vld [vmem:[#allocation12 + $0x8] sm:$0xf]
        %v6047 = vld [vmem:[#allocation12 + $0xc] sm:$0xf]
        %v6048 = vld [vmem:[#allocation12 + $0x10] sm:$0xf]
        %v6049 = vld [vmem:[#allocation12 + $0x14] sm:$0xf]
        %v6050 = vld [vmem:[#allocation12 + $0x18] sm:$0xf]
        %v6051 = vld [vmem:[#allocation12 + $0x1c] sm:$0xf]
        %v6052 = vld [vmem:[#allocation12 + $0x20] sm:$0xf]
        %v6053 = vld [vmem:[#allocation12 + $0x24] sm:$0xf]
        %v6054 = vld [vmem:[#allocation12 + $0x28] sm:$0xf]
        %v6055 = vld [vmem:[#allocation12 + $0x2c] sm:$0xf]
        %v6056 = vld [vmem:[#allocation12 + $0x30] sm:$0xf]
        %v6057 = vld [vmem:[#allocation12 + $0x34] sm:$0xf]
        %v6058 = vld [vmem:[#allocation12 + $0x38] sm:$0xf]
        %v6059 = vld [vmem:[#allocation12 + $0x3c] sm:$0xf]
        %v6060 = vld [vmem:[%s9] sm:$0x1]
        %v6062 = vlaneseq
        %v6063 = vshrl.u32 %v6062, 7
        %v6064 = vsub.s32 0, %v6063
        %v6065 = vrot.slane %v6060, %v6064
        %v6083 = vunpack.c.l.b16 %v6028
        %v6084 = vunpack.c.l.b16 %v6029
        %v6085 = vunpack.c.l.b16 %v6030
        %v6086 = vunpack.c.l.b16 %v6031
        %v6087 = vunpack.c.l.b16 %v6032
        %v6088 = vunpack.c.l.b16 %v6033
        %v6089 = vunpack.c.l.b16 %v6034
        %v6090 = vunpack.c.l.b16 %v6035
        %v6091 = vunpack.c.l.b16 %v6036
        %v6092 = vunpack.c.l.b16 %v6037
        %v6093 = vunpack.c.l.b16 %v6038
        %v6094 = vunpack.c.l.b16 %v6039
        %v6095 = vunpack.c.l.b16 %v6040
        %v6096 = vunpack.c.l.b16 %v6041
        %v6097 = vunpack.c.l.b16 %v6042
        %v6098 = vunpack.c.l.b16 %v6043
        %v6099 = vpack.c.b16 %v6084, %v6083
        %v6100 = vpack.c.b16 %v6086, %v6085
        %v6101 = vpack.c.b16 %v6088, %v6087
        %v6102 = vpack.c.b16 %v6090, %v6089
        %v6103 = vpack.c.b16 %v6092, %v6091
        %v6104 = vpack.c.b16 %v6094, %v6093
        %v6105 = vpack.c.b16 %v6096, %v6095
        %v6106 = vpack.c.b16 %v6098, %v6097
        %v6131 = vunpack.c.l.b16 %v6044
        %v6132 = vunpack.c.l.b16 %v6045
        %v6133 = vunpack.c.l.b16 %v6046
        %v6134 = vunpack.c.l.b16 %v6047
        %v6135 = vunpack.c.l.b16 %v6048
        %v6136 = vunpack.c.l.b16 %v6049
        %v6137 = vunpack.c.l.b16 %v6050
        %v6138 = vunpack.c.l.b16 %v6051
        %v6139 = vunpack.c.l.b16 %v6052
        %v6140 = vunpack.c.l.b16 %v6053
        %v6141 = vunpack.c.l.b16 %v6054
        %v6142 = vunpack.c.l.b16 %v6055
        %v6143 = vunpack.c.l.b16 %v6056
        %v6144 = vunpack.c.l.b16 %v6057
        %v6145 = vunpack.c.l.b16 %v6058
        %v6146 = vunpack.c.l.b16 %v6059
        %v6147 = vpack.c.b16 %v6132, %v6131
        %v6148 = vpack.c.b16 %v6134, %v6133
        %v6149 = vpack.c.b16 %v6136, %v6135
        %v6150 = vpack.c.b16 %v6138, %v6137
        %v6151 = vpack.c.b16 %v6140, %v6139
        %v6152 = vpack.c.b16 %v6142, %v6141
        %v6153 = vpack.c.b16 %v6144, %v6143
        %v6154 = vpack.c.b16 %v6146, %v6145
        %6163 = vmatprep.subr.bf16.mxu0 0
        %6164 = vmatpush1.bf16.msra.mxu0 %v6154
        %6165 = vmatprep.subr.bf16.mxu0 0
        %6166 = vmatpush1.bf16.msra.mxu0 %v6153
        %6167 = vmatprep.subr.bf16.mxu0 0
        %6168 = vmatpush1.bf16.msra.mxu0 %v6152
        %6169 = vmatprep.subr.bf16.mxu0 0
        %6170 = vmatpush1.bf16.msra.mxu0 %v6151
        %6171 = vmatprep.subr.bf16.mxu0 0
        %6172 = vmatpush1.bf16.msra.mxu0 %v6150
        %6173 = vmatprep.subr.bf16.mxu0 0
        %6174 = vmatpush1.bf16.msra.mxu0 %v6149
        %6175 = vmatprep.subr.bf16.mxu0 0
        %6176 = vmatpush1.bf16.msra.mxu0 %v6148
        %6177 = vmatprep.subr.bf16.mxu0 0
        %6178 = vmatpush1.bf16.msra.mxu0 %v6147
        %6179 = vmatprep.subr.bf16.mxu0 0
        %6180 = vmatpush2.bf16.msra.mxu0 0
        %6181 = vmatprep.subr.bf16.mxu0 0
        %6182 = vmatpush2.bf16.msra.mxu0 0
        %6183 = vmatprep.subr.bf16.mxu0 0
        %6184 = vmatpush2.bf16.msra.mxu0 0
        %6185 = vmatprep.subr.bf16.mxu0 0
        %6186 = vmatpush2.bf16.msra.mxu0 0
        %6187 = vmatprep.subr.bf16.mxu0 0
        %6188 = vmatpush2.bf16.msra.mxu0 0
        %6189 = vmatprep.subr.bf16.mxu0 0
        %6190 = vmatpush2.bf16.msra.mxu0 0
        %6191 = vmatprep.subr.bf16.mxu0 0
        %6192 = vmatpush2.bf16.msra.mxu0 0
        %6193 = vmatprep.subr.bf16.mxu0 0
        %6194 = vmatpush2.bf16.msra.mxu0 0
        %6195 = vmatprep.mubr.bf16.mxu0 0
        %6196 = vmatmul.mubr.bf16.gmra.mxu0 %v6099
        %v6197 = vpop.f32.mrf.mxu0
        %v6198 = vadd.f32 %v6065, %v6197
        %v6199 = vpop.f32.mrf.mxu0
        %v6200 = vpop.f32.mrf.mxu0
        %v6201 = vadd.f32 %v6065, %v6200
        %v6202 = vpop.f32.mrf.mxu0
        %6203 = vmatprep.mubr.bf16.mxu0 0
        %6204 = vmatmul.mubr.bf16.gmra.mxu0 %v6100
        %v6205 = vpop.f32.mrf.mxu0
        %v6206 = vadd.f32 %v6065, %v6205
        %v6207 = vpop.f32.mrf.mxu0
        %v6208 = vpop.f32.mrf.mxu0
        %v6209 = vadd.f32 %v6065, %v6208
        %v6210 = vpop.f32.mrf.mxu0
        %6211 = vmatprep.mubr.bf16.mxu0 0
        %6212 = vmatmul.mubr.bf16.gmra.mxu0 %v6101
        %v6213 = vpop.f32.mrf.mxu0
        %v6214 = vadd.f32 %v6065, %v6213
        %v6215 = vpop.f32.mrf.mxu0
        %v6216 = vpop.f32.mrf.mxu0
        %v6217 = vadd.f32 %v6065, %v6216
        %v6218 = vpop.f32.mrf.mxu0
        %6219 = vmatprep.mubr.bf16.mxu0 0
        %6220 = vmatmul.mubr.bf16.gmra.mxu0 %v6102
        %v6221 = vpop.f32.mrf.mxu0
        %v6222 = vadd.f32 %v6065, %v6221
        %v6223 = vpop.f32.mrf.mxu0
        %v6224 = vpop.f32.mrf.mxu0
        %v6225 = vadd.f32 %v6065, %v6224
        %v6226 = vpop.f32.mrf.mxu0
        %6227 = vmatprep.mubr.bf16.mxu0 0
        %6228 = vmatmul.mubr.bf16.gmra.mxu0 %v6103
        %v6229 = vpop.f32.mrf.mxu0
        %v6230 = vadd.f32 %v6065, %v6229
        %v6231 = vpop.f32.mrf.mxu0
        %v6232 = vpop.f32.mrf.mxu0
        %v6233 = vadd.f32 %v6065, %v6232
        %v6234 = vpop.f32.mrf.mxu0
        %6235 = vmatprep.mubr.bf16.mxu0 0
        %6236 = vmatmul.mubr.bf16.gmra.mxu0 %v6104
        %v6237 = vpop.f32.mrf.mxu0
        %v6238 = vadd.f32 %v6065, %v6237
        %v6239 = vpop.f32.mrf.mxu0
        %v6240 = vpop.f32.mrf.mxu0
        %v6241 = vadd.f32 %v6065, %v6240
        %v6242 = vpop.f32.mrf.mxu0
        %6243 = vmatprep.mubr.bf16.mxu0 0
        %6244 = vmatmul.mubr.bf16.gmra.mxu0 %v6105
        %v6245 = vpop.f32.mrf.mxu0
        %v6246 = vadd.f32 %v6065, %v6245
        %v6247 = vpop.f32.mrf.mxu0
        %v6248 = vpop.f32.mrf.mxu0
        %v6249 = vadd.f32 %v6065, %v6248
        %v6250 = vpop.f32.mrf.mxu0
        %6251 = vmatprep.mubr.bf16.mxu0 0
        %6252 = vmatmul.mubr.bf16.gmra.mxu0 %v6106
        %v6253 = vpop.f32.mrf.mxu0
        %v6254 = vadd.f32 %v6065, %v6253
        %v6255 = vpop.f32.mrf.mxu0
        %v6256 = vpop.f32.mrf.mxu0
        %v6257 = vadd.f32 %v6065, %v6256
        %v6258 = vpop.f32.mrf.mxu0
        %6259 = vdwg.mxu0
        %v6260 = vadd.f32 %v5966, %v6198
        %v6261 = vadd.f32 %v5969, %v6201
        %v6262 = vadd.f32 %v5974, %v6206
        %v6263 = vadd.f32 %v5977, %v6209
        %v6264 = vadd.f32 %v5982, %v6214
        %v6265 = vadd.f32 %v5985, %v6217
        %v6266 = vadd.f32 %v5990, %v6222
        %v6267 = vadd.f32 %v5993, %v6225
        %v6268 = vadd.f32 %v5998, %v6230
        %v6269 = vadd.f32 %v6001, %v6233
        %v6270 = vadd.f32 %v6006, %v6238
        %v6271 = vadd.f32 %v6009, %v6241
        %v6272 = vadd.f32 %v6014, %v6246
        %v6273 = vadd.f32 %v6017, %v6249
        %v6274 = vadd.f32 %v6022, %v6254
        %v6275 = vadd.f32 %v6025, %v6257
        %v6276 = vmax.f32 %v6260, 0.0
        %v6277 = vmax.f32 %v6261, 0.0
        %v6278 = vmax.f32 %v6262, 0.0
        %v6279 = vmax.f32 %v6263, 0.0
        %v6280 = vmax.f32 %v6264, 0.0
        %v6281 = vmax.f32 %v6265, 0.0
        %v6282 = vmax.f32 %v6266, 0.0
        %v6283 = vmax.f32 %v6267, 0.0
        %v6284 = vmax.f32 %v6268, 0.0
        %v6285 = vmax.f32 %v6269, 0.0
        %v6286 = vmax.f32 %v6270, 0.0
        %v6287 = vmax.f32 %v6271, 0.0
        %v6288 = vmax.f32 %v6272, 0.0
        %v6289 = vmax.f32 %v6273, 0.0
        %v6290 = vmax.f32 %v6274, 0.0
        %v6291 = vmax.f32 %v6275, 0.0
        %6292 = vst [vmem:[%s475 + $0x80] sm:$0xff] %v6276
        %6293 = vst [vmem:[%s475 + $0x88] sm:$0xff] %v6277
        %6294 = vst [vmem:[%s475 + $0x90] sm:$0xff] %v6278
        %6295 = vst [vmem:[%s475 + $0x98] sm:$0xff] %v6279
        %6296 = vst [vmem:[%s475 + $0xa0] sm:$0xff] %v6280
        %6297 = vst [vmem:[%s475 + $0xa8] sm:$0xff] %v6281
        %6298 = vst [vmem:[%s475 + $0xb0] sm:$0xff] %v6282
        %6299 = vst [vmem:[%s475 + $0xb8] sm:$0xff] %v6283
        %6300 = vst [vmem:[%s475 + $0xc0] sm:$0xff] %v6284
        %6301 = vst [vmem:[%s475 + $0xc8] sm:$0xff] %v6285
        %6302 = vst [vmem:[%s475 + $0xd0] sm:$0xff] %v6286
        %6303 = vst [vmem:[%s475 + $0xd8] sm:$0xff] %v6287
        %6304 = vst [vmem:[%s475 + $0xe0] sm:$0xff] %v6288
        %6305 = vst [vmem:[%s475 + $0xe8] sm:$0xff] %v6289
        %6306 = vst [vmem:[%s475 + $0xf0] sm:$0xff] %v6290
        %6307 = vst [vmem:[%s475 + $0xf8] sm:$0xff] %v6291
        %s6308 = sand.u32 %s260, 1
        %s6309 = scalar_lea.sflag [#allocation5], %s6308
        %s6310 = sand.u32 %s260, 1
        %s6311 = smul.addr %s6310, 256
        %s6312 = scalar_lea.vmem [#allocation14], %s6311
        // Predicated region
        $region85: #{tpu_custom_call.1} parent=59 // pred_check
          %p6313 = pneg %p270
        $region86: #{tpu_custom_call.1} parent=59 // pred_check_branch
          %6315 = sbr.rel (%p6313) target = $region88
        $region87: #{tpu_custom_call.1} parent=59 // pred_region
          %s6317 = ssub.s32 4096, 4096
          %6318 = vsyncadd %s6309, %s6317
          %s6319 = smul.addr %s32, 32
          %s6320 = smul.addr %s6319, 128
          %s6321 = scalar_lea.hbm %s10, %s6320
          %s6322 = sshll.u32 %s6312, 4
          %s6323 = int_to_ptr.vmem [resolvable:$true] %s6322
          %6328 = dma.vmem_to_hbm [thread:$0]  %s6323, 4096, %s6321, %s6309, 128, 128, 8
        $region88: #{tpu_custom_call.1} parent=59 // pred_fallthru
          _
      $region60: #{tpu_custom_call.1} parent=5 // pred_fallthru
        _
      %p6329 = scmp.le.s32.totalorder 2, %s27
      // Predicated region
      $region89: #{tpu_custom_call.1} parent=5 // pred_check
        %p6330 = pneg %p6329
      $region90: #{tpu_custom_call.1} parent=5 // pred_check_branch
        %6332 = sbr.rel (%p6330) target = $region92
      $region91: #{tpu_custom_call.1} parent=5 // pred_region
        %s6333 = ssub.s32 %s27, 2
        // Predicated region
        $region93: #{tpu_custom_call.1} parent=91 // pred_check
          %p6334 = pneg %p276
        $region94: #{tpu_custom_call.1} parent=91 // pred_check_branch
          %6336 = sbr.rel (%p6334) target = $region96
        $region95: #{tpu_custom_call.1} parent=91 // pred_region
          %s6337 = sand.u32 %s261, 1
          %s6338 = scalar_lea.sflag [#allocation5], %s6337
          %s6339 = sand.u32 %s261, 1
          %s6340 = smul.addr %s6339, 256
          %s6341 = scalar_lea.vmem [#allocation14], %s6340
          %6342 = dma.done %s6338, 4096
        $region96: #{tpu_custom_call.1} parent=91 // pred_fallthru
          _
      $region92: #{tpu_custom_call.1} parent=5 // pred_fallthru
        _
    $region6: #{tpu_custom_call.1} parent=1 // loop_footer
      %s31 = sadd.s32 1, %s27
    $region7: #{tpu_custom_call.1} parent=1 // loop_footer_branch
      %26 = sbr.rel target = $region3
    $region8: #{tpu_custom_call.1} parent=1 // loop_exit
      _
    %6343 = vsyncpa [#allocation4], 1
    %s6344 = scalar_lea.sflag [#allocation4], 1
    %6345 = vsyncpa %s6344, 1
    %6346 = vsyncpa [#allocation7], 1
    %s6347 = scalar_lea.sflag [#allocation7], 1
    %6348 = vsyncpa %s6347, 1
    %6349 = vsyncpa [#allocation10], 1
    %6350 = vsyncpa [#allocation13], 1
    %6351 = vsyncpa [#allocation5], 1
    %s6352 = scalar_lea.sflag [#allocation5], 1
    %6353 = vsyncpa %s6352, 1

</llo_original>
